<compile_context>
chip_gen: v7x
topology: tpu7x:2x2x1
jax: 0.10.0
libtpu: 0.0.40
codegen_flags: <defaults>
</compile_context>

<pallas_src>
import jax
import jax.numpy as jnp
from jax import lax
from jax.experimental import pallas as pl
from jax.experimental.pallas import tpu as pltpu


# ----------------------------------------------------------------------------
# Fused decoder-block kernel (one grid step == one batch image)
# ----------------------------------------------------------------------------
def _make_decoder_kernel(has_red):
    def kernel(low_ref, high_ref, up_ref, *rest):
        if has_red:
            (wr_ref, sr_ref, br_ref,
             w1_ref, s1_ref, b1_ref,
             w2_ref, s2_ref, b2_ref,
             o_ref, pad1, col1, pad2, col2) = rest
        else:
            (w1_ref, s1_ref, b1_ref,
             w2_ref, s2_ref, b2_ref,
             o_ref, pad1, col1, pad2, col2) = rest

        H, W, Cout = o_ref.shape[1], o_ref.shape[2], o_ref.shape[3]
        Cl = low_ref.shape[3]
        Hh, Wh, Ch = high_ref.shape[1], high_ref.shape[2], high_ref.shape[3]
        Ccat = pad1.shape[2]          # = 2 * Cl (concat channels)
        Cmid = pad2.shape[2]          # conv1 output channels

        # ---- high branch: optional 1x1 conv + folded BN + ReLU (one matmul) ----
        hi = high_ref[0].reshape(Hh * Wh, Ch)                      # (Hh*Wh, Ch)
        if has_red:
            hi = jnp.dot(hi, wr_ref[...], preferred_element_type=jnp.float32)
            hi = jnp.maximum(hi * sr_ref[...] + br_ref[...], 0.0)  # (Hh*Wh, Cl)

        # ---- fused bilinear align_corners upsample: constant interp matrix ----
        up = jnp.dot(up_ref[...], hi, preferred_element_type=jnp.float32)  # (H*W, Cl)

        # ---- fused concat + zero pad, built directly in a VMEM scratch ----
        pad1[...] = jnp.zeros_like(pad1)
        pad1[1:H + 1, 1:W + 1, 0:Cl] = low_ref[0]
        pad1[1:H + 1, 1:W + 1, Cl:Ccat] = up.reshape(H, W, Ccat - Cl)

        # ---- conv1: im2col (K = 9*Ccat) + single MXU matmul + BN + ReLU ----
        for dy in range(3):                                   # static 3x3 taps
            for dx in range(3):
                k = (dy * 3 + dx) * Ccat
                col1[:, k:k + Ccat] = (
                    pad1[dy:dy + H, dx:dx + W, :].reshape(H * W, Ccat))
        x1 = jnp.dot(col1[...], w1_ref[...], preferred_element_type=jnp.float32)
        x1 = jnp.maximum(x1 * s1_ref[...] + b1_ref[...], 0.0)    # (H*W, Cmid)

        # ---- conv2: pad + im2col (K = 9*Cmid) + single MXU matmul + BN + ReLU ----
        pad2[...] = jnp.zeros_like(pad2)
        pad2[1:H + 1, 1:W + 1, :] = x1.reshape(H, W, Cmid)
        for dy in range(3):
            for dx in range(3):
                k = (dy * 3 + dx) * Cmid
                col2[:, k:k + Cmid] = (
                    pad2[dy:dy + H, dx:dx + W, :].reshape(H * W, Cmid))
        y = jnp.dot(col2[...], w2_ref[...], preferred_element_type=jnp.float32)
        y = jnp.maximum(y * s2_ref[...] + b2_ref[...], 0.0)       # (H*W, Cout)

        o_ref[0] = y.reshape(H, W, Cout).astype(o_ref.dtype)
    return kernel


# ----------------------------------------------------------------------------
# align_corners bilinear expressed as a constant linear operator
# ----------------------------------------------------------------------------
def _interp_matrix(out_sz, in_sz):
    """(out_sz, in_sz) 1-D bilinear interpolation matrix, align_corners=True."""
    if out_sz == 1:
        coords = jnp.zeros((1,), jnp.float32)
    else:
        coords = jnp.arange(out_sz, dtype=jnp.float32) * ((in_sz - 1) / (out_sz - 1))
    i0 = jnp.clip(jnp.floor(coords).astype(jnp.int32), 0, in_sz - 1)
    i1 = jnp.clip(i0 + 1, 0, in_sz - 1)
    w = coords - i0.astype(jnp.float32)
    rows = jnp.arange(out_sz)
    m = jnp.zeros((out_sz, in_sz), jnp.float32)
    m = m.at[rows, i0].add(1.0 - w)
    m = m.at[rows, i1].add(w)
    return m


def _upsample_matrix(out_hw, in_hw):
    H, W = out_hw
    Hh, Wh = in_hw
    ry = _interp_matrix(H, Hh)                      # (H, Hh)
    rx = _interp_matrix(W, Wh)                      # (W, Wh)
    # M[h*W + w, i*Wh + j] = ry[h, i] * rx[w, j]   (identity when sizes match)
    return jnp.einsum('hi,wj->hwij', ry, rx).reshape(H * W, Hh * Wh)
    # TODO(synk): for large feature maps use separable row/col interpolation
    # matrices instead of the dense (H*W, Hh*Wh) operator.


def _nbytes(shape, itemsize=4):
    n = 1
    for d in shape:
        n *= int(d)
    return n * itemsize


# ----------------------------------------------------------------------------
# UNetDecoderBlock forward (single fused Pallas kernel)
# ----------------------------------------------------------------------------
def unet_decoder_block(low_nhwc, high_nhwc, params):
    N, H, W, Cl = low_nhwc.shape
    Nh, Hh, Wh, Ch = high_nhwc.shape
    assert N == Nh
    has_red = "red_w" in params
    Ccat = 2 * Cl
    Cmid = params["w1"].shape[3]
    Cout = params["w2"].shape[3]

    # Flatten 3x3 HWIO weights to (9*Cin, Cout) to match in-kernel im2col order.
    w1 = params["w1"].reshape(9 * Ccat, Cmid)
    w2 = params["w2"].reshape(9 * Cmid, Cout)
    up_mat = _upsample_matrix((H, W), (Hh, Wh))

    in_specs = [
        pl.BlockSpec((1, H, W, Cl), lambda n: (n, 0, 0, 0)),
        pl.BlockSpec((1, Hh, Wh, Ch), lambda n: (n, 0, 0, 0)),
        pl.BlockSpec((H * W, Hh * Wh), lambda n: (0, 0)),
    ]
    inputs = [low_nhwc, high_nhwc, up_mat]
    if has_red:
        in_specs += [
            pl.BlockSpec((Ch, Cl), lambda n: (0, 0)),
            pl.BlockSpec((1, Cl), lambda n: (0, 0)),
            pl.BlockSpec((1, Cl), lambda n: (0, 0)),
        ]
        inputs += [params["red_w"], params["red_scale"], params["red_bias"]]
    in_specs += [
        pl.BlockSpec((9 * Ccat, Cmid), lambda n: (0, 0)),
        pl.BlockSpec((1, Cmid), lambda n: (0, 0)),
        pl.BlockSpec((1, Cmid), lambda n: (0, 0)),
        pl.BlockSpec((9 * Cmid, Cout), lambda n: (0, 0)),
        pl.BlockSpec((1, Cout), lambda n: (0, 0)),
        pl.BlockSpec((1, Cout), lambda n: (0, 0)),
    ]
    inputs += [w1, params["s1"], params["b1"], w2, params["s2"], params["b2"]]

    scratch_shapes = [
        pltpu.VMEM((H + 2, W + 2, Ccat), jnp.float32),   # padded concat(low, up(high))
        pltpu.VMEM((H * W, 9 * Ccat), jnp.float32),      # im2col operand for conv1
        pltpu.VMEM((H + 2, W + 2, Cmid), jnp.float32),   # padded conv1 output
        pltpu.VMEM((H * W, 9 * Cmid), jnp.float32),      # im2col operand for conv2
    ]

    # Explicit VMEM budget: double-buffered I/O blocks + scratch + headroom.
    block_shapes = [(1, H, W, Cl), (1, Hh, Wh, Ch), (H * W, Hh * Wh),
                    (9 * Ccat, Cmid), (1, Cmid), (1, Cmid),
                    (9 * Cmid, Cout), (1, Cout), (1, Cout), (1, H, W, Cout)]
    if has_red:
        block_shapes += [(Ch, Cl), (1, Cl), (1, Cl)]
    io_bytes = sum(_nbytes(s) for s in block_shapes)
    scratch_bytes = sum(_nbytes(s) for s in
                        [(H + 2, W + 2, Ccat), (H * W, 9 * Ccat),
                         (H + 2, W + 2, Cmid), (H * W, 9 * Cmid)])
    vmem_limit = int(min(max(2 * io_bytes + scratch_bytes + (4 << 20), 32 << 20),
                         120 << 20))

    # TODO(synk): for realistic UNet sizes (esp. v7x's 64 MiB VMEM) add a spatial
    # row-tile grid axis with a 2-row halo instead of whole-image blocks.
    # TODO(synk): on v6e/v7x cast matmul operands to bfloat16 (keep f32
    # accumulation + epilogue); kept f32 here to preserve PyTorch f32 semantics.
    return pl.pallas_call(
        _make_decoder_kernel(has_red),
        out_shape=jax.ShapeDtypeStruct((N, H, W, Cout), jnp.float32),
        grid_spec=pltpu.PrefetchScalarGridSpec(
            num_scalar_prefetch=0,
            grid=(N,),
            in_specs=in_specs,
            out_specs=pl.BlockSpec((1, H, W, Cout), lambda n: (n, 0, 0, 0)),
            scratch_shapes=scratch_shapes,
        ),
        compiler_params=pltpu.CompilerParams(
            dimension_semantics=("parallel",),
            vmem_limit_bytes=vmem_limit),
    )(*inputs)


# ----------------------------------------------------------------------------
# Pure-JAX reference (for correctness check)
# ----------------------------------------------------------------------------
def bilinear_align_corners(x, out_h, out_w):
    N, H, W, C = x.shape
    if (H, W) == (out_h, out_w):
        return x

    def src_coords(out_sz, in_sz):
        if out_sz == 1:
            return jnp.zeros((1,), jnp.float32)
        return jnp.arange(out_sz, dtype=jnp.float32) * ((in_sz - 1) / (out_sz - 1))

    ys = src_coords(out_h, H)
    xs = src_coords(out_w, W)
    y0 = jnp.clip(jnp.floor(ys).astype(jnp.int32), 0, H - 1)
    y1 = jnp.clip(y0 + 1, 0, H - 1)
    wy = (ys - y0.astype(jnp.float32))[None, :, None, None]
    x0 = jnp.clip(jnp.floor(xs).astype(jnp.int32), 0, W - 1)
    x1 = jnp.clip(x0 + 1, 0, W - 1)
    wx = (xs - x0.astype(jnp.float32))[None, None, :, None]

    top, bot = x[:, y0, :, :], x[:, y1, :, :]
    rows = top * (1.0 - wy) + bot * wy
    left, right = rows[:, :, x0, :], rows[:, :, x1, :]
    return left * (1.0 - wx) + right * wx


def _ref_conv(x, w, scale, bias):
    y = lax.conv_general_dilated(
        x, w, window_strides=(1, 1), padding="SAME",
        dimension_numbers=("NHWC", "HWIO", "NHWC"))
    y = y * scale.reshape(1, 1, 1, -1) + bias.reshape(1, 1, 1, -1)
    return jnp.maximum(y, 0.0)


def unet_decoder_block_ref(low_nhwc, high_nhwc, params):
    N, H, W, Cl = low_nhwc.shape
    if "red_w" in params:
        w1x1 = params["red_w"][None, None, :, :]
        high_nhwc = _ref_conv(high_nhwc, w1x1, params["red_scale"], params["red_bias"])
    high_nhwc = bilinear_align_corners(high_nhwc, H, W)
    x = jnp.concatenate([low_nhwc, high_nhwc], axis=-1)
    x = _ref_conv(x, params["w1"], params["s1"], params["b1"])
    return _ref_conv(x, params["w2"], params["s2"], params["b2"])


# ----------------------------------------------------------------------------
# Deterministic parameter init (inference-mode BatchNorm folded into scale/bias)
# ----------------------------------------------------------------------------
def init_params(key, in_chs_l, in_chs_h, out_chs, eps=1e-5):
    ks = jax.random.split(key, 10)
    params = {}

    def bn_fold(gamma, beta, mean, var):
        scale = gamma / jnp.sqrt(var + eps)
        bias = beta - mean * scale
        return scale[None, :], bias[None, :]

    if in_chs_l != in_chs_h:
        params["red_w"] = 0.1 * jax.random.normal(ks[0], (in_chs_h, in_chs_l), jnp.float32)
        g = 1.0 + 0.05 * jax.random.normal(ks[1], (in_chs_l,), jnp.float32)
        b = 0.05 * jax.random.normal(ks[2], (in_chs_l,), jnp.float32)
        params["red_scale"], params["red_bias"] = bn_fold(
            g, b, jnp.zeros((in_chs_l,)), jnp.ones((in_chs_l,)))

    # conv1: 3x3, 2*in_chs_l -> in_chs_l (HWIO)
    params["w1"] = 0.1 * jax.random.normal(ks[3], (3, 3, 2 * in_chs_l, in_chs_l), jnp.float32)
    g1 = 1.0 + 0.05 * jax.random.normal(ks[4], (in_chs_l,), jnp.float32)
    b1 = 0.05 * jax.random.normal(ks[5], (in_chs_l,), jnp.float32)
    params["s1"], params["b1"] = bn_fold(g1, b1, jnp.zeros((in_chs_l,)), jnp.ones((in_chs_l,)))

    # conv2: 3x3, in_chs_l -> out_chs (HWIO)
    params["w2"] = 0.1 * jax.random.normal(ks[6], (3, 3, in_chs_l, out_chs), jnp.float32)
    g2 = 1.0 + 0.05 * jax.random.normal(ks[7], (out_chs,), jnp.float32)
    b2 = 0.05 * jax.random.normal(ks[8], (out_chs,), jnp.float32)
    params["s2"], params["b2"] = bn_fold(g2, b2, jnp.zeros((out_chs,)), jnp.ones((out_chs,)))
    return params


if __name__ == "__main__":
    key = jax.random.PRNGKey(0)
    in_chs_l, in_chs_h, out_chs = 8, 16, 8
    N, H, W = 2, 16, 16          # low-level feature spatial size
    Hh, Wh = 8, 8                # high-level feature spatial size (upsampled 2x)

    k_low, k_high, k_par = jax.random.split(key, 3)
    # PyTorch-convention NCHW inputs
    low_nchw = jax.random.normal(k_low, (N, in_chs_l, H, W), jnp.float32)
    high_nchw = jax.random.normal(k_high, (N, in_chs_h, Hh, Wh), jnp.float32)
    params = init_params(k_par, in_chs_l, in_chs_h, out_chs)

    # NCHW -> NHWC for the TPU kernel
    low = jnp.transpose(low_nchw, (0, 2, 3, 1))
    high = jnp.transpose(high_nchw, (0, 2, 3, 1))

    out = unet_decoder_block(low, high, params)
    out = jax.block_until_ready(out)

    ref = unet_decoder_block_ref(low, high, params)
    assert out.shape == (N, H, W, out_chs)
    assert jnp.allclose(out, ref, atol=1e-3, rtol=1e-3)

    # NHWC -> NCHW to match the PyTorch output convention
    out_nchw = jnp.transpose(out, (0, 3, 1, 2))
    assert out_nchw.shape == (N, out_chs, H, W)
    print("KERNEL_OK")
</pallas_src>

<mosaic_0001>
module attributes {stable_mosaic.version = 11 : i64} {
  func.func @kernel(%arg0: i32, %arg1: memref<1x16x16x8xf32, #tpu.memory_space<vmem>>, %arg2: memref<1x8x8x16xf32, #tpu.memory_space<vmem>>, %arg3: memref<256x64xf32, #tpu.memory_space<vmem>>, %arg4: memref<16x8xf32, #tpu.memory_space<vmem>>, %arg5: memref<1x8xf32, #tpu.memory_space<vmem>>, %arg6: memref<1x8xf32, #tpu.memory_space<vmem>>, %arg7: memref<144x8xf32, #tpu.memory_space<vmem>>, %arg8: memref<1x8xf32, #tpu.memory_space<vmem>>, %arg9: memref<1x8xf32, #tpu.memory_space<vmem>>, %arg10: memref<72x8xf32, #tpu.memory_space<vmem>>, %arg11: memref<1x8xf32, #tpu.memory_space<vmem>>, %arg12: memref<1x8xf32, #tpu.memory_space<vmem>>, %arg13: memref<1x16x16x8xf32, #tpu.memory_space<vmem>>, %arg14: memref<18x18x16xf32, #tpu.memory_space<vmem>>, %arg15: memref<256x144xf32, #tpu.memory_space<vmem>>, %arg16: memref<18x18x8xf32, #tpu.memory_space<vmem>>, %arg17: memref<256x72xf32, #tpu.memory_space<vmem>>) attributes {dimension_semantics = [#tpu.dimension_semantics<parallel>], iteration_bounds = array<i64: 2>, scalar_prefetch = 0 : i64, scratch_operands = 4 : i64, tpu.core_type = #tpu.core_type<tc>, window_params = [{transform_indices = @transform_0, window_bounds = array<i64: 1, 16, 16, 8>}, {transform_indices = @transform_1, window_bounds = array<i64: 1, 8, 8, 16>}, {pipeline_mode = #tpu.pipeline_mode<synchronous>, transform_indices = @transform_2, window_bounds = array<i64: 256, 64>}, {pipeline_mode = #tpu.pipeline_mode<synchronous>, transform_indices = @transform_3, window_bounds = array<i64: 16, 8>}, {pipeline_mode = #tpu.pipeline_mode<synchronous>, transform_indices = @transform_4, window_bounds = array<i64: 1, 8>}, {pipeline_mode = #tpu.pipeline_mode<synchronous>, transform_indices = @transform_5, window_bounds = array<i64: 1, 8>}, {pipeline_mode = #tpu.pipeline_mode<synchronous>, transform_indices = @transform_6, window_bounds = array<i64: 144, 8>}, {pipeline_mode = #tpu.pipeline_mode<synchronous>, transform_indices = @transform_7, window_bounds = array<i64: 1, 8>}, {pipeline_mode = #tpu.pipeline_mode<synchronous>, transform_indices = @transform_8, window_bounds = array<i64: 1, 8>}, {pipeline_mode = #tpu.pipeline_mode<synchronous>, transform_indices = @transform_9, window_bounds = array<i64: 72, 8>}, {pipeline_mode = #tpu.pipeline_mode<synchronous>, transform_indices = @transform_10, window_bounds = array<i64: 1, 8>}, {pipeline_mode = #tpu.pipeline_mode<synchronous>, transform_indices = @transform_11, window_bounds = array<i64: 1, 8>}, {transform_indices = @transform_12, window_bounds = array<i64: 1, 16, 16, 8>}]} {
    %c0 = arith.constant 0 : index
    %c0_0 = arith.constant 0 : index
    %c0_1 = arith.constant 0 : index
    %c0_2 = arith.constant 0 : index
    %0 = vector.load %arg2[%c0, %c0_0, %c0_1, %c0_2] : memref<1x8x8x16xf32, #tpu.memory_space<vmem>>, vector<1x8x8x16xf32>
    %1 = vector.shape_cast %0 : vector<1x8x8x16xf32> to vector<8x8x16xf32>
    %2 = vector.shape_cast %1 : vector<8x8x16xf32> to vector<64x16xf32>
    %c0_3 = arith.constant 0 : index
    %c0_4 = arith.constant 0 : index
    %3 = vector.load %arg4[%c0_3, %c0_4] : memref<16x8xf32, #tpu.memory_space<vmem>>, vector<16x8xf32>
    %cst = arith.constant dense<0.000000e+00> : vector<64x8xf32>
    %4 = tpu.matmul %2, %3, %cst {dimension_numbers = #tpu.dot_dimension_numbers<[1], [0], [0], [1], [0, 0, 1, 1], [], []>} : vector<64x16xf32>, vector<16x8xf32>, vector<64x8xf32> -> vector<64x8xf32>
    %c0_5 = arith.constant 0 : index
    %c0_6 = arith.constant 0 : index
    %5 = vector.load %arg5[%c0_5, %c0_6] : memref<1x8xf32, #tpu.memory_space<vmem>>, vector<1x8xf32>
    %6 = vector.broadcast %5 : vector<1x8xf32> to vector<64x8xf32>
    %7 = arith.mulf %4, %6 : vector<64x8xf32>
    %c0_7 = arith.constant 0 : index
    %c0_8 = arith.constant 0 : index
    %8 = vector.load %arg6[%c0_7, %c0_8] : memref<1x8xf32, #tpu.memory_space<vmem>>, vector<1x8xf32>
    %9 = vector.broadcast %8 : vector<1x8xf32> to vector<64x8xf32>
    %10 = arith.addf %7, %9 : vector<64x8xf32>
    %cst_9 = arith.constant 0.000000e+00 : f32
    %11 = vector.broadcast %cst_9 : f32 to vector<64x8xf32>
    %12 = arith.maximumf %10, %11 : vector<64x8xf32>
    %c0_10 = arith.constant 0 : index
    %c0_11 = arith.constant 0 : index
    %13 = vector.load %arg3[%c0_10, %c0_11] : memref<256x64xf32, #tpu.memory_space<vmem>>, vector<256x64xf32>
    %cst_12 = arith.constant dense<0.000000e+00> : vector<256x8xf32>
    %14 = tpu.matmul %13, %12, %cst_12 {dimension_numbers = #tpu.dot_dimension_numbers<[1], [0], [0], [1], [0, 0, 1, 1], [], []>} : vector<256x64xf32>, vector<64x8xf32>, vector<256x8xf32> -> vector<256x8xf32>
    %cst_13 = arith.constant 0.000000e+00 : f32
    %15 = vector.broadcast %cst_13 : f32 to vector<18x18x16xf32>
    %c0_14 = arith.constant 0 : index
    %c0_15 = arith.constant 0 : index
    %c0_16 = arith.constant 0 : index
    %16 = vector.load %arg14[%c0_14, %c0_15, %c0_16] : memref<18x18x16xf32, #tpu.memory_space<vmem>>, vector<18x18x16xf32>
    tpu.vector_store %arg14[%c0_14, %c0_15, %c0_16], %15 {strides = array<i32>} : memref<18x18x16xf32, #tpu.memory_space<vmem>>, vector<18x18x16xf32>,
    %c0_17 = arith.constant 0 : index
    %c0_18 = arith.constant 0 : index
    %c0_19 = arith.constant 0 : index
    %c0_20 = arith.constant 0 : index
    %17 = vector.load %arg1[%c0_17, %c0_18, %c0_19, %c0_20] : memref<1x16x16x8xf32, #tpu.memory_space<vmem>>, vector<1x16x16x8xf32>
    %18 = vector.shape_cast %17 : vector<1x16x16x8xf32> to vector<16x16x8xf32>
    %c1 = arith.constant 1 : index
    %c1_21 = arith.constant 1 : index
    %c0_22 = arith.constant 0 : index
    %19 = vector.load %arg14[%c1, %c1_21, %c0_22] : memref<18x18x16xf32, #tpu.memory_space<vmem>>, vector<16x16x8xf32>
    tpu.vector_store %arg14[%c1, %c1_21, %c0_22], %18 {strides = array<i32>} : memref<18x18x16xf32, #tpu.memory_space<vmem>>, vector<16x16x8xf32>,
    %20 = vector.shape_cast %14 : vector<256x8xf32> to vector<16x16x8xf32>
    %c1_23 = arith.constant 1 : index
    %c1_24 = arith.constant 1 : index
    %c8 = arith.constant 8 : index
    %21 = vector.load %arg14[%c1_23, %c1_24, %c8] : memref<18x18x16xf32, #tpu.memory_space<vmem>>, vector<16x16x8xf32>
    tpu.vector_store %arg14[%c1_23, %c1_24, %c8], %20 {strides = array<i32>} : memref<18x18x16xf32, #tpu.memory_space<vmem>>, vector<16x16x8xf32>,
    %c0_25 = arith.constant 0 : index
    %c0_26 = arith.constant 0 : index
    %c0_27 = arith.constant 0 : index
    %22 = vector.load %arg14[%c0_25, %c0_26, %c0_27] : memref<18x18x16xf32, #tpu.memory_space<vmem>>, vector<16x16x16xf32>
    %23 = vector.shape_cast %22 : vector<16x16x16xf32> to vector<256x16xf32>
    %c0_28 = arith.constant 0 : index
    %c0_29 = arith.constant 0 : index
    %24 = vector.load %arg15[%c0_28, %c0_29] : memref<256x144xf32, #tpu.memory_space<vmem>>, vector<256x16xf32>
    tpu.vector_store %arg15[%c0_28, %c0_29], %23 {strides = array<i32>} : memref<256x144xf32, #tpu.memory_space<vmem>>, vector<256x16xf32>,
    %c0_30 = arith.constant 0 : index
    %c1_31 = arith.constant 1 : index
    %c0_32 = arith.constant 0 : index
    %25 = vector.load %arg14[%c0_30, %c1_31, %c0_32] : memref<18x18x16xf32, #tpu.memory_space<vmem>>, vector<16x16x16xf32>
    %26 = vector.shape_cast %25 : vector<16x16x16xf32> to vector<256x16xf32>
    %c0_33 = arith.constant 0 : index
    %c16 = arith.constant 16 : index
    %27 = vector.load %arg15[%c0_33, %c16] : memref<256x144xf32, #tpu.memory_space<vmem>>, vector<256x16xf32>
    tpu.vector_store %arg15[%c0_33, %c16], %26 {strides = array<i32>} : memref<256x144xf32, #tpu.memory_space<vmem>>, vector<256x16xf32>,
    %c0_34 = arith.constant 0 : index
    %c2 = arith.constant 2 : index
    %c0_35 = arith.constant 0 : index
    %28 = vector.load %arg14[%c0_34, %c2, %c0_35] : memref<18x18x16xf32, #tpu.memory_space<vmem>>, vector<16x16x16xf32>
    %29 = vector.shape_cast %28 : vector<16x16x16xf32> to vector<256x16xf32>
    %c0_36 = arith.constant 0 : index
    %c32 = arith.constant 32 : index
    %30 = vector.load %arg15[%c0_36, %c32] : memref<256x144xf32, #tpu.memory_space<vmem>>, vector<256x16xf32>
    tpu.vector_store %arg15[%c0_36, %c32], %29 {strides = array<i32>} : memref<256x144xf32, #tpu.memory_space<vmem>>, vector<256x16xf32>,
    %c1_37 = arith.constant 1 : index
    %c0_38 = arith.constant 0 : index
    %c0_39 = arith.constant 0 : index
    %31 = vector.load %arg14[%c1_37, %c0_38, %c0_39] : memref<18x18x16xf32, #tpu.memory_space<vmem>>, vector<16x16x16xf32>
    %32 = vector.shape_cast %31 : vector<16x16x16xf32> to vector<256x16xf32>
    %c0_40 = arith.constant 0 : index
    %c48 = arith.constant 48 : index
    %33 = vector.load %arg15[%c0_40, %c48] : memref<256x144xf32, #tpu.memory_space<vmem>>, vector<256x16xf32>
    tpu.vector_store %arg15[%c0_40, %c48], %32 {strides = array<i32>} : memref<256x144xf32, #tpu.memory_space<vmem>>, vector<256x16xf32>,
    %c1_41 = arith.constant 1 : index
    %c1_42 = arith.constant 1 : index
    %c0_43 = arith.constant 0 : index
    %34 = vector.load %arg14[%c1_41, %c1_42, %c0_43] : memref<18x18x16xf32, #tpu.memory_space<vmem>>, vector<16x16x16xf32>
    %35 = vector.shape_cast %34 : vector<16x16x16xf32> to vector<256x16xf32>
    %c0_44 = arith.constant 0 : index
    %c64 = arith.constant 64 : index
    %36 = vector.load %arg15[%c0_44, %c64] : memref<256x144xf32, #tpu.memory_space<vmem>>, vector<256x16xf32>
    tpu.vector_store %arg15[%c0_44, %c64], %35 {strides = array<i32>} : memref<256x144xf32, #tpu.memory_space<vmem>>, vector<256x16xf32>,
    %c1_45 = arith.constant 1 : index
    %c2_46 = arith.constant 2 : index
    %c0_47 = arith.constant 0 : index
    %37 = vector.load %arg14[%c1_45, %c2_46, %c0_47] : memref<18x18x16xf32, #tpu.memory_space<vmem>>, vector<16x16x16xf32>
    %38 = vector.shape_cast %37 : vector<16x16x16xf32> to vector<256x16xf32>
    %c0_48 = arith.constant 0 : index
    %c80 = arith.constant 80 : index
    %39 = vector.load %arg15[%c0_48, %c80] : memref<256x144xf32, #tpu.memory_space<vmem>>, vector<256x16xf32>
    tpu.vector_store %arg15[%c0_48, %c80], %38 {strides = array<i32>} : memref<256x144xf32, #tpu.memory_space<vmem>>, vector<256x16xf32>,
    %c2_49 = arith.constant 2 : index
    %c0_50 = arith.constant 0 : index
    %c0_51 = arith.constant 0 : index
    %40 = vector.load %arg14[%c2_49, %c0_50, %c0_51] : memref<18x18x16xf32, #tpu.memory_space<vmem>>, vector<16x16x16xf32>
    %41 = vector.shape_cast %40 : vector<16x16x16xf32> to vector<256x16xf32>
    %c0_52 = arith.constant 0 : index
    %c96 = arith.constant 96 : index
    %42 = vector.load %arg15[%c0_52, %c96] : memref<256x144xf32, #tpu.memory_space<vmem>>, vector<256x16xf32>
    tpu.vector_store %arg15[%c0_52, %c96], %41 {strides = array<i32>} : memref<256x144xf32, #tpu.memory_space<vmem>>, vector<256x16xf32>,
    %c2_53 = arith.constant 2 : index
    %c1_54 = arith.constant 1 : index
    %c0_55 = arith.constant 0 : index
    %43 = vector.load %arg14[%c2_53, %c1_54, %c0_55] : memref<18x18x16xf32, #tpu.memory_space<vmem>>, vector<16x16x16xf32>
    %44 = vector.shape_cast %43 : vector<16x16x16xf32> to vector<256x16xf32>
    %c0_56 = arith.constant 0 : index
    %c112 = arith.constant 112 : index
    %45 = vector.load %arg15[%c0_56, %c112] : memref<256x144xf32, #tpu.memory_space<vmem>>, vector<256x16xf32>
    tpu.vector_store %arg15[%c0_56, %c112], %44 {strides = array<i32>} : memref<256x144xf32, #tpu.memory_space<vmem>>, vector<256x16xf32>,
    %c2_57 = arith.constant 2 : index
    %c2_58 = arith.constant 2 : index
    %c0_59 = arith.constant 0 : index
    %46 = vector.load %arg14[%c2_57, %c2_58, %c0_59] : memref<18x18x16xf32, #tpu.memory_space<vmem>>, vector<16x16x16xf32>
    %47 = vector.shape_cast %46 : vector<16x16x16xf32> to vector<256x16xf32>
    %c0_60 = arith.constant 0 : index
    %c128 = arith.constant 128 : index
    %48 = vector.load %arg15[%c0_60, %c128] : memref<256x144xf32, #tpu.memory_space<vmem>>, vector<256x16xf32>
    tpu.vector_store %arg15[%c0_60, %c128], %47 {strides = array<i32>} : memref<256x144xf32, #tpu.memory_space<vmem>>, vector<256x16xf32>,
    %c0_61 = arith.constant 0 : index
    %c0_62 = arith.constant 0 : index
    %49 = vector.load %arg15[%c0_61, %c0_62] : memref<256x144xf32, #tpu.memory_space<vmem>>, vector<256x144xf32>
    %c0_63 = arith.constant 0 : index
    %c0_64 = arith.constant 0 : index
    %50 = vector.load %arg7[%c0_63, %c0_64] : memref<144x8xf32, #tpu.memory_space<vmem>>, vector<144x8xf32>
    %cst_65 = arith.constant dense<0.000000e+00> : vector<256x8xf32>
    %51 = tpu.matmul %49, %50, %cst_65 {dimension_numbers = #tpu.dot_dimension_numbers<[1], [0], [0], [1], [0, 0, 1, 1], [], []>} : vector<256x144xf32>, vector<144x8xf32>, vector<256x8xf32> -> vector<256x8xf32>
    %c0_66 = arith.constant 0 : index
    %c0_67 = arith.constant 0 : index
    %52 = vector.load %arg8[%c0_66, %c0_67] : memref<1x8xf32, #tpu.memory_space<vmem>>, vector<1x8xf32>
    %53 = vector.broadcast %52 : vector<1x8xf32> to vector<256x8xf32>
    %54 = arith.mulf %51, %53 : vector<256x8xf32>
    %c0_68 = arith.constant 0 : index
    %c0_69 = arith.constant 0 : index
    %55 = vector.load %arg9[%c0_68, %c0_69] : memref<1x8xf32, #tpu.memory_space<vmem>>, vector<1x8xf32>
    %56 = vector.broadcast %55 : vector<1x8xf32> to vector<256x8xf32>
    %57 = arith.addf %54, %56 : vector<256x8xf32>
    %cst_70 = arith.constant 0.000000e+00 : f32
    %58 = vector.broadcast %cst_70 : f32 to vector<256x8xf32>
    %59 = arith.maximumf %57, %58 : vector<256x8xf32>
    %cst_71 = arith.constant 0.000000e+00 : f32
    %60 = vector.broadcast %cst_71 : f32 to vector<18x18x8xf32>
    %c0_72 = arith.constant 0 : index
    %c0_73 = arith.constant 0 : index
    %c0_74 = arith.constant 0 : index
    %61 = vector.load %arg16[%c0_72, %c0_73, %c0_74] : memref<18x18x8xf32, #tpu.memory_space<vmem>>, vector<18x18x8xf32>
    tpu.vector_store %arg16[%c0_72, %c0_73, %c0_74], %60 {strides = array<i32>} : memref<18x18x8xf32, #tpu.memory_space<vmem>>, vector<18x18x8xf32>,
    %62 = vector.shape_cast %59 : vector<256x8xf32> to vector<16x16x8xf32>
    %c1_75 = arith.constant 1 : index
    %c1_76 = arith.constant 1 : index
    %c0_77 = arith.constant 0 : index
    %63 = vector.load %arg16[%c1_75, %c1_76, %c0_77] : memref<18x18x8xf32, #tpu.memory_space<vmem>>, vector<16x16x8xf32>
    tpu.vector_store %arg16[%c1_75, %c1_76, %c0_77], %62 {strides = array<i32>} : memref<18x18x8xf32, #tpu.memory_space<vmem>>, vector<16x16x8xf32>,
    %c0_78 = arith.constant 0 : index
    %c0_79 = arith.constant 0 : index
    %c0_80 = arith.constant 0 : index
    %64 = vector.load %arg16[%c0_78, %c0_79, %c0_80] : memref<18x18x8xf32, #tpu.memory_space<vmem>>, vector<16x16x8xf32>
    %65 = vector.shape_cast %64 : vector<16x16x8xf32> to vector<256x8xf32>
    %c0_81 = arith.constant 0 : index
    %c0_82 = arith.constant 0 : index
    %66 = vector.load %arg17[%c0_81, %c0_82] : memref<256x72xf32, #tpu.memory_space<vmem>>, vector<256x8xf32>
    tpu.vector_store %arg17[%c0_81, %c0_82], %65 {strides = array<i32>} : memref<256x72xf32, #tpu.memory_space<vmem>>, vector<256x8xf32>,
    %c0_83 = arith.constant 0 : index
    %c1_84 = arith.constant 1 : index
    %c0_85 = arith.constant 0 : index
    %67 = vector.load %arg16[%c0_83, %c1_84, %c0_85] : memref<18x18x8xf32, #tpu.memory_space<vmem>>, vector<16x16x8xf32>
    %68 = vector.shape_cast %67 : vector<16x16x8xf32> to vector<256x8xf32>
    %c0_86 = arith.constant 0 : index
    %c8_87 = arith.constant 8 : index
    %69 = vector.load %arg17[%c0_86, %c8_87] : memref<256x72xf32, #tpu.memory_space<vmem>>, vector<256x8xf32>
    tpu.vector_store %arg17[%c0_86, %c8_87], %68 {strides = array<i32>} : memref<256x72xf32, #tpu.memory_space<vmem>>, vector<256x8xf32>,
    %c0_88 = arith.constant 0 : index
    %c2_89 = arith.constant 2 : index
    %c0_90 = arith.constant 0 : index
    %70 = vector.load %arg16[%c0_88, %c2_89, %c0_90] : memref<18x18x8xf32, #tpu.memory_space<vmem>>, vector<16x16x8xf32>
    %71 = vector.shape_cast %70 : vector<16x16x8xf32> to vector<256x8xf32>
    %c0_91 = arith.constant 0 : index
    %c16_92 = arith.constant 16 : index
    %72 = vector.load %arg17[%c0_91, %c16_92] : memref<256x72xf32, #tpu.memory_space<vmem>>, vector<256x8xf32>
    tpu.vector_store %arg17[%c0_91, %c16_92], %71 {strides = array<i32>} : memref<256x72xf32, #tpu.memory_space<vmem>>, vector<256x8xf32>,
    %c1_93 = arith.constant 1 : index
    %c0_94 = arith.constant 0 : index
    %c0_95 = arith.constant 0 : index
    %73 = vector.load %arg16[%c1_93, %c0_94, %c0_95] : memref<18x18x8xf32, #tpu.memory_space<vmem>>, vector<16x16x8xf32>
    %74 = vector.shape_cast %73 : vector<16x16x8xf32> to vector<256x8xf32>
    %c0_96 = arith.constant 0 : index
    %c24 = arith.constant 24 : index
    %75 = vector.load %arg17[%c0_96, %c24] : memref<256x72xf32, #tpu.memory_space<vmem>>, vector<256x8xf32>
    tpu.vector_store %arg17[%c0_96, %c24], %74 {strides = array<i32>} : memref<256x72xf32, #tpu.memory_space<vmem>>, vector<256x8xf32>,
    %c1_97 = arith.constant 1 : index
    %c1_98 = arith.constant 1 : index
    %c0_99 = arith.constant 0 : index
    %76 = vector.load %arg16[%c1_97, %c1_98, %c0_99] : memref<18x18x8xf32, #tpu.memory_space<vmem>>, vector<16x16x8xf32>
    %77 = vector.shape_cast %76 : vector<16x16x8xf32> to vector<256x8xf32>
    %c0_100 = arith.constant 0 : index
    %c32_101 = arith.constant 32 : index
    %78 = vector.load %arg17[%c0_100, %c32_101] : memref<256x72xf32, #tpu.memory_space<vmem>>, vector<256x8xf32>
    tpu.vector_store %arg17[%c0_100, %c32_101], %77 {strides = array<i32>} : memref<256x72xf32, #tpu.memory_space<vmem>>, vector<256x8xf32>,
    %c1_102 = arith.constant 1 : index
    %c2_103 = arith.constant 2 : index
    %c0_104 = arith.constant 0 : index
    %79 = vector.load %arg16[%c1_102, %c2_103, %c0_104] : memref<18x18x8xf32, #tpu.memory_space<vmem>>, vector<16x16x8xf32>
    %80 = vector.shape_cast %79 : vector<16x16x8xf32> to vector<256x8xf32>
    %c0_105 = arith.constant 0 : index
    %c40 = arith.constant 40 : index
    %81 = vector.load %arg17[%c0_105, %c40] : memref<256x72xf32, #tpu.memory_space<vmem>>, vector<256x8xf32>
    tpu.vector_store %arg17[%c0_105, %c40], %80 {strides = array<i32>} : memref<256x72xf32, #tpu.memory_space<vmem>>, vector<256x8xf32>,
    %c2_106 = arith.constant 2 : index
    %c0_107 = arith.constant 0 : index
    %c0_108 = arith.constant 0 : index
    %82 = vector.load %arg16[%c2_106, %c0_107, %c0_108] : memref<18x18x8xf32, #tpu.memory_space<vmem>>, vector<16x16x8xf32>
    %83 = vector.shape_cast %82 : vector<16x16x8xf32> to vector<256x8xf32>
    %c0_109 = arith.constant 0 : index
    %c48_110 = arith.constant 48 : index
    %84 = vector.load %arg17[%c0_109, %c48_110] : memref<256x72xf32, #tpu.memory_space<vmem>>, vector<256x8xf32>
    tpu.vector_store %arg17[%c0_109, %c48_110], %83 {strides = array<i32>} : memref<256x72xf32, #tpu.memory_space<vmem>>, vector<256x8xf32>,
    %c2_111 = arith.constant 2 : index
    %c1_112 = arith.constant 1 : index
    %c0_113 = arith.constant 0 : index
    %85 = vector.load %arg16[%c2_111, %c1_112, %c0_113] : memref<18x18x8xf32, #tpu.memory_space<vmem>>, vector<16x16x8xf32>
    %86 = vector.shape_cast %85 : vector<16x16x8xf32> to vector<256x8xf32>
    %c0_114 = arith.constant 0 : index
    %c56 = arith.constant 56 : index
    %87 = vector.load %arg17[%c0_114, %c56] : memref<256x72xf32, #tpu.memory_space<vmem>>, vector<256x8xf32>
    tpu.vector_store %arg17[%c0_114, %c56], %86 {strides = array<i32>} : memref<256x72xf32, #tpu.memory_space<vmem>>, vector<256x8xf32>,
    %c2_115 = arith.constant 2 : index
    %c2_116 = arith.constant 2 : index
    %c0_117 = arith.constant 0 : index
    %88 = vector.load %arg16[%c2_115, %c2_116, %c0_117] : memref<18x18x8xf32, #tpu.memory_space<vmem>>, vector<16x16x8xf32>
    %89 = vector.shape_cast %88 : vector<16x16x8xf32> to vector<256x8xf32>
    %c0_118 = arith.constant 0 : index
    %c64_119 = arith.constant 64 : index
    %90 = vector.load %arg17[%c0_118, %c64_119] : memref<256x72xf32, #tpu.memory_space<vmem>>, vector<256x8xf32>
    tpu.vector_store %arg17[%c0_118, %c64_119], %89 {strides = array<i32>} : memref<256x72xf32, #tpu.memory_space<vmem>>, vector<256x8xf32>,
    %c0_120 = arith.constant 0 : index
    %c0_121 = arith.constant 0 : index
    %91 = vector.load %arg17[%c0_120, %c0_121] : memref<256x72xf32, #tpu.memory_space<vmem>>, vector<256x72xf32>
    %c0_122 = arith.constant 0 : index
    %c0_123 = arith.constant 0 : index
    %92 = vector.load %arg10[%c0_122, %c0_123] : memref<72x8xf32, #tpu.memory_space<vmem>>, vector<72x8xf32>
    %cst_124 = arith.constant dense<0.000000e+00> : vector<256x8xf32>
    %93 = tpu.matmul %91, %92, %cst_124 {dimension_numbers = #tpu.dot_dimension_numbers<[1], [0], [0], [1], [0, 0, 1, 1], [], []>} : vector<256x72xf32>, vector<72x8xf32>, vector<256x8xf32> -> vector<256x8xf32>
    %c0_125 = arith.constant 0 : index
    %c0_126 = arith.constant 0 : index
    %94 = vector.load %arg11[%c0_125, %c0_126] : memref<1x8xf32, #tpu.memory_space<vmem>>, vector<1x8xf32>
    %95 = vector.broadcast %94 : vector<1x8xf32> to vector<256x8xf32>
    %96 = arith.mulf %93, %95 : vector<256x8xf32>
    %c0_127 = arith.constant 0 : index
    %c0_128 = arith.constant 0 : index
    %97 = vector.load %arg12[%c0_127, %c0_128] : memref<1x8xf32, #tpu.memory_space<vmem>>, vector<1x8xf32>
    %98 = vector.broadcast %97 : vector<1x8xf32> to vector<256x8xf32>
    %99 = arith.addf %96, %98 : vector<256x8xf32>
    %cst_129 = arith.constant 0.000000e+00 : f32
    %100 = vector.broadcast %cst_129 : f32 to vector<256x8xf32>
    %101 = arith.maximumf %99, %100 : vector<256x8xf32>
    %102 = vector.shape_cast %101 : vector<256x8xf32> to vector<16x16x8xf32>
    %c0_130 = arith.constant 0 : index
    %c0_131 = arith.constant 0 : index
    %c0_132 = arith.constant 0 : index
    %c0_133 = arith.constant 0 : index
    %103 = vector.load %arg13[%c0_130, %c0_131, %c0_132, %c0_133] : memref<1x16x16x8xf32, #tpu.memory_space<vmem>>, vector<1x16x16x8xf32>
    %104 = vector.shape_cast %103 : vector<1x16x16x8xf32> to vector<16x16x8xf32>
    %105 = vector.shape_cast %102 : vector<16x16x8xf32> to vector<1x16x16x8xf32>
    tpu.vector_store %arg13[%c0_130, %c0_131, %c0_132, %c0_133], %105 {strides = array<i32>} : memref<1x16x16x8xf32, #tpu.memory_space<vmem>>, vector<1x16x16x8xf32>,
    return
  }
  func.func @transform_0(%arg0: i32) -> (i32, i32, i32, i32) {
    %c0_i32 = arith.constant 0 : i32
    %c0_i32_0 = arith.constant 0 : i32
    %c0_i32_1 = arith.constant 0 : i32
    %c0_i32_2 = arith.constant 0 : i32
    return %arg0, %c0_i32, %c0_i32_0, %c0_i32_1 : i32, i32, i32, i32
  }
  func.func @transform_1(%arg0: i32) -> (i32, i32, i32, i32) {
    %c0_i32 = arith.constant 0 : i32
    %c0_i32_0 = arith.constant 0 : i32
    %c0_i32_1 = arith.constant 0 : i32
    %c0_i32_2 = arith.constant 0 : i32
    return %arg0, %c0_i32, %c0_i32_0, %c0_i32_1 : i32, i32, i32, i32
  }
  func.func @transform_2(%arg0: i32) -> (i32, i32) {
    %c0_i32 = arith.constant 0 : i32
    %c0_i32_0 = arith.constant 0 : i32
    %c0_i32_1 = arith.constant 0 : i32
    return %c0_i32, %c0_i32_0 : i32, i32
  }
  func.func @transform_3(%arg0: i32) -> (i32, i32) {
    %c0_i32 = arith.constant 0 : i32
    %c0_i32_0 = arith.constant 0 : i32
    %c0_i32_1 = arith.constant 0 : i32
    return %c0_i32, %c0_i32_0 : i32, i32
  }
  func.func @transform_4(%arg0: i32) -> (i32, i32) {
    %c0_i32 = arith.constant 0 : i32
    %c0_i32_0 = arith.constant 0 : i32
    %c0_i32_1 = arith.constant 0 : i32
    return %c0_i32, %c0_i32_0 : i32, i32
  }
  func.func @transform_5(%arg0: i32) -> (i32, i32) {
    %c0_i32 = arith.constant 0 : i32
    %c0_i32_0 = arith.constant 0 : i32
    %c0_i32_1 = arith.constant 0 : i32
    return %c0_i32, %c0_i32_0 : i32, i32
  }
  func.func @transform_6(%arg0: i32) -> (i32, i32) {
    %c0_i32 = arith.constant 0 : i32
    %c0_i32_0 = arith.constant 0 : i32
    %c0_i32_1 = arith.constant 0 : i32
    return %c0_i32, %c0_i32_0 : i32, i32
  }
  func.func @transform_7(%arg0: i32) -> (i32, i32) {
    %c0_i32 = arith.constant 0 : i32
    %c0_i32_0 = arith.constant 0 : i32
    %c0_i32_1 = arith.constant 0 : i32
    return %c0_i32, %c0_i32_0 : i32, i32
  }
  func.func @transform_8(%arg0: i32) -> (i32, i32) {
    %c0_i32 = arith.constant 0 : i32
    %c0_i32_0 = arith.constant 0 : i32
    %c0_i32_1 = arith.constant 0 : i32
    return %c0_i32, %c0_i32_0 : i32, i32
  }
  func.func @transform_9(%arg0: i32) -> (i32, i32) {
    %c0_i32 = arith.constant 0 : i32
    %c0_i32_0 = arith.constant 0 : i32
    %c0_i32_1 = arith.constant 0 : i32
    return %c0_i32, %c0_i32_0 : i32, i32
  }
  func.func @transform_10(%arg0: i32) -> (i32, i32) {
    %c0_i32 = arith.constant 0 : i32
    %c0_i32_0 = arith.constant 0 : i32
    %c0_i32_1 = arith.constant 0 : i32
    return %c0_i32, %c0_i32_0 : i32, i32
  }
  func.func @transform_11(%arg0: i32) -> (i32, i32) {
    %c0_i32 = arith.constant 0 : i32
    %c0_i32_0 = arith.constant 0 : i32
    %c0_i32_1 = arith.constant 0 : i32
    return %c0_i32, %c0_i32_0 : i32, i32
  }
  func.func @transform_12(%arg0: i32) -> (i32, i32, i32, i32) {
    %c0_i32 = arith.constant 0 : i32
    %c0_i32_0 = arith.constant 0 : i32
    %c0_i32_1 = arith.constant 0 : i32
    %c0_i32_2 = arith.constant 0 : i32
    return %arg0, %c0_i32, %c0_i32_0, %c0_i32_1 : i32, i32, i32, i32
  }
}

</mosaic_0001>

<llo_original>
// kernel: tpu_custom_call.1
$region0: #{tpu_custom_call.1}
  #allocation0 [shape = 'u32[]', space=smem, size = 0x4, offset = 0x4, fixed_abs, tag = 'smem constant byte address 0x4 - core index']
  #allocation1 [shape = 'u32[144,128]{1,0:T(1,128)}', space=vmem, size = 0x12000, scoped, tag = 'internal scratch']
  #allocation2 [shape = 'f32[18,18,16]{2,1,0:T(8,128)}', space=vmem, size = 0x36000, scoped, tag = 'scratch operand']
  #allocation3 [shape = 'f32[256,144]{1,0:T(8,128)}', space=vmem, size = 0x40000, scoped, tag = 'scratch operand']
  #allocation4 [shape = 'f32[18,18,8]{2,1,0:T(8,128)}', space=vmem, size = 0x36000, scoped, tag = 'scratch operand']
  #allocation5 [shape = 'f32[256,72]{1,0:T(8,128)}', space=vmem, size = 0x20000, scoped, tag = 'scratch operand']
  %s0 = inlined_call_operand.vmem [shape: f32[2,16,16,8], index: 0, kind: input, shape index: {}]
  %s1 = inlined_call_operand.vmem [shape: f32[2,8,8,16], index: 1, kind: input, shape index: {}]
  %s2 = inlined_call_operand.vmem [shape: f32[256,64], index: 2, kind: input, shape index: {}]
  %s3 = inlined_call_operand.vmem [shape: f32[16,8], index: 3, kind: input, shape index: {}]
  %s4 = inlined_call_operand.vmem [shape: f32[1,8], index: 4, kind: input, shape index: {}]
  %s5 = inlined_call_operand.vmem [shape: f32[1,8], index: 5, kind: input, shape index: {}]
  %s6 = inlined_call_operand.vmem [shape: f32[144,8], index: 6, kind: input, shape index: {}]
  %s7 = inlined_call_operand.vmem [shape: f32[1,8], index: 7, kind: input, shape index: {}]
  %s8 = inlined_call_operand.vmem [shape: f32[1,8], index: 8, kind: input, shape index: {}]
  %s9 = inlined_call_operand.vmem [shape: f32[72,8], index: 9, kind: input, shape index: {}]
  %s10 = inlined_call_operand.vmem [shape: f32[1,8], index: 10, kind: input, shape index: {}]
  %s11 = inlined_call_operand.vmem [shape: f32[1,8], index: 11, kind: input, shape index: {}]
  %s12 = inlined_call_operand.vmem [shape: f32[2,16,16,8], index: 12, kind: output, shape index: {}]
  %s13 = sld [smem:[#allocation0]]
  $region81: #{tpu_custom_call.1} parent=0
    _
  %s15 = ssub.s32 1, %s13
  %s16 = scalar_select 0, %s15, %s13
  loop: start=0, step=1, limit=4
  $region2: #{tpu_custom_call.1} parent=0 // loop_pre_header
    _
  $region3: #{tpu_custom_call.1} parent=0 // loop_header
    %s18 = sphi 0, %s22
    %p19 = scmp.ge.s32.totalorder %s18, 4
    %s28 = sphi 0, %s30
    %s31 = sphi 0, %s28
    %s32 = sphi 0, %s31
    %s48 = sphi 0, %s32
    %s54 = sphi 0, %s56
    %s57 = sphi 0, %s54
    %s58 = sphi 0, %s57
    %s74 = sphi 0, %s58
    %s78 = sphi 0, %s78
    %s80 = sphi 0, %s78
    %s81 = sphi 0, %s80
    %s95 = sphi 0, %s81
    %s99 = sphi 0, %s99
    %s101 = sphi 0, %s99
    %s102 = sphi 0, %s101
    %s116 = sphi 0, %s102
    %s120 = sphi 0, %s120
    %s122 = sphi 0, %s120
    %s123 = sphi 0, %s122
    %s137 = sphi 0, %s123
    %s141 = sphi 0, %s141
    %s143 = sphi 0, %s141
    %s144 = sphi 0, %s143
    %s158 = sphi 0, %s144
    %s162 = sphi 0, %s162
    %s164 = sphi 0, %s162
    %s165 = sphi 0, %s164
    %s179 = sphi 0, %s165
    %s183 = sphi 0, %s183
    %s185 = sphi 0, %s183
    %s186 = sphi 0, %s185
    %s200 = sphi 0, %s186
    %s204 = sphi 0, %s204
    %s206 = sphi 0, %s204
    %s207 = sphi 0, %s206
    %s221 = sphi 0, %s207
    %s225 = sphi 0, %s225
    %s227 = sphi 0, %s225
    %s228 = sphi 0, %s227
    %s242 = sphi 0, %s228
    %s246 = sphi 0, %s246
    %s248 = sphi 0, %s246
    %s249 = sphi 0, %s248
    %s263 = sphi 0, %s249
    %s267 = sphi 0, %s267
    %s269 = sphi 0, %s267
    %s270 = sphi 0, %s269
    %s284 = sphi 0, %s270
    %s290 = sphi 0, %s292
    %s293 = sphi 0, %s290
    %s294 = sphi 0, %s293
    %s310 = sphi 0, %s294
  $region4: #{tpu_custom_call.1} parent=0 // loop_header_branch
    %21 = sbr.rel (%p19) target = $region8
  $region5: #{tpu_custom_call.1} parent=0 // loop_body
    %s23 = ssub.s32 %s18, 1
    %s24 = ssub.s32 %s18, 2
    %s25 = sadd.s32 %s18, 1
    %s26 = ssub.s32 %s18, %s25
    %p27 = scmp.eq.s32.totalorder %s26, 0
    %s29 = sadd.s32 %s28, 1
    %s30 = scalar_select %p27, %s28, %s29
    %p33 = pneg %p27
    %p34 = scmp.eq.s32.totalorder %s18, 1
    %p35 = por %p33, %p34
    %p36 = scmp.ne.s32.totalorder %s28, %s31
    %p37 = scmp.eq.s32.totalorder %s18, 0
    %p38 = por %p36, %p37
    %p39 = scmp.ne.s32.totalorder %s28, %s31
    %p40 = scmp.eq.s32.totalorder %s23, 1
    %p41 = por %p39, %p40
    %p42 = scmp.ne.s32.totalorder %s31, %s32
    %p43 = scmp.eq.s32.totalorder %s23, 0
    %p44 = por %p42, %p43
    %p45 = scmp.ne.s32.totalorder %s31, %s32
    %p46 = scmp.eq.s32.totalorder %s24, 1
    %p47 = por %p45, %p46
    %p49 = scmp.ne.s32.totalorder %s32, %s48
    %p50 = scmp.eq.s32.totalorder %s24, 0
    %p51 = por %p49, %p50
    %s52 = ssub.s32 %s18, %s25
    %p53 = scmp.eq.s32.totalorder %s52, 0
    %s55 = sadd.s32 %s54, 1
    %s56 = scalar_select %p53, %s54, %s55
    %p59 = pneg %p53
    %p60 = scmp.eq.s32.totalorder %s18, 1
    %p61 = por %p59, %p60
    %p62 = scmp.ne.s32.totalorder %s54, %s57
    %p63 = scmp.eq.s32.totalorder %s18, 0
    %p64 = por %p62, %p63
    %p65 = scmp.ne.s32.totalorder %s54, %s57
    %p66 = scmp.eq.s32.totalorder %s23, 1
    %p67 = por %p65, %p66
    %p68 = scmp.ne.s32.totalorder %s57, %s58
    %p69 = scmp.eq.s32.totalorder %s23, 0
    %p70 = por %p68, %p69
    %p71 = scmp.ne.s32.totalorder %s57, %s58
    %p72 = scmp.eq.s32.totalorder %s24, 1
    %p73 = por %p71, %p72
    %p75 = scmp.ne.s32.totalorder %s58, %s74
    %p76 = scmp.eq.s32.totalorder %s24, 0
    %p77 = por %p75, %p76
    %s79 = sadd.s32 %s78, 1
    %p82 = scmp.eq.s32.totalorder %s18, 1
    %p83 = scmp.ne.s32.totalorder %s78, %s80
    %p84 = scmp.eq.s32.totalorder %s18, 0
    %p85 = por %p83, %p84
    %p86 = scmp.ne.s32.totalorder %s78, %s80
    %p87 = scmp.eq.s32.totalorder %s23, 1
    %p88 = por %p86, %p87
    %p89 = scmp.ne.s32.totalorder %s80, %s81
    %p90 = scmp.eq.s32.totalorder %s23, 0
    %p91 = por %p89, %p90
    %p92 = scmp.ne.s32.totalorder %s80, %s81
    %p93 = scmp.eq.s32.totalorder %s24, 1
    %p94 = por %p92, %p93
    %p96 = scmp.ne.s32.totalorder %s81, %s95
    %p97 = scmp.eq.s32.totalorder %s24, 0
    %p98 = por %p96, %p97
    %s100 = sadd.s32 %s99, 1
    %p103 = scmp.eq.s32.totalorder %s18, 1
    %p104 = scmp.ne.s32.totalorder %s99, %s101
    %p105 = scmp.eq.s32.totalorder %s18, 0
    %p106 = por %p104, %p105
    %p107 = scmp.ne.s32.totalorder %s99, %s101
    %p108 = scmp.eq.s32.totalorder %s23, 1
    %p109 = por %p107, %p108
    %p110 = scmp.ne.s32.totalorder %s101, %s102
    %p111 = scmp.eq.s32.totalorder %s23, 0
    %p112 = por %p110, %p111
    %p113 = scmp.ne.s32.totalorder %s101, %s102
    %p114 = scmp.eq.s32.totalorder %s24, 1
    %p115 = por %p113, %p114
    %p117 = scmp.ne.s32.totalorder %s102, %s116
    %p118 = scmp.eq.s32.totalorder %s24, 0
    %p119 = por %p117, %p118
    %s121 = sadd.s32 %s120, 1
    %p124 = scmp.eq.s32.totalorder %s18, 1
    %p125 = scmp.ne.s32.totalorder %s120, %s122
    %p126 = scmp.eq.s32.totalorder %s18, 0
    %p127 = por %p125, %p126
    %p128 = scmp.ne.s32.totalorder %s120, %s122
    %p129 = scmp.eq.s32.totalorder %s23, 1
    %p130 = por %p128, %p129
    %p131 = scmp.ne.s32.totalorder %s122, %s123
    %p132 = scmp.eq.s32.totalorder %s23, 0
    %p133 = por %p131, %p132
    %p134 = scmp.ne.s32.totalorder %s122, %s123
    %p135 = scmp.eq.s32.totalorder %s24, 1
    %p136 = por %p134, %p135
    %p138 = scmp.ne.s32.totalorder %s123, %s137
    %p139 = scmp.eq.s32.totalorder %s24, 0
    %p140 = por %p138, %p139
    %s142 = sadd.s32 %s141, 1
    %p145 = scmp.eq.s32.totalorder %s18, 1
    %p146 = scmp.ne.s32.totalorder %s141, %s143
    %p147 = scmp.eq.s32.totalorder %s18, 0
    %p148 = por %p146, %p147
    %p149 = scmp.ne.s32.totalorder %s141, %s143
    %p150 = scmp.eq.s32.totalorder %s23, 1
    %p151 = por %p149, %p150
    %p152 = scmp.ne.s32.totalorder %s143, %s144
    %p153 = scmp.eq.s32.totalorder %s23, 0
    %p154 = por %p152, %p153
    %p155 = scmp.ne.s32.totalorder %s143, %s144
    %p156 = scmp.eq.s32.totalorder %s24, 1
    %p157 = por %p155, %p156
    %p159 = scmp.ne.s32.totalorder %s144, %s158
    %p160 = scmp.eq.s32.totalorder %s24, 0
    %p161 = por %p159, %p160
    %s163 = sadd.s32 %s162, 1
    %p166 = scmp.eq.s32.totalorder %s18, 1
    %p167 = scmp.ne.s32.totalorder %s162, %s164
    %p168 = scmp.eq.s32.totalorder %s18, 0
    %p169 = por %p167, %p168
    %p170 = scmp.ne.s32.totalorder %s162, %s164
    %p171 = scmp.eq.s32.totalorder %s23, 1
    %p172 = por %p170, %p171
    %p173 = scmp.ne.s32.totalorder %s164, %s165
    %p174 = scmp.eq.s32.totalorder %s23, 0
    %p175 = por %p173, %p174
    %p176 = scmp.ne.s32.totalorder %s164, %s165
    %p177 = scmp.eq.s32.totalorder %s24, 1
    %p178 = por %p176, %p177
    %p180 = scmp.ne.s32.totalorder %s165, %s179
    %p181 = scmp.eq.s32.totalorder %s24, 0
    %p182 = por %p180, %p181
    %s184 = sadd.s32 %s183, 1
    %p187 = scmp.eq.s32.totalorder %s18, 1
    %p188 = scmp.ne.s32.totalorder %s183, %s185
    %p189 = scmp.eq.s32.totalorder %s18, 0
    %p190 = por %p188, %p189
    %p191 = scmp.ne.s32.totalorder %s183, %s185
    %p192 = scmp.eq.s32.totalorder %s23, 1
    %p193 = por %p191, %p192
    %p194 = scmp.ne.s32.totalorder %s185, %s186
    %p195 = scmp.eq.s32.totalorder %s23, 0
    %p196 = por %p194, %p195
    %p197 = scmp.ne.s32.totalorder %s185, %s186
    %p198 = scmp.eq.s32.totalorder %s24, 1
    %p199 = por %p197, %p198
    %p201 = scmp.ne.s32.totalorder %s186, %s200
    %p202 = scmp.eq.s32.totalorder %s24, 0
    %p203 = por %p201, %p202
    %s205 = sadd.s32 %s204, 1
    %p208 = scmp.eq.s32.totalorder %s18, 1
    %p209 = scmp.ne.s32.totalorder %s204, %s206
    %p210 = scmp.eq.s32.totalorder %s18, 0
    %p211 = por %p209, %p210
    %p212 = scmp.ne.s32.totalorder %s204, %s206
    %p213 = scmp.eq.s32.totalorder %s23, 1
    %p214 = por %p212, %p213
    %p215 = scmp.ne.s32.totalorder %s206, %s207
    %p216 = scmp.eq.s32.totalorder %s23, 0
    %p217 = por %p215, %p216
    %p218 = scmp.ne.s32.totalorder %s206, %s207
    %p219 = scmp.eq.s32.totalorder %s24, 1
    %p220 = por %p218, %p219
    %p222 = scmp.ne.s32.totalorder %s207, %s221
    %p223 = scmp.eq.s32.totalorder %s24, 0
    %p224 = por %p222, %p223
    %s226 = sadd.s32 %s225, 1
    %p229 = scmp.eq.s32.totalorder %s18, 1
    %p230 = scmp.ne.s32.totalorder %s225, %s227
    %p231 = scmp.eq.s32.totalorder %s18, 0
    %p232 = por %p230, %p231
    %p233 = scmp.ne.s32.totalorder %s225, %s227
    %p234 = scmp.eq.s32.totalorder %s23, 1
    %p235 = por %p233, %p234
    %p236 = scmp.ne.s32.totalorder %s227, %s228
    %p237 = scmp.eq.s32.totalorder %s23, 0
    %p238 = por %p236, %p237
    %p239 = scmp.ne.s32.totalorder %s227, %s228
    %p240 = scmp.eq.s32.totalorder %s24, 1
    %p241 = por %p239, %p240
    %p243 = scmp.ne.s32.totalorder %s228, %s242
    %p244 = scmp.eq.s32.totalorder %s24, 0
    %p245 = por %p243, %p244
    %s247 = sadd.s32 %s246, 1
    %p250 = scmp.eq.s32.totalorder %s18, 1
    %p251 = scmp.ne.s32.totalorder %s246, %s248
    %p252 = scmp.eq.s32.totalorder %s18, 0
    %p253 = por %p251, %p252
    %p254 = scmp.ne.s32.totalorder %s246, %s248
    %p255 = scmp.eq.s32.totalorder %s23, 1
    %p256 = por %p254, %p255
    %p257 = scmp.ne.s32.totalorder %s248, %s249
    %p258 = scmp.eq.s32.totalorder %s23, 0
    %p259 = por %p257, %p258
    %p260 = scmp.ne.s32.totalorder %s248, %s249
    %p261 = scmp.eq.s32.totalorder %s24, 1
    %p262 = por %p260, %p261
    %p264 = scmp.ne.s32.totalorder %s249, %s263
    %p265 = scmp.eq.s32.totalorder %s24, 0
    %p266 = por %p264, %p265
    %s268 = sadd.s32 %s267, 1
    %p271 = scmp.eq.s32.totalorder %s18, 1
    %p272 = scmp.ne.s32.totalorder %s267, %s269
    %p273 = scmp.eq.s32.totalorder %s18, 0
    %p274 = por %p272, %p273
    %p275 = scmp.ne.s32.totalorder %s267, %s269
    %p276 = scmp.eq.s32.totalorder %s23, 1
    %p277 = por %p275, %p276
    %p278 = scmp.ne.s32.totalorder %s269, %s270
    %p279 = scmp.eq.s32.totalorder %s23, 0
    %p280 = por %p278, %p279
    %p281 = scmp.ne.s32.totalorder %s269, %s270
    %p282 = scmp.eq.s32.totalorder %s24, 1
    %p283 = por %p281, %p282
    %p285 = scmp.ne.s32.totalorder %s270, %s284
    %p286 = scmp.eq.s32.totalorder %s24, 0
    %p287 = por %p285, %p286
    %s288 = ssub.s32 %s18, %s25
    %p289 = scmp.eq.s32.totalorder %s288, 0
    %s291 = sadd.s32 %s290, 1
    %s292 = scalar_select %p289, %s290, %s291
    %p295 = pneg %p289
    %p296 = scmp.eq.s32.totalorder %s18, 1
    %p297 = por %p295, %p296
    %p298 = scmp.ne.s32.totalorder %s290, %s293
    %p299 = scmp.eq.s32.totalorder %s18, 0
    %p300 = por %p298, %p299
    %p301 = scmp.ne.s32.totalorder %s290, %s293
    %p302 = scmp.eq.s32.totalorder %s23, 1
    %p303 = por %p301, %p302
    %p304 = scmp.ne.s32.totalorder %s293, %s294
    %p305 = scmp.eq.s32.totalorder %s23, 0
    %p306 = por %p304, %p305
    %p307 = scmp.ne.s32.totalorder %s293, %s294
    %p308 = scmp.eq.s32.totalorder %s24, 1
    %p309 = por %p307, %p308
    %p311 = scmp.ne.s32.totalorder %s294, %s310
    %p312 = scmp.eq.s32.totalorder %s24, 0
    %p313 = por %p311, %p312
    %p314 = scmp.le.s32.totalorder 1, %s18
    %p315 = scmp.lt.s32.totalorder %s18, 3
    %p316 = pnand %p314, %p315
    %p317 = pneg %p316
    // Predicated region
    $region9: #{tpu_custom_call.1} parent=5 // pred_check
      _
    $region10: #{tpu_custom_call.1} parent=5 // pred_check_branch
      %319 = sbr.rel (%p316) target = $region12
    $region11: #{tpu_custom_call.1} parent=5 // pred_region
      %s320 = ssub.s32 %s18, 1
      // Predicated region
      $region13: #{tpu_custom_call.1} parent=11 // pred_check
        %p321 = pneg %p91
      $region14: #{tpu_custom_call.1} parent=11 // pred_check_branch
        %323 = sbr.rel (%p321) target = $region16
      $region15: #{tpu_custom_call.1} parent=11 // pred_region
        _
      $region16: #{tpu_custom_call.1} parent=11 // pred_fallthru
        _
      // Predicated region
      $region17: #{tpu_custom_call.1} parent=11 // pred_check
        %p324 = pneg %p112
      $region18: #{tpu_custom_call.1} parent=11 // pred_check_branch
        %326 = sbr.rel (%p324) target = $region20
      $region19: #{tpu_custom_call.1} parent=11 // pred_region
        _
      $region20: #{tpu_custom_call.1} parent=11 // pred_fallthru
        _
      // Predicated region
      $region21: #{tpu_custom_call.1} parent=11 // pred_check
        %p327 = pneg %p133
      $region22: #{tpu_custom_call.1} parent=11 // pred_check_branch
        %329 = sbr.rel (%p327) target = $region24
      $region23: #{tpu_custom_call.1} parent=11 // pred_region
        _
      $region24: #{tpu_custom_call.1} parent=11 // pred_fallthru
        _
      // Predicated region
      $region25: #{tpu_custom_call.1} parent=11 // pred_check
        %p330 = pneg %p154
      $region26: #{tpu_custom_call.1} parent=11 // pred_check_branch
        %332 = sbr.rel (%p330) target = $region28
      $region27: #{tpu_custom_call.1} parent=11 // pred_region
        _
      $region28: #{tpu_custom_call.1} parent=11 // pred_fallthru
        _
      // Predicated region
      $region29: #{tpu_custom_call.1} parent=11 // pred_check
        %p333 = pneg %p175
      $region30: #{tpu_custom_call.1} parent=11 // pred_check_branch
        %335 = sbr.rel (%p333) target = $region32
      $region31: #{tpu_custom_call.1} parent=11 // pred_region
        _
      $region32: #{tpu_custom_call.1} parent=11 // pred_fallthru
        _
      // Predicated region
      $region33: #{tpu_custom_call.1} parent=11 // pred_check
        %p336 = pneg %p196
      $region34: #{tpu_custom_call.1} parent=11 // pred_check_branch
        %338 = sbr.rel (%p336) target = $region36
      $region35: #{tpu_custom_call.1} parent=11 // pred_region
        _
      $region36: #{tpu_custom_call.1} parent=11 // pred_fallthru
        _
      // Predicated region
      $region37: #{tpu_custom_call.1} parent=11 // pred_check
        %p339 = pneg %p217
      $region38: #{tpu_custom_call.1} parent=11 // pred_check_branch
        %341 = sbr.rel (%p339) target = $region40
      $region39: #{tpu_custom_call.1} parent=11 // pred_region
        _
      $region40: #{tpu_custom_call.1} parent=11 // pred_fallthru
        _
      // Predicated region
      $region41: #{tpu_custom_call.1} parent=11 // pred_check
        %p342 = pneg %p238
      $region42: #{tpu_custom_call.1} parent=11 // pred_check_branch
        %344 = sbr.rel (%p342) target = $region44
      $region43: #{tpu_custom_call.1} parent=11 // pred_region
        _
      $region44: #{tpu_custom_call.1} parent=11 // pred_fallthru
        _
      // Predicated region
      $region45: #{tpu_custom_call.1} parent=11 // pred_check
        %p345 = pneg %p259
      $region46: #{tpu_custom_call.1} parent=11 // pred_check_branch
        %347 = sbr.rel (%p345) target = $region48
      $region47: #{tpu_custom_call.1} parent=11 // pred_region
        _
      $region48: #{tpu_custom_call.1} parent=11 // pred_fallthru
        _
      // Predicated region
      $region49: #{tpu_custom_call.1} parent=11 // pred_check
        %p348 = pneg %p280
      $region50: #{tpu_custom_call.1} parent=11 // pred_check_branch
        %350 = sbr.rel (%p348) target = $region52
      $region51: #{tpu_custom_call.1} parent=11 // pred_region
        _
      $region52: #{tpu_custom_call.1} parent=11 // pred_fallthru
        _
    $region12: #{tpu_custom_call.1} parent=5 // pred_fallthru
      _
    %p351 = scmp.lt.s32.totalorder %s18, 2
    // Predicated region
    $region53: #{tpu_custom_call.1} parent=5 // pred_check
      %p352 = pneg %p351
    $region54: #{tpu_custom_call.1} parent=5 // pred_check_branch
      %354 = sbr.rel (%p352) target = $region56
    $region55: #{tpu_custom_call.1} parent=5 // pred_region
      // Predicated region
      $region57: #{tpu_custom_call.1} parent=55 // pred_check
        %p355 = pneg %p38
      $region58: #{tpu_custom_call.1} parent=55 // pred_check_branch
        %357 = sbr.rel (%p355) target = $region60
      $region59: #{tpu_custom_call.1} parent=55 // pred_region
        %p358 = scmp.lt.s32.totalorder %s18, 1
        %s359 = scalar_select %p358, %s18, 1
        %s360 = smul.addr %s359, 32
        %s361 = smul.addr %s360, 8
        %s362 = scalar_lea.vmem %s0, %s361
      $region60: #{tpu_custom_call.1} parent=55 // pred_fallthru
        _
      // Predicated region
      $region61: #{tpu_custom_call.1} parent=55 // pred_check
        %p363 = pneg %p64
      $region62: #{tpu_custom_call.1} parent=55 // pred_check_branch
        %365 = sbr.rel (%p363) target = $region64
      $region63: #{tpu_custom_call.1} parent=55 // pred_region
        %p366 = scmp.lt.s32.totalorder %s18, 1
        %s367 = scalar_select %p366, %s18, 1
        %s368 = smul.addr %s367, 8
        %s369 = smul.addr %s368, 8
        %s370 = scalar_lea.vmem %s1, %s369
      $region64: #{tpu_custom_call.1} parent=55 // pred_fallthru
        _
    $region56: #{tpu_custom_call.1} parent=5 // pred_fallthru
      _
    %p371 = scmp.le.s32.totalorder 1, %s18
    %p372 = scmp.lt.s32.totalorder %s18, 3
    %p373 = pnand %p371, %p372
    %p374 = pneg %p373
    // Predicated region
    $region65: #{tpu_custom_call.1} parent=5 // pred_check
      _
    $region66: #{tpu_custom_call.1} parent=5 // pred_check_branch
      %376 = sbr.rel (%p373) target = $region68
    $region67: #{tpu_custom_call.1} parent=5 // pred_region
      %s377 = ssub.s32 %s18, 1
      %p378 = scmp.lt.s32.totalorder %s23, 1
      %s379 = scalar_select %p378, %s23, 1
      %s380 = smul.addr %s379, 32
      %s381 = smul.addr %s380, 8
      %s382 = scalar_lea.vmem %s0, %s381
      %p383 = pneg %p44
      %p384 = pneg %p41
      %p385 = scmp.lt.s32.totalorder %s23, 1
      %s386 = scalar_select %p385, %s23, 1
      %s387 = smul.addr %s386, 8
      %s388 = smul.addr %s387, 8
      %s389 = scalar_lea.vmem %s1, %s388
      %p390 = pneg %p70
      %p391 = pneg %p67
      %p392 = pneg %p91
      %p393 = pneg %p88
      %p394 = pneg %p112
      %p395 = pneg %p109
      %p396 = pneg %p133
      %p397 = pneg %p130
      %p398 = pneg %p154
      %p399 = pneg %p151
      %p400 = pneg %p175
      %p401 = pneg %p172
      %p402 = pneg %p196
      %p403 = pneg %p193
      %p404 = pneg %p217
      %p405 = pneg %p214
      %p406 = pneg %p238
      %p407 = pneg %p235
      %p408 = pneg %p259
      %p409 = pneg %p256
      %p410 = pneg %p280
      %p411 = pneg %p277
      %p412 = pneg %p306
      %p413 = pneg %p303
      %p414 = scmp.lt.s32.totalorder %s23, 1
      %s415 = scalar_select %p414, %s23, 1
      %s416 = smul.addr %s415, 32
      %s417 = smul.addr %s416, 8
      %s418 = scalar_lea.vmem %s12, %s417
      %p419 = scmp.lt.s32.totalorder %s23, 1
      %s420 = scalar_select %p419, %s23, 1
      %s421 = smul.addr %s420, 32
      %s422 = smul.addr %s421, 8
      %s423 = scalar_lea.vmem %s0, %s422
      %p424 = scmp.lt.s32.totalorder %s23, 1
      %s425 = scalar_select %p424, %s23, 1
      %s426 = smul.addr %s425, 8
      %s427 = smul.addr %s426, 8
      %s428 = scalar_lea.vmem %s1, %s427
      %p429 = scmp.lt.s32.totalorder %s23, 1
      %s430 = scalar_select %p429, %s23, 1
      %s431 = smul.addr %s430, 32
      %s432 = smul.addr %s431, 8
      %s433 = scalar_lea.vmem %s12, %s432
      %v434 = vld [vmem:[%s428] sm:$0xff]
      %v435 = vld [vmem:[%s428 + $0x8] sm:$0xff]
      %v436 = vld [vmem:[%s428 + $0x10] sm:$0xff]
      %v437 = vld [vmem:[%s428 + $0x18] sm:$0xff]
      %v438 = vld [vmem:[%s428 + $0x20] sm:$0xff]
      %v439 = vld [vmem:[%s428 + $0x28] sm:$0xff]
      %v440 = vld [vmem:[%s428 + $0x30] sm:$0xff]
      %v441 = vld [vmem:[%s428 + $0x38] sm:$0xff]
      %v442 = vld [vmem:[%s3] sm:$0xff]
      %v443 = vld [vmem:[%s3 + $0x8] sm:$0xff]
      %vm444 = vcmask 130048
      %v446 = vsel %vm444, %v434, 0
      %v449 = vsel %vm444, %v435, 0
      %v452 = vsel %vm444, %v436, 0
      %v455 = vsel %vm444, %v437, 0
      %v458 = vsel %vm444, %v438, 0
      %v461 = vsel %vm444, %v439, 0
      %v464 = vsel %vm444, %v440, 0
      %v467 = vsel %vm444, %v441, 0
      %469 = vmatprep.subr.mxu0 0.0
      %470 = vmatpush1.msra.mxu0 %v442
      %471 = vmatprep.subr.mxu0 0.0
      %472 = vmatpush1.msra.mxu0 %v443
      %473 = vmatprep.subr.mxu0 0.0
      %474 = vmatpush1.msra.mxu0 0.0
      %475 = vmatprep.subr.mxu0 0.0
      %476 = vmatpush1.msra.mxu0 0.0
      %477 = vmatprep.subr.mxu0 0.0
      %478 = vmatpush1.msra.mxu0 0.0
      %479 = vmatprep.subr.mxu0 0.0
      %480 = vmatpush1.msra.mxu0 0.0
      %481 = vmatprep.subr.mxu0 0.0
      %482 = vmatpush1.msra.mxu0 0.0
      %483 = vmatprep.subr.mxu0 0.0
      %484 = vmatpush1.msra.mxu0 0.0
      %485 = vmatprep.subr.mxu0 0.0
      %486 = vmatpush1.msra.mxu0 0.0
      %487 = vmatprep.subr.mxu0 0.0
      %488 = vmatpush1.msra.mxu0 0.0
      %489 = vmatprep.subr.mxu0 0.0
      %490 = vmatpush1.msra.mxu0 0.0
      %491 = vmatprep.subr.mxu0 0.0
      %492 = vmatpush1.msra.mxu0 0.0
      %493 = vmatprep.subr.mxu0 0.0
      %494 = vmatpush1.msra.mxu0 0.0
      %495 = vmatprep.subr.mxu0 0.0
      %496 = vmatpush1.msra.mxu0 0.0
      %497 = vmatprep.subr.mxu0 0.0
      %498 = vmatpush1.msra.mxu0 0.0
      %499 = vmatprep.subr.mxu0 0.0
      %500 = vmatpush1.msra.mxu0 0.0
      %501 = vmatprep.subr.mxu0 0.0
      %502 = vmatpush1.msra.mxu0 0.0
      %503 = vmatprep.subr.mxu0 0.0
      %504 = vmatpush1.msra.mxu0 0.0
      %505 = vmatprep.subr.mxu0 0.0
      %506 = vmatpush1.msra.mxu0 0.0
      %507 = vmatprep.subr.mxu0 0.0
      %508 = vmatpush1.msra.mxu0 0.0
      %509 = vmatprep.subr.mxu0 0.0
      %510 = vmatpush1.msra.mxu0 0.0
      %511 = vmatprep.subr.mxu0 0.0
      %512 = vmatpush1.msra.mxu0 0.0
      %513 = vmatprep.subr.mxu0 0.0
      %514 = vmatpush1.msra.mxu0 0.0
      %515 = vmatprep.subr.mxu0 0.0
      %516 = vmatpush1.msra.mxu0 0.0
      %517 = vmatprep.subr.mxu0 0.0
      %518 = vmatpush1.msra.mxu0 0.0
      %519 = vmatprep.subr.mxu0 0.0
      %520 = vmatpush1.msra.mxu0 0.0
      %521 = vmatprep.subr.mxu0 0.0
      %522 = vmatpush1.msra.mxu0 0.0
      %523 = vmatprep.subr.mxu0 0.0
      %524 = vmatpush1.msra.mxu0 0.0
      %525 = vmatprep.subr.mxu0 0.0
      %526 = vmatpush1.msra.mxu0 0.0
      %527 = vmatprep.subr.mxu0 0.0
      %528 = vmatpush1.msra.mxu0 0.0
      %529 = vmatprep.subr.mxu0 0.0
      %530 = vmatpush1.msra.mxu0 0.0
      %531 = vmatprep.subr.mxu0 0.0
      %532 = vmatpush1.msra.mxu0 0.0
      %533 = vmatprep.mubr.f32.mxu0 0.0
      %534 = vmatmul.mubr.f32.gmra.mrb[0].mxu0 %v446
      %v535 = vpop.f32.mrb[0].mxu0
      %v536 = vadd.f32 0.0, %v535
      %v537 = vpop.f32.mrb[0].mxu0
      %538 = vmatprep.mubr.f32.mxu0 0.0
      %539 = vmatmul.mubr.f32.gmra.mrb[0].mxu0 %v449
      %v540 = vpop.f32.mrb[0].mxu0
      %v541 = vadd.f32 0.0, %v540
      %v542 = vpop.f32.mrb[0].mxu0
      %543 = vmatprep.mubr.f32.mxu0 0.0
      %544 = vmatmul.mubr.f32.gmra.mrb[0].mxu0 %v452
      %v545 = vpop.f32.mrb[0].mxu0
      %v546 = vadd.f32 0.0, %v545
      %v547 = vpop.f32.mrb[0].mxu0
      %548 = vmatprep.mubr.f32.mxu0 0.0
      %549 = vmatmul.mubr.f32.gmra.mrb[0].mxu0 %v455
      %v550 = vpop.f32.mrb[0].mxu0
      %v551 = vadd.f32 0.0, %v550
      %v552 = vpop.f32.mrb[0].mxu0
      %553 = vmatprep.mubr.f32.mxu0 0.0
      %554 = vmatmul.mubr.f32.gmra.mrb[0].mxu0 %v458
      %v555 = vpop.f32.mrb[0].mxu0
      %v556 = vadd.f32 0.0, %v555
      %v557 = vpop.f32.mrb[0].mxu0
      %558 = vmatprep.mubr.f32.mxu0 0.0
      %559 = vmatmul.mubr.f32.gmra.mrb[0].mxu0 %v461
      %v560 = vpop.f32.mrb[0].mxu0
      %v561 = vadd.f32 0.0, %v560
      %v562 = vpop.f32.mrb[0].mxu0
      %563 = vmatprep.mubr.f32.mxu0 0.0
      %564 = vmatmul.mubr.f32.gmra.mrb[0].mxu0 %v464
      %v565 = vpop.f32.mrb[0].mxu0
      %v566 = vadd.f32 0.0, %v565
      %v567 = vpop.f32.mrb[0].mxu0
      %568 = vmatprep.mubr.f32.mxu0 0.0
      %569 = vmatmul.mubr.f32.gmra.mrb[0].mxu0 %v467
      %v570 = vpop.f32.mrb[0].mxu0
      %v571 = vadd.f32 0.0, %v570
      %v572 = vpop.f32.mrb[0].mxu0
      %573 = vdwg.mxu0
      %v574 = vld [vmem:[%s4] sm:$0x1]
      %v576 = vlaneseq
      %v577 = vshrl.u32 %v576, 7
      %v578 = vsub.s32 0, %v577
      %v579 = vrot.slane %v574, %v578
      %v581 = vmul.f32 %v536, %v579
      %v582 = vmul.f32 %v541, %v579
      %v583 = vmul.f32 %v546, %v579
      %v584 = vmul.f32 %v551, %v579
      %v585 = vmul.f32 %v556, %v579
      %v586 = vmul.f32 %v561, %v579
      %v587 = vmul.f32 %v566, %v579
      %v588 = vmul.f32 %v571, %v579
      %v589 = vld [vmem:[%s5] sm:$0x1]
      %v591 = vlaneseq
      %v592 = vshrl.u32 %v591, 7
      %v593 = vsub.s32 0, %v592
      %v594 = vrot.slane %v589, %v593
      %v596 = vadd.f32 %v581, %v594
      %v597 = vadd.f32 %v582, %v594
      %v598 = vadd.f32 %v583, %v594
      %v599 = vadd.f32 %v584, %v594
      %v600 = vadd.f32 %v585, %v594
      %v601 = vadd.f32 %v586, %v594
      %v602 = vadd.f32 %v587, %v594
      %v603 = vadd.f32 %v588, %v594
      %v604 = vmax.f32 %v596, 0.0
      %v605 = vmax.f32 %v597, 0.0
      %v606 = vmax.f32 %v598, 0.0
      %v607 = vmax.f32 %v599, 0.0
      %v608 = vmax.f32 %v600, 0.0
      %v609 = vmax.f32 %v601, 0.0
      %v610 = vmax.f32 %v602, 0.0
      %v611 = vmax.f32 %v603, 0.0
      %v612 = vld [vmem:[%s2] sm:$0xff]
      %v613 = vld [vmem:[%s2 + $0x8] sm:$0xff]
      %v614 = vld [vmem:[%s2 + $0x10] sm:$0xff]
      %v615 = vld [vmem:[%s2 + $0x18] sm:$0xff]
      %v616 = vld [vmem:[%s2 + $0x20] sm:$0xff]
      %v617 = vld [vmem:[%s2 + $0x28] sm:$0xff]
      %v618 = vld [vmem:[%s2 + $0x30] sm:$0xff]
      %v619 = vld [vmem:[%s2 + $0x38] sm:$0xff]
      %v620 = vld [vmem:[%s2 + $0x40] sm:$0xff]
      %v621 = vld [vmem:[%s2 + $0x48] sm:$0xff]
      %v622 = vld [vmem:[%s2 + $0x50] sm:$0xff]
      %v623 = vld [vmem:[%s2 + $0x58] sm:$0xff]
      %v624 = vld [vmem:[%s2 + $0x60] sm:$0xff]
      %v625 = vld [vmem:[%s2 + $0x68] sm:$0xff]
      %v626 = vld [vmem:[%s2 + $0x70] sm:$0xff]
      %v627 = vld [vmem:[%s2 + $0x78] sm:$0xff]
      %v628 = vld [vmem:[%s2 + $0x80] sm:$0xff]
      %v629 = vld [vmem:[%s2 + $0x88] sm:$0xff]
      %v630 = vld [vmem:[%s2 + $0x90] sm:$0xff]
      %v631 = vld [vmem:[%s2 + $0x98] sm:$0xff]
      %v632 = vld [vmem:[%s2 + $0xa0] sm:$0xff]
      %v633 = vld [vmem:[%s2 + $0xa8] sm:$0xff]
      %v634 = vld [vmem:[%s2 + $0xb0] sm:$0xff]
      %v635 = vld [vmem:[%s2 + $0xb8] sm:$0xff]
      %v636 = vld [vmem:[%s2 + $0xc0] sm:$0xff]
      %v637 = vld [vmem:[%s2 + $0xc8] sm:$0xff]
      %v638 = vld [vmem:[%s2 + $0xd0] sm:$0xff]
      %v639 = vld [vmem:[%s2 + $0xd8] sm:$0xff]
      %v640 = vld [vmem:[%s2 + $0xe0] sm:$0xff]
      %v641 = vld [vmem:[%s2 + $0xe8] sm:$0xff]
      %v642 = vld [vmem:[%s2 + $0xf0] sm:$0xff]
      %v643 = vld [vmem:[%s2 + $0xf8] sm:$0xff]
      %vm644 = vcmask 523264
      %v646 = vsel %vm644, %v612, 0
      %v649 = vsel %vm644, %v613, 0
      %v652 = vsel %vm644, %v614, 0
      %v655 = vsel %vm644, %v615, 0
      %v658 = vsel %vm644, %v616, 0
      %v661 = vsel %vm644, %v617, 0
      %v664 = vsel %vm644, %v618, 0
      %v667 = vsel %vm644, %v619, 0
      %v670 = vsel %vm644, %v620, 0
      %v673 = vsel %vm644, %v621, 0
      %v676 = vsel %vm644, %v622, 0
      %v679 = vsel %vm644, %v623, 0
      %v682 = vsel %vm644, %v624, 0
      %v685 = vsel %vm644, %v625, 0
      %v688 = vsel %vm644, %v626, 0
      %v691 = vsel %vm644, %v627, 0
      %v694 = vsel %vm644, %v628, 0
      %v697 = vsel %vm644, %v629, 0
      %v700 = vsel %vm644, %v630, 0
      %v703 = vsel %vm644, %v631, 0
      %v706 = vsel %vm644, %v632, 0
      %v709 = vsel %vm644, %v633, 0
      %v712 = vsel %vm644, %v634, 0
      %v715 = vsel %vm644, %v635, 0
      %v718 = vsel %vm644, %v636, 0
      %v721 = vsel %vm644, %v637, 0
      %v724 = vsel %vm644, %v638, 0
      %v727 = vsel %vm644, %v639, 0
      %v730 = vsel %vm644, %v640, 0
      %v733 = vsel %vm644, %v641, 0
      %v736 = vsel %vm644, %v642, 0
      %v739 = vsel %vm644, %v643, 0
      %741 = vmatprep.subr.mxu0 0.0
      %742 = vmatpush1.msra.mxu0 %v604
      %743 = vmatprep.subr.mxu0 0.0
      %744 = vmatpush1.msra.mxu0 %v605
      %745 = vmatprep.subr.mxu0 0.0
      %746 = vmatpush1.msra.mxu0 %v606
      %747 = vmatprep.subr.mxu0 0.0
      %748 = vmatpush1.msra.mxu0 %v607
      %749 = vmatprep.subr.mxu0 0.0
      %750 = vmatpush1.msra.mxu0 %v608
      %751 = vmatprep.subr.mxu0 0.0
      %752 = vmatpush1.msra.mxu0 %v609
      %753 = vmatprep.subr.mxu0 0.0
      %754 = vmatpush1.msra.mxu0 %v610
      %755 = vmatprep.subr.mxu0 0.0
      %756 = vmatpush1.msra.mxu0 %v611
      %757 = vmatprep.subr.mxu0 0.0
      %758 = vmatpush1.msra.mxu0 0.0
      %759 = vmatprep.subr.mxu0 0.0
      %760 = vmatpush1.msra.mxu0 0.0
      %761 = vmatprep.subr.mxu0 0.0
      %762 = vmatpush1.msra.mxu0 0.0
      %763 = vmatprep.subr.mxu0 0.0
      %764 = vmatpush1.msra.mxu0 0.0
      %765 = vmatprep.subr.mxu0 0.0
      %766 = vmatpush1.msra.mxu0 0.0
      %767 = vmatprep.subr.mxu0 0.0
      %768 = vmatpush1.msra.mxu0 0.0
      %769 = vmatprep.subr.mxu0 0.0
      %770 = vmatpush1.msra.mxu0 0.0
      %771 = vmatprep.subr.mxu0 0.0
      %772 = vmatpush1.msra.mxu0 0.0
      %773 = vmatprep.subr.mxu0 0.0
      %774 = vmatpush1.msra.mxu0 0.0
      %775 = vmatprep.subr.mxu0 0.0
      %776 = vmatpush1.msra.mxu0 0.0
      %777 = vmatprep.subr.mxu0 0.0
      %778 = vmatpush1.msra.mxu0 0.0
      %779 = vmatprep.subr.mxu0 0.0
      %780 = vmatpush1.msra.mxu0 0.0
      %781 = vmatprep.subr.mxu0 0.0
      %782 = vmatpush1.msra.mxu0 0.0
      %783 = vmatprep.subr.mxu0 0.0
      %784 = vmatpush1.msra.mxu0 0.0
      %785 = vmatprep.subr.mxu0 0.0
      %786 = vmatpush1.msra.mxu0 0.0
      %787 = vmatprep.subr.mxu0 0.0
      %788 = vmatpush1.msra.mxu0 0.0
      %789 = vmatprep.subr.mxu0 0.0
      %790 = vmatpush1.msra.mxu0 0.0
      %791 = vmatprep.subr.mxu0 0.0
      %792 = vmatpush1.msra.mxu0 0.0
      %793 = vmatprep.subr.mxu0 0.0
      %794 = vmatpush1.msra.mxu0 0.0
      %795 = vmatprep.subr.mxu0 0.0
      %796 = vmatpush1.msra.mxu0 0.0
      %797 = vmatprep.subr.mxu0 0.0
      %798 = vmatpush1.msra.mxu0 0.0
      %799 = vmatprep.subr.mxu0 0.0
      %800 = vmatpush1.msra.mxu0 0.0
      %801 = vmatprep.subr.mxu0 0.0
      %802 = vmatpush1.msra.mxu0 0.0
      %803 = vmatprep.subr.mxu0 0.0
      %804 = vmatpush1.msra.mxu0 0.0
      %805 = vmatprep.mubr.f32.mxu0 0.0
      %806 = vmatmul.mubr.f32.gmra.mrb[0].mxu0 %v646
      %v807 = vpop.f32.mrb[0].mxu0
      %v808 = vadd.f32 0.0, %v807
      %v809 = vpop.f32.mrb[0].mxu0
      %810 = vmatprep.mubr.f32.mxu0 0.0
      %811 = vmatmul.mubr.f32.gmra.mrb[0].mxu0 %v649
      %v812 = vpop.f32.mrb[0].mxu0
      %v813 = vadd.f32 0.0, %v812
      %v814 = vpop.f32.mrb[0].mxu0
      %815 = vmatprep.mubr.f32.mxu0 0.0
      %816 = vmatmul.mubr.f32.gmra.mrb[0].mxu0 %v652
      %v817 = vpop.f32.mrb[0].mxu0
      %v818 = vadd.f32 0.0, %v817
      %v819 = vpop.f32.mrb[0].mxu0
      %820 = vmatprep.mubr.f32.mxu0 0.0
      %821 = vmatmul.mubr.f32.gmra.mrb[0].mxu0 %v655
      %v822 = vpop.f32.mrb[0].mxu0
      %v823 = vadd.f32 0.0, %v822
      %v824 = vpop.f32.mrb[0].mxu0
      %825 = vmatprep.mubr.f32.mxu0 0.0
      %826 = vmatmul.mubr.f32.gmra.mrb[0].mxu0 %v658
      %v827 = vpop.f32.mrb[0].mxu0
      %v828 = vadd.f32 0.0, %v827
      %v829 = vpop.f32.mrb[0].mxu0
      %830 = vmatprep.mubr.f32.mxu0 0.0
      %831 = vmatmul.mubr.f32.gmra.mrb[0].mxu0 %v661
      %v832 = vpop.f32.mrb[0].mxu0
      %v833 = vadd.f32 0.0, %v832
      %v834 = vpop.f32.mrb[0].mxu0
      %835 = vmatprep.mubr.f32.mxu0 0.0
      %836 = vmatmul.mubr.f32.gmra.mrb[0].mxu0 %v664
      %v837 = vpop.f32.mrb[0].mxu0
      %v838 = vadd.f32 0.0, %v837
      %v839 = vpop.f32.mrb[0].mxu0
      %840 = vmatprep.mubr.f32.mxu0 0.0
      %841 = vmatmul.mubr.f32.gmra.mrb[0].mxu0 %v667
      %v842 = vpop.f32.mrb[0].mxu0
      %v843 = vadd.f32 0.0, %v842
      %v844 = vpop.f32.mrb[0].mxu0
      %845 = vmatprep.mubr.f32.mxu0 0.0
      %846 = vmatmul.mubr.f32.gmra.mrb[0].mxu0 %v670
      %v847 = vpop.f32.mrb[0].mxu0
      %v848 = vadd.f32 0.0, %v847
      %v849 = vpop.f32.mrb[0].mxu0
      %850 = vmatprep.mubr.f32.mxu0 0.0
      %851 = vmatmul.mubr.f32.gmra.mrb[0].mxu0 %v673
      %v852 = vpop.f32.mrb[0].mxu0
      %v853 = vadd.f32 0.0, %v852
      %v854 = vpop.f32.mrb[0].mxu0
      %855 = vmatprep.mubr.f32.mxu0 0.0
      %856 = vmatmul.mubr.f32.gmra.mrb[0].mxu0 %v676
      %v857 = vpop.f32.mrb[0].mxu0
      %v858 = vadd.f32 0.0, %v857
      %v859 = vpop.f32.mrb[0].mxu0
      %860 = vmatprep.mubr.f32.mxu0 0.0
      %861 = vmatmul.mubr.f32.gmra.mrb[0].mxu0 %v679
      %v862 = vpop.f32.mrb[0].mxu0
      %v863 = vadd.f32 0.0, %v862
      %v864 = vpop.f32.mrb[0].mxu0
      %865 = vmatprep.mubr.f32.mxu0 0.0
      %866 = vmatmul.mubr.f32.gmra.mrb[0].mxu0 %v682
      %v867 = vpop.f32.mrb[0].mxu0
      %v868 = vadd.f32 0.0, %v867
      %v869 = vpop.f32.mrb[0].mxu0
      %870 = vmatprep.mubr.f32.mxu0 0.0
      %871 = vmatmul.mubr.f32.gmra.mrb[0].mxu0 %v685
      %v872 = vpop.f32.mrb[0].mxu0
      %v873 = vadd.f32 0.0, %v872
      %v874 = vpop.f32.mrb[0].mxu0
      %875 = vmatprep.mubr.f32.mxu0 0.0
      %876 = vmatmul.mubr.f32.gmra.mrb[0].mxu0 %v688
      %v877 = vpop.f32.mrb[0].mxu0
      %v878 = vadd.f32 0.0, %v877
      %v879 = vpop.f32.mrb[0].mxu0
      %880 = vmatprep.mubr.f32.mxu0 0.0
      %881 = vmatmul.mubr.f32.gmra.mrb[0].mxu0 %v691
      %v882 = vpop.f32.mrb[0].mxu0
      %v883 = vadd.f32 0.0, %v882
      %v884 = vpop.f32.mrb[0].mxu0
      %885 = vmatprep.mubr.f32.mxu0 0.0
      %886 = vmatmul.mubr.f32.gmra.mrb[0].mxu0 %v694
      %v887 = vpop.f32.mrb[0].mxu0
      %v888 = vadd.f32 0.0, %v887
      %v889 = vpop.f32.mrb[0].mxu0
      %890 = vmatprep.mubr.f32.mxu0 0.0
      %891 = vmatmul.mubr.f32.gmra.mrb[0].mxu0 %v697
      %v892 = vpop.f32.mrb[0].mxu0
      %v893 = vadd.f32 0.0, %v892
      %v894 = vpop.f32.mrb[0].mxu0
      %895 = vmatprep.mubr.f32.mxu0 0.0
      %896 = vmatmul.mubr.f32.gmra.mrb[0].mxu0 %v700
      %v897 = vpop.f32.mrb[0].mxu0
      %v898 = vadd.f32 0.0, %v897
      %v899 = vpop.f32.mrb[0].mxu0
      %900 = vmatprep.mubr.f32.mxu0 0.0
      %901 = vmatmul.mubr.f32.gmra.mrb[0].mxu0 %v703
      %v902 = vpop.f32.mrb[0].mxu0
      %v903 = vadd.f32 0.0, %v902
      %v904 = vpop.f32.mrb[0].mxu0
      %905 = vmatprep.mubr.f32.mxu0 0.0
      %906 = vmatmul.mubr.f32.gmra.mrb[0].mxu0 %v706
      %v907 = vpop.f32.mrb[0].mxu0
      %v908 = vadd.f32 0.0, %v907
      %v909 = vpop.f32.mrb[0].mxu0
      %910 = vmatprep.mubr.f32.mxu0 0.0
      %911 = vmatmul.mubr.f32.gmra.mrb[0].mxu0 %v709
      %v912 = vpop.f32.mrb[0].mxu0
      %v913 = vadd.f32 0.0, %v912
      %v914 = vpop.f32.mrb[0].mxu0
      %915 = vmatprep.mubr.f32.mxu0 0.0
      %916 = vmatmul.mubr.f32.gmra.mrb[0].mxu0 %v712
      %v917 = vpop.f32.mrb[0].mxu0
      %v918 = vadd.f32 0.0, %v917
      %v919 = vpop.f32.mrb[0].mxu0
      %920 = vmatprep.mubr.f32.mxu0 0.0
      %921 = vmatmul.mubr.f32.gmra.mrb[0].mxu0 %v715
      %v922 = vpop.f32.mrb[0].mxu0
      %v923 = vadd.f32 0.0, %v922
      %v924 = vpop.f32.mrb[0].mxu0
      %925 = vmatprep.mubr.f32.mxu0 0.0
      %926 = vmatmul.mubr.f32.gmra.mrb[0].mxu0 %v718
      %v927 = vpop.f32.mrb[0].mxu0
      %v928 = vadd.f32 0.0, %v927
      %v929 = vpop.f32.mrb[0].mxu0
      %930 = vmatprep.mubr.f32.mxu0 0.0
      %931 = vmatmul.mubr.f32.gmra.mrb[0].mxu0 %v721
      %v932 = vpop.f32.mrb[0].mxu0
      %v933 = vadd.f32 0.0, %v932
      %v934 = vpop.f32.mrb[0].mxu0
      %935 = vmatprep.mubr.f32.mxu0 0.0
      %936 = vmatmul.mubr.f32.gmra.mrb[0].mxu0 %v724
      %v937 = vpop.f32.mrb[0].mxu0
      %v938 = vadd.f32 0.0, %v937
      %v939 = vpop.f32.mrb[0].mxu0
      %940 = vmatprep.mubr.f32.mxu0 0.0
      %941 = vmatmul.mubr.f32.gmra.mrb[0].mxu0 %v727
      %v942 = vpop.f32.mrb[0].mxu0
      %v943 = vadd.f32 0.0, %v942
      %v944 = vpop.f32.mrb[0].mxu0
      %945 = vmatprep.mubr.f32.mxu0 0.0
      %946 = vmatmul.mubr.f32.gmra.mrb[0].mxu0 %v730
      %v947 = vpop.f32.mrb[0].mxu0
      %v948 = vadd.f32 0.0, %v947
      %v949 = vpop.f32.mrb[0].mxu0
      %950 = vmatprep.mubr.f32.mxu0 0.0
      %951 = vmatmul.mubr.f32.gmra.mrb[0].mxu0 %v733
      %v952 = vpop.f32.mrb[0].mxu0
      %v953 = vadd.f32 0.0, %v952
      %v954 = vpop.f32.mrb[0].mxu0
      %955 = vmatprep.mubr.f32.mxu0 0.0
      %956 = vmatmul.mubr.f32.gmra.mrb[0].mxu0 %v736
      %v957 = vpop.f32.mrb[0].mxu0
      %v958 = vadd.f32 0.0, %v957
      %v959 = vpop.f32.mrb[0].mxu0
      %960 = vmatprep.mubr.f32.mxu0 0.0
      %961 = vmatmul.mubr.f32.gmra.mrb[0].mxu0 %v739
      %v962 = vpop.f32.mrb[0].mxu0
      %v963 = vadd.f32 0.0, %v962
      %v964 = vpop.f32.mrb[0].mxu0
      %965 = vdwg.mxu0
      %966 = vst.msk [vmem:[#allocation2] sm:$0xff] %vm444, 0.0
      %967 = vst.msk [vmem:[#allocation2 + $0x8] sm:$0xff] %vm444, 0.0
      %vm968 = vcmask 123904
      %969 = vst.msk [vmem:[#allocation2 + $0x10] sm:$0x3] %vm968, 0.0
      %970 = vst.msk [vmem:[#allocation2 + $0x18] sm:$0xff] %vm444, 0.0
      %971 = vst.msk [vmem:[#allocation2 + $0x20] sm:$0xff] %vm444, 0.0
      %972 = vst.msk [vmem:[#allocation2 + $0x28] sm:$0x3] %vm968, 0.0
      %973 = vst.msk [vmem:[#allocation2 + $0x30] sm:$0xff] %vm444, 0.0
      %974 = vst.msk [vmem:[#allocation2 + $0x38] sm:$0xff] %vm444, 0.0
      %975 = vst.msk [vmem:[#allocation2 + $0x40] sm:$0x3] %vm968, 0.0
      %976 = vst.msk [vmem:[#allocation2 + $0x48] sm:$0xff] %vm444, 0.0
      %977 = vst.msk [vmem:[#allocation2 + $0x50] sm:$0xff] %vm444, 0.0
      %978 = vst.msk [vmem:[#allocation2 + $0x58] sm:$0x3] %vm968, 0.0
      %979 = vst.msk [vmem:[#allocation2 + $0x60] sm:$0xff] %vm444, 0.0
      %980 = vst.msk [vmem:[#allocation2 + $0x68] sm:$0xff] %vm444, 0.0
      %981 = vst.msk [vmem:[#allocation2 + $0x70] sm:$0x3] %vm968, 0.0
      %982 = vst.msk [vmem:[#allocation2 + $0x78] sm:$0xff] %vm444, 0.0
      %983 = vst.msk [vmem:[#allocation2 + $0x80] sm:$0xff] %vm444, 0.0
      %984 = vst.msk [vmem:[#allocation2 + $0x88] sm:$0x3] %vm968, 0.0
      %985 = vst.msk [vmem:[#allocation2 + $0x90] sm:$0xff] %vm444, 0.0
      %986 = vst.msk [vmem:[#allocation2 + $0x98] sm:$0xff] %vm444, 0.0
      %987 = vst.msk [vmem:[#allocation2 + $0xa0] sm:$0x3] %vm968, 0.0
      %988 = vst.msk [vmem:[#allocation2 + $0xa8] sm:$0xff] %vm444, 0.0
      %989 = vst.msk [vmem:[#allocation2 + $0xb0] sm:$0xff] %vm444, 0.0
      %990 = vst.msk [vmem:[#allocation2 + $0xb8] sm:$0x3] %vm968, 0.0
      %991 = vst.msk [vmem:[#allocation2 + $0xc0] sm:$0xff] %vm444, 0.0
      %992 = vst.msk [vmem:[#allocation2 + $0xc8] sm:$0xff] %vm444, 0.0
      %993 = vst.msk [vmem:[#allocation2 + $0xd0] sm:$0x3] %vm968, 0.0
      %994 = vst.msk [vmem:[#allocation2 + $0xd8] sm:$0xff] %vm444, 0.0
      %995 = vst.msk [vmem:[#allocation2 + $0xe0] sm:$0xff] %vm444, 0.0
      %996 = vst.msk [vmem:[#allocation2 + $0xe8] sm:$0x3] %vm968, 0.0
      %997 = vst.msk [vmem:[#allocation2 + $0xf0] sm:$0xff] %vm444, 0.0
      %998 = vst.msk [vmem:[#allocation2 + $0xf8] sm:$0xff] %vm444, 0.0
      %999 = vst.msk [vmem:[#allocation2 + $0x100] sm:$0x3] %vm968, 0.0
      %1000 = vst.msk [vmem:[#allocation2 + $0x108] sm:$0xff] %vm444, 0.0
      %1001 = vst.msk [vmem:[#allocation2 + $0x110] sm:$0xff] %vm444, 0.0
      %1002 = vst.msk [vmem:[#allocation2 + $0x118] sm:$0x3] %vm968, 0.0
      %1003 = vst.msk [vmem:[#allocation2 + $0x120] sm:$0xff] %vm444, 0.0
      %1004 = vst.msk [vmem:[#allocation2 + $0x128] sm:$0xff] %vm444, 0.0
      %1005 = vst.msk [vmem:[#allocation2 + $0x130] sm:$0x3] %vm968, 0.0
      %1006 = vst.msk [vmem:[#allocation2 + $0x138] sm:$0xff] %vm444, 0.0
      %1007 = vst.msk [vmem:[#allocation2 + $0x140] sm:$0xff] %vm444, 0.0
      %1008 = vst.msk [vmem:[#allocation2 + $0x148] sm:$0x3] %vm968, 0.0
      %1009 = vst.msk [vmem:[#allocation2 + $0x150] sm:$0xff] %vm444, 0.0
      %1010 = vst.msk [vmem:[#allocation2 + $0x158] sm:$0xff] %vm444, 0.0
      %1011 = vst.msk [vmem:[#allocation2 + $0x160] sm:$0x3] %vm968, 0.0
      %1012 = vst.msk [vmem:[#allocation2 + $0x168] sm:$0xff] %vm444, 0.0
      %1013 = vst.msk [vmem:[#allocation2 + $0x170] sm:$0xff] %vm444, 0.0
      %1014 = vst.msk [vmem:[#allocation2 + $0x178] sm:$0x3] %vm968, 0.0
      %1015 = vst.msk [vmem:[#allocation2 + $0x180] sm:$0xff] %vm444, 0.0
      %1016 = vst.msk [vmem:[#allocation2 + $0x188] sm:$0xff] %vm444, 0.0
      %1017 = vst.msk [vmem:[#allocation2 + $0x190] sm:$0x3] %vm968, 0.0
      %1018 = vst.msk [vmem:[#allocation2 + $0x198] sm:$0xff] %vm444, 0.0
      %1019 = vst.msk [vmem:[#allocation2 + $0x1a0] sm:$0xff] %vm444, 0.0
      %1020 = vst.msk [vmem:[#allocation2 + $0x1a8] sm:$0x3] %vm968, 0.0
      %v1021 = vld [vmem:[%s423] sm:$0xff]
      %v1022 = vld [vmem:[%s423 + $0x8] sm:$0xff]
      %v1023 = vld [vmem:[%s423 + $0x10] sm:$0xff]
      %v1024 = vld [vmem:[%s423 + $0x18] sm:$0xff]
      %v1025 = vld [vmem:[%s423 + $0x20] sm:$0xff]
      %v1026 = vld [vmem:[%s423 + $0x28] sm:$0xff]
      %v1027 = vld [vmem:[%s423 + $0x30] sm:$0xff]
      %v1028 = vld [vmem:[%s423 + $0x38] sm:$0xff]
      %v1029 = vld [vmem:[%s423 + $0x40] sm:$0xff]
      %v1030 = vld [vmem:[%s423 + $0x48] sm:$0xff]
      %v1031 = vld [vmem:[%s423 + $0x50] sm:$0xff]
      %v1032 = vld [vmem:[%s423 + $0x58] sm:$0xff]
      %v1033 = vld [vmem:[%s423 + $0x60] sm:$0xff]
      %v1034 = vld [vmem:[%s423 + $0x68] sm:$0xff]
      %v1035 = vld [vmem:[%s423 + $0x70] sm:$0xff]
      %v1036 = vld [vmem:[%s423 + $0x78] sm:$0xff]
      %v1037 = vld [vmem:[%s423 + $0x80] sm:$0xff]
      %v1038 = vld [vmem:[%s423 + $0x88] sm:$0xff]
      %v1039 = vld [vmem:[%s423 + $0x90] sm:$0xff]
      %v1040 = vld [vmem:[%s423 + $0x98] sm:$0xff]
      %v1041 = vld [vmem:[%s423 + $0xa0] sm:$0xff]
      %v1042 = vld [vmem:[%s423 + $0xa8] sm:$0xff]
      %v1043 = vld [vmem:[%s423 + $0xb0] sm:$0xff]
      %v1044 = vld [vmem:[%s423 + $0xb8] sm:$0xff]
      %v1045 = vld [vmem:[%s423 + $0xc0] sm:$0xff]
      %v1046 = vld [vmem:[%s423 + $0xc8] sm:$0xff]
      %v1047 = vld [vmem:[%s423 + $0xd0] sm:$0xff]
      %v1048 = vld [vmem:[%s423 + $0xd8] sm:$0xff]
      %v1049 = vld [vmem:[%s423 + $0xe0] sm:$0xff]
      %v1050 = vld [vmem:[%s423 + $0xe8] sm:$0xff]
      %v1051 = vld [vmem:[%s423 + $0xf0] sm:$0xff]
      %v1052 = vld [vmem:[%s423 + $0xf8] sm:$0xff]
      %s1053 = scalar_lea.vmem [#allocation2], 24
      %vm1054 = vcmask 64512
      %1055 = vst.msk [vmem:[%s1053 + $0x1] sm:$0xff] %vm1054, %v1021
      %1056 = vst.msk [vmem:[%s1053 + $0x9] sm:$0xff] %vm1054, %v1022
      %1057 = vst.msk [vmem:[%s1053 + $0x19] sm:$0xff] %vm1054, %v1023
      %1058 = vst.msk [vmem:[%s1053 + $0x21] sm:$0xff] %vm1054, %v1024
      %1059 = vst.msk [vmem:[%s1053 + $0x31] sm:$0xff] %vm1054, %v1025
      %1060 = vst.msk [vmem:[%s1053 + $0x39] sm:$0xff] %vm1054, %v1026
      %1061 = vst.msk [vmem:[%s1053 + $0x49] sm:$0xff] %vm1054, %v1027
      %1062 = vst.msk [vmem:[%s1053 + $0x51] sm:$0xff] %vm1054, %v1028
      %1063 = vst.msk [vmem:[%s1053 + $0x61] sm:$0xff] %vm1054, %v1029
      %1064 = vst.msk [vmem:[%s1053 + $0x69] sm:$0xff] %vm1054, %v1030
      %1065 = vst.msk [vmem:[%s1053 + $0x79] sm:$0xff] %vm1054, %v1031
      %1066 = vst.msk [vmem:[%s1053 + $0x81] sm:$0xff] %vm1054, %v1032
      %1067 = vst.msk [vmem:[%s1053 + $0x91] sm:$0xff] %vm1054, %v1033
      %1068 = vst.msk [vmem:[%s1053 + $0x99] sm:$0xff] %vm1054, %v1034
      %1069 = vst.msk [vmem:[%s1053 + $0xa9] sm:$0xff] %vm1054, %v1035
      %1070 = vst.msk [vmem:[%s1053 + $0xb1] sm:$0xff] %vm1054, %v1036
      %1071 = vst.msk [vmem:[%s1053 + $0xc1] sm:$0xff] %vm1054, %v1037
      %1072 = vst.msk [vmem:[%s1053 + $0xc9] sm:$0xff] %vm1054, %v1038
      %1073 = vst.msk [vmem:[%s1053 + $0xd9] sm:$0xff] %vm1054, %v1039
      %1074 = vst.msk [vmem:[%s1053 + $0xe1] sm:$0xff] %vm1054, %v1040
      %1075 = vst.msk [vmem:[%s1053 + $0xf1] sm:$0xff] %vm1054, %v1041
      %1076 = vst.msk [vmem:[%s1053 + $0xf9] sm:$0xff] %vm1054, %v1042
      %1077 = vst.msk [vmem:[%s1053 + $0x109] sm:$0xff] %vm1054, %v1043
      %1078 = vst.msk [vmem:[%s1053 + $0x111] sm:$0xff] %vm1054, %v1044
      %1079 = vst.msk [vmem:[%s1053 + $0x121] sm:$0xff] %vm1054, %v1045
      %1080 = vst.msk [vmem:[%s1053 + $0x129] sm:$0xff] %vm1054, %v1046
      %1081 = vst.msk [vmem:[%s1053 + $0x139] sm:$0xff] %vm1054, %v1047
      %1082 = vst.msk [vmem:[%s1053 + $0x141] sm:$0xff] %vm1054, %v1048
      %1083 = vst.msk [vmem:[%s1053 + $0x151] sm:$0xff] %vm1054, %v1049
      %1084 = vst.msk [vmem:[%s1053 + $0x159] sm:$0xff] %vm1054, %v1050
      %1085 = vst.msk [vmem:[%s1053 + $0x169] sm:$0xff] %vm1054, %v1051
      %1086 = vst.msk [vmem:[%s1053 + $0x171] sm:$0xff] %vm1054, %v1052
      %1119 = vrot.lane.b32.xlu0 %v808, 8
      %v1120 = vpop.permute.xlu0 %1119
      %1121 = vrot.lane.b32.xlu0 %v813, 8
      %v1122 = vpop.permute.xlu0 %1121
      %1123 = vrot.lane.b32.xlu0 %v818, 8
      %v1124 = vpop.permute.xlu0 %1123
      %1125 = vrot.lane.b32.xlu0 %v823, 8
      %v1126 = vpop.permute.xlu0 %1125
      %1127 = vrot.lane.b32.xlu0 %v828, 8
      %v1128 = vpop.permute.xlu0 %1127
      %1129 = vrot.lane.b32.xlu0 %v833, 8
      %v1130 = vpop.permute.xlu0 %1129
      %1131 = vrot.lane.b32.xlu0 %v838, 8
      %v1132 = vpop.permute.xlu0 %1131
      %1133 = vrot.lane.b32.xlu0 %v843, 8
      %v1134 = vpop.permute.xlu0 %1133
      %1135 = vrot.lane.b32.xlu0 %v848, 8
      %v1136 = vpop.permute.xlu0 %1135
      %1137 = vrot.lane.b32.xlu0 %v853, 8
      %v1138 = vpop.permute.xlu0 %1137
      %1139 = vrot.lane.b32.xlu0 %v858, 8
      %v1140 = vpop.permute.xlu0 %1139
      %1141 = vrot.lane.b32.xlu0 %v863, 8
      %v1142 = vpop.permute.xlu0 %1141
      %1143 = vrot.lane.b32.xlu0 %v868, 8
      %v1144 = vpop.permute.xlu0 %1143
      %1145 = vrot.lane.b32.xlu0 %v873, 8
      %v1146 = vpop.permute.xlu0 %1145
      %1147 = vrot.lane.b32.xlu0 %v878, 8
      %v1148 = vpop.permute.xlu0 %1147
      %1149 = vrot.lane.b32.xlu0 %v883, 8
      %v1150 = vpop.permute.xlu0 %1149
      %1151 = vrot.lane.b32.xlu0 %v888, 8
      %v1152 = vpop.permute.xlu0 %1151
      %1153 = vrot.lane.b32.xlu0 %v893, 8
      %v1154 = vpop.permute.xlu0 %1153
      %1155 = vrot.lane.b32.xlu0 %v898, 8
      %v1156 = vpop.permute.xlu0 %1155
      %1157 = vrot.lane.b32.xlu0 %v903, 8
      %v1158 = vpop.permute.xlu0 %1157
      %1159 = vrot.lane.b32.xlu0 %v908, 8
      %v1160 = vpop.permute.xlu0 %1159
      %1161 = vrot.lane.b32.xlu0 %v913, 8
      %v1162 = vpop.permute.xlu0 %1161
      %1163 = vrot.lane.b32.xlu0 %v918, 8
      %v1164 = vpop.permute.xlu0 %1163
      %1165 = vrot.lane.b32.xlu0 %v923, 8
      %v1166 = vpop.permute.xlu0 %1165
      %1167 = vrot.lane.b32.xlu0 %v928, 8
      %v1168 = vpop.permute.xlu0 %1167
      %1169 = vrot.lane.b32.xlu0 %v933, 8
      %v1170 = vpop.permute.xlu0 %1169
      %1171 = vrot.lane.b32.xlu0 %v938, 8
      %v1172 = vpop.permute.xlu0 %1171
      %1173 = vrot.lane.b32.xlu0 %v943, 8
      %v1174 = vpop.permute.xlu0 %1173
      %1175 = vrot.lane.b32.xlu0 %v948, 8
      %v1176 = vpop.permute.xlu0 %1175
      %1177 = vrot.lane.b32.xlu0 %v953, 8
      %v1178 = vpop.permute.xlu0 %1177
      %1179 = vrot.lane.b32.xlu0 %v958, 8
      %v1180 = vpop.permute.xlu0 %1179
      %1181 = vrot.lane.b32.xlu0 %v963, 8
      %v1182 = vpop.permute.xlu0 %1181
      %vm1215 = vcmask 130112
      %1216 = vst.msk [vmem:[%s1053 + $0x1] sm:$0xff] %vm1215, %v1120
      %1217 = vst.msk [vmem:[%s1053 + $0x9] sm:$0xff] %vm1215, %v1122
      %1218 = vst.msk [vmem:[%s1053 + $0x19] sm:$0xff] %vm1215, %v1124
      %1219 = vst.msk [vmem:[%s1053 + $0x21] sm:$0xff] %vm1215, %v1126
      %1220 = vst.msk [vmem:[%s1053 + $0x31] sm:$0xff] %vm1215, %v1128
      %1221 = vst.msk [vmem:[%s1053 + $0x39] sm:$0xff] %vm1215, %v1130
      %1222 = vst.msk [vmem:[%s1053 + $0x49] sm:$0xff] %vm1215, %v1132
      %1223 = vst.msk [vmem:[%s1053 + $0x51] sm:$0xff] %vm1215, %v1134
      %1224 = vst.msk [vmem:[%s1053 + $0x61] sm:$0xff] %vm1215, %v1136
      %1225 = vst.msk [vmem:[%s1053 + $0x69] sm:$0xff] %vm1215, %v1138
      %1226 = vst.msk [vmem:[%s1053 + $0x79] sm:$0xff] %vm1215, %v1140
      %1227 = vst.msk [vmem:[%s1053 + $0x81] sm:$0xff] %vm1215, %v1142
      %1228 = vst.msk [vmem:[%s1053 + $0x91] sm:$0xff] %vm1215, %v1144
      %1229 = vst.msk [vmem:[%s1053 + $0x99] sm:$0xff] %vm1215, %v1146
      %1230 = vst.msk [vmem:[%s1053 + $0xa9] sm:$0xff] %vm1215, %v1148
      %1231 = vst.msk [vmem:[%s1053 + $0xb1] sm:$0xff] %vm1215, %v1150
      %1232 = vst.msk [vmem:[%s1053 + $0xc1] sm:$0xff] %vm1215, %v1152
      %1233 = vst.msk [vmem:[%s1053 + $0xc9] sm:$0xff] %vm1215, %v1154
      %1234 = vst.msk [vmem:[%s1053 + $0xd9] sm:$0xff] %vm1215, %v1156
      %1235 = vst.msk [vmem:[%s1053 + $0xe1] sm:$0xff] %vm1215, %v1158
      %1236 = vst.msk [vmem:[%s1053 + $0xf1] sm:$0xff] %vm1215, %v1160
      %1237 = vst.msk [vmem:[%s1053 + $0xf9] sm:$0xff] %vm1215, %v1162
      %1238 = vst.msk [vmem:[%s1053 + $0x109] sm:$0xff] %vm1215, %v1164
      %1239 = vst.msk [vmem:[%s1053 + $0x111] sm:$0xff] %vm1215, %v1166
      %1240 = vst.msk [vmem:[%s1053 + $0x121] sm:$0xff] %vm1215, %v1168
      %1241 = vst.msk [vmem:[%s1053 + $0x129] sm:$0xff] %vm1215, %v1170
      %1242 = vst.msk [vmem:[%s1053 + $0x139] sm:$0xff] %vm1215, %v1172
      %1243 = vst.msk [vmem:[%s1053 + $0x141] sm:$0xff] %vm1215, %v1174
      %1244 = vst.msk [vmem:[%s1053 + $0x151] sm:$0xff] %vm1215, %v1176
      %1245 = vst.msk [vmem:[%s1053 + $0x159] sm:$0xff] %vm1215, %v1178
      %1246 = vst.msk [vmem:[%s1053 + $0x169] sm:$0xff] %vm1215, %v1180
      %1247 = vst.msk [vmem:[%s1053 + $0x171] sm:$0xff] %vm1215, %v1182
      %v1248 = vld [vmem:[#allocation2] sm:$0xff]
      %v1249 = vld [vmem:[#allocation2 + $0x8] sm:$0xff]
      %v1250 = vld [vmem:[#allocation2 + $0x18] sm:$0xff]
      %v1251 = vld [vmem:[#allocation2 + $0x20] sm:$0xff]
      %v1252 = vld [vmem:[#allocation2 + $0x30] sm:$0xff]
      %v1253 = vld [vmem:[#allocation2 + $0x38] sm:$0xff]
      %v1254 = vld [vmem:[#allocation2 + $0x48] sm:$0xff]
      %v1255 = vld [vmem:[#allocation2 + $0x50] sm:$0xff]
      %v1256 = vld [vmem:[#allocation2 + $0x60] sm:$0xff]
      %v1257 = vld [vmem:[#allocation2 + $0x68] sm:$0xff]
      %v1258 = vld [vmem:[#allocation2 + $0x78] sm:$0xff]
      %v1259 = vld [vmem:[#allocation2 + $0x80] sm:$0xff]
      %v1260 = vld [vmem:[#allocation2 + $0x90] sm:$0xff]
      %v1261 = vld [vmem:[#allocation2 + $0x98] sm:$0xff]
      %v1262 = vld [vmem:[#allocation2 + $0xa8] sm:$0xff]
      %v1263 = vld [vmem:[#allocation2 + $0xb0] sm:$0xff]
      %v1264 = vld [vmem:[#allocation2 + $0xc0] sm:$0xff]
      %v1265 = vld [vmem:[#allocation2 + $0xc8] sm:$0xff]
      %v1266 = vld [vmem:[#allocation2 + $0xd8] sm:$0xff]
      %v1267 = vld [vmem:[#allocation2 + $0xe0] sm:$0xff]
      %v1268 = vld [vmem:[#allocation2 + $0xf0] sm:$0xff]
      %v1269 = vld [vmem:[#allocation2 + $0xf8] sm:$0xff]
      %v1270 = vld [vmem:[#allocation2 + $0x108] sm:$0xff]
      %v1271 = vld [vmem:[#allocation2 + $0x110] sm:$0xff]
      %v1272 = vld [vmem:[#allocation2 + $0x120] sm:$0xff]
      %v1273 = vld [vmem:[#allocation2 + $0x128] sm:$0xff]
      %v1274 = vld [vmem:[#allocation2 + $0x138] sm:$0xff]
      %v1275 = vld [vmem:[#allocation2 + $0x140] sm:$0xff]
      %v1276 = vld [vmem:[#allocation2 + $0x150] sm:$0xff]
      %v1277 = vld [vmem:[#allocation2 + $0x158] sm:$0xff]
      %v1278 = vld [vmem:[#allocation2 + $0x168] sm:$0xff]
      %v1279 = vld [vmem:[#allocation2 + $0x170] sm:$0xff]
      %1280 = vst.msk [vmem:[#allocation3] sm:$0xff] %vm444, %v1248
      %1281 = vst.msk [vmem:[#allocation3 + $0x10] sm:$0xff] %vm444, %v1249
      %1282 = vst.msk [vmem:[#allocation3 + $0x20] sm:$0xff] %vm444, %v1250
      %1283 = vst.msk [vmem:[#allocation3 + $0x30] sm:$0xff] %vm444, %v1251
      %1284 = vst.msk [vmem:[#allocation3 + $0x40] sm:$0xff] %vm444, %v1252
      %1285 = vst.msk [vmem:[#allocation3 + $0x50] sm:$0xff] %vm444, %v1253
      %1286 = vst.msk [vmem:[#allocation3 + $0x60] sm:$0xff] %vm444, %v1254
      %1287 = vst.msk [vmem:[#allocation3 + $0x70] sm:$0xff] %vm444, %v1255
      %1288 = vst.msk [vmem:[#allocation3 + $0x80] sm:$0xff] %vm444, %v1256
      %1289 = vst.msk [vmem:[#allocation3 + $0x90] sm:$0xff] %vm444, %v1257
      %1290 = vst.msk [vmem:[#allocation3 + $0xa0] sm:$0xff] %vm444, %v1258
      %1291 = vst.msk [vmem:[#allocation3 + $0xb0] sm:$0xff] %vm444, %v1259
      %1292 = vst.msk [vmem:[#allocation3 + $0xc0] sm:$0xff] %vm444, %v1260
      %1293 = vst.msk [vmem:[#allocation3 + $0xd0] sm:$0xff] %vm444, %v1261
      %1294 = vst.msk [vmem:[#allocation3 + $0xe0] sm:$0xff] %vm444, %v1262
      %1295 = vst.msk [vmem:[#allocation3 + $0xf0] sm:$0xff] %vm444, %v1263
      %1296 = vst.msk [vmem:[#allocation3 + $0x100] sm:$0xff] %vm444, %v1264
      %1297 = vst.msk [vmem:[#allocation3 + $0x110] sm:$0xff] %vm444, %v1265
      %1298 = vst.msk [vmem:[#allocation3 + $0x120] sm:$0xff] %vm444, %v1266
      %1299 = vst.msk [vmem:[#allocation3 + $0x130] sm:$0xff] %vm444, %v1267
      %1300 = vst.msk [vmem:[#allocation3 + $0x140] sm:$0xff] %vm444, %v1268
      %1301 = vst.msk [vmem:[#allocation3 + $0x150] sm:$0xff] %vm444, %v1269
      %1302 = vst.msk [vmem:[#allocation3 + $0x160] sm:$0xff] %vm444, %v1270
      %1303 = vst.msk [vmem:[#allocation3 + $0x170] sm:$0xff] %vm444, %v1271
      %1304 = vst.msk [vmem:[#allocation3 + $0x180] sm:$0xff] %vm444, %v1272
      %1305 = vst.msk [vmem:[#allocation3 + $0x190] sm:$0xff] %vm444, %v1273
      %1306 = vst.msk [vmem:[#allocation3 + $0x1a0] sm:$0xff] %vm444, %v1274
      %1307 = vst.msk [vmem:[#allocation3 + $0x1b0] sm:$0xff] %vm444, %v1275
      %1308 = vst.msk [vmem:[#allocation3 + $0x1c0] sm:$0xff] %vm444, %v1276
      %1309 = vst.msk [vmem:[#allocation3 + $0x1d0] sm:$0xff] %vm444, %v1277
      %1310 = vst.msk [vmem:[#allocation3 + $0x1e0] sm:$0xff] %vm444, %v1278
      %1311 = vst.msk [vmem:[#allocation3 + $0x1f0] sm:$0xff] %vm444, %v1279
      %v1312 = vld [vmem:[#allocation2 + $0x1] sm:$0xff]
      %v1313 = vld [vmem:[#allocation2 + $0x9] sm:$0xff]
      %v1314 = vld [vmem:[#allocation2 + $0x19] sm:$0xff]
      %v1315 = vld [vmem:[#allocation2 + $0x21] sm:$0xff]
      %v1316 = vld [vmem:[#allocation2 + $0x31] sm:$0xff]
      %v1317 = vld [vmem:[#allocation2 + $0x39] sm:$0xff]
      %v1318 = vld [vmem:[#allocation2 + $0x49] sm:$0xff]
      %v1319 = vld [vmem:[#allocation2 + $0x51] sm:$0xff]
      %v1320 = vld [vmem:[#allocation2 + $0x61] sm:$0xff]
      %v1321 = vld [vmem:[#allocation2 + $0x69] sm:$0xff]
      %v1322 = vld [vmem:[#allocation2 + $0x79] sm:$0xff]
      %v1323 = vld [vmem:[#allocation2 + $0x81] sm:$0xff]
      %v1324 = vld [vmem:[#allocation2 + $0x91] sm:$0xff]
      %v1325 = vld [vmem:[#allocation2 + $0x99] sm:$0xff]
      %v1326 = vld [vmem:[#allocation2 + $0xa9] sm:$0xff]
      %v1327 = vld [vmem:[#allocation2 + $0xb1] sm:$0xff]
      %v1328 = vld [vmem:[#allocation2 + $0xc1] sm:$0xff]
      %v1329 = vld [vmem:[#allocation2 + $0xc9] sm:$0xff]
      %v1330 = vld [vmem:[#allocation2 + $0xd9] sm:$0xff]
      %v1331 = vld [vmem:[#allocation2 + $0xe1] sm:$0xff]
      %v1332 = vld [vmem:[#allocation2 + $0xf1] sm:$0xff]
      %v1333 = vld [vmem:[#allocation2 + $0xf9] sm:$0xff]
      %v1334 = vld [vmem:[#allocation2 + $0x109] sm:$0xff]
      %v1335 = vld [vmem:[#allocation2 + $0x111] sm:$0xff]
      %v1336 = vld [vmem:[#allocation2 + $0x121] sm:$0xff]
      %v1337 = vld [vmem:[#allocation2 + $0x129] sm:$0xff]
      %v1338 = vld [vmem:[#allocation2 + $0x139] sm:$0xff]
      %v1339 = vld [vmem:[#allocation2 + $0x141] sm:$0xff]
      %v1340 = vld [vmem:[#allocation2 + $0x151] sm:$0xff]
      %v1341 = vld [vmem:[#allocation2 + $0x159] sm:$0xff]
      %v1342 = vld [vmem:[#allocation2 + $0x169] sm:$0xff]
      %v1343 = vld [vmem:[#allocation2 + $0x171] sm:$0xff]
      %1376 = vrot.lane.b32.xlu0 %v1312, 16
      %v1377 = vpop.permute.xlu0 %1376
      %1378 = vrot.lane.b32.xlu0 %v1313, 16
      %v1379 = vpop.permute.xlu0 %1378
      %1380 = vrot.lane.b32.xlu0 %v1314, 16
      %v1381 = vpop.permute.xlu0 %1380
      %1382 = vrot.lane.b32.xlu0 %v1315, 16
      %v1383 = vpop.permute.xlu0 %1382
      %1384 = vrot.lane.b32.xlu0 %v1316, 16
      %v1385 = vpop.permute.xlu0 %1384
      %1386 = vrot.lane.b32.xlu0 %v1317, 16
      %v1387 = vpop.permute.xlu0 %1386
      %1388 = vrot.lane.b32.xlu0 %v1318, 16
      %v1389 = vpop.permute.xlu0 %1388
      %1390 = vrot.lane.b32.xlu0 %v1319, 16
      %v1391 = vpop.permute.xlu0 %1390
      %1392 = vrot.lane.b32.xlu0 %v1320, 16
      %v1393 = vpop.permute.xlu0 %1392
      %1394 = vrot.lane.b32.xlu0 %v1321, 16
      %v1395 = vpop.permute.xlu0 %1394
      %1396 = vrot.lane.b32.xlu0 %v1322, 16
      %v1397 = vpop.permute.xlu0 %1396
      %1398 = vrot.lane.b32.xlu0 %v1323, 16
      %v1399 = vpop.permute.xlu0 %1398
      %1400 = vrot.lane.b32.xlu0 %v1324, 16
      %v1401 = vpop.permute.xlu0 %1400
      %1402 = vrot.lane.b32.xlu0 %v1325, 16
      %v1403 = vpop.permute.xlu0 %1402
      %1404 = vrot.lane.b32.xlu0 %v1326, 16
      %v1405 = vpop.permute.xlu0 %1404
      %1406 = vrot.lane.b32.xlu0 %v1327, 16
      %v1407 = vpop.permute.xlu0 %1406
      %1408 = vrot.lane.b32.xlu0 %v1328, 16
      %v1409 = vpop.permute.xlu0 %1408
      %1410 = vrot.lane.b32.xlu0 %v1329, 16
      %v1411 = vpop.permute.xlu0 %1410
      %1412 = vrot.lane.b32.xlu0 %v1330, 16
      %v1413 = vpop.permute.xlu0 %1412
      %1414 = vrot.lane.b32.xlu0 %v1331, 16
      %v1415 = vpop.permute.xlu0 %1414
      %1416 = vrot.lane.b32.xlu0 %v1332, 16
      %v1417 = vpop.permute.xlu0 %1416
      %1418 = vrot.lane.b32.xlu0 %v1333, 16
      %v1419 = vpop.permute.xlu0 %1418
      %1420 = vrot.lane.b32.xlu0 %v1334, 16
      %v1421 = vpop.permute.xlu0 %1420
      %1422 = vrot.lane.b32.xlu0 %v1335, 16
      %v1423 = vpop.permute.xlu0 %1422
      %1424 = vrot.lane.b32.xlu0 %v1336, 16
      %v1425 = vpop.permute.xlu0 %1424
      %1426 = vrot.lane.b32.xlu0 %v1337, 16
      %v1427 = vpop.permute.xlu0 %1426
      %1428 = vrot.lane.b32.xlu0 %v1338, 16
      %v1429 = vpop.permute.xlu0 %1428
      %1430 = vrot.lane.b32.xlu0 %v1339, 16
      %v1431 = vpop.permute.xlu0 %1430
      %1432 = vrot.lane.b32.xlu0 %v1340, 16
      %v1433 = vpop.permute.xlu0 %1432
      %1434 = vrot.lane.b32.xlu0 %v1341, 16
      %v1435 = vpop.permute.xlu0 %1434
      %1436 = vrot.lane.b32.xlu0 %v1342, 16
      %v1437 = vpop.permute.xlu0 %1436
      %1438 = vrot.lane.b32.xlu0 %v1343, 16
      %v1439 = vpop.permute.xlu0 %1438
      %vm1472 = vcmask 261248
      %1473 = vst.msk [vmem:[#allocation3] sm:$0xff] %vm1472, %v1377
      %1474 = vst.msk [vmem:[#allocation3 + $0x10] sm:$0xff] %vm1472, %v1379
      %1475 = vst.msk [vmem:[#allocation3 + $0x20] sm:$0xff] %vm1472, %v1381
      %1476 = vst.msk [vmem:[#allocation3 + $0x30] sm:$0xff] %vm1472, %v1383
      %1477 = vst.msk [vmem:[#allocation3 + $0x40] sm:$0xff] %vm1472, %v1385
      %1478 = vst.msk [vmem:[#allocation3 + $0x50] sm:$0xff] %vm1472, %v1387
      %1479 = vst.msk [vmem:[#allocation3 + $0x60] sm:$0xff] %vm1472, %v1389
      %1480 = vst.msk [vmem:[#allocation3 + $0x70] sm:$0xff] %vm1472, %v1391
      %1481 = vst.msk [vmem:[#allocation3 + $0x80] sm:$0xff] %vm1472, %v1393
      %1482 = vst.msk [vmem:[#allocation3 + $0x90] sm:$0xff] %vm1472, %v1395
      %1483 = vst.msk [vmem:[#allocation3 + $0xa0] sm:$0xff] %vm1472, %v1397
      %1484 = vst.msk [vmem:[#allocation3 + $0xb0] sm:$0xff] %vm1472, %v1399
      %1485 = vst.msk [vmem:[#allocation3 + $0xc0] sm:$0xff] %vm1472, %v1401
      %1486 = vst.msk [vmem:[#allocation3 + $0xd0] sm:$0xff] %vm1472, %v1403
      %1487 = vst.msk [vmem:[#allocation3 + $0xe0] sm:$0xff] %vm1472, %v1405
      %1488 = vst.msk [vmem:[#allocation3 + $0xf0] sm:$0xff] %vm1472, %v1407
      %1489 = vst.msk [vmem:[#allocation3 + $0x100] sm:$0xff] %vm1472, %v1409
      %1490 = vst.msk [vmem:[#allocation3 + $0x110] sm:$0xff] %vm1472, %v1411
      %1491 = vst.msk [vmem:[#allocation3 + $0x120] sm:$0xff] %vm1472, %v1413
      %1492 = vst.msk [vmem:[#allocation3 + $0x130] sm:$0xff] %vm1472, %v1415
      %1493 = vst.msk [vmem:[#allocation3 + $0x140] sm:$0xff] %vm1472, %v1417
      %1494 = vst.msk [vmem:[#allocation3 + $0x150] sm:$0xff] %vm1472, %v1419
      %1495 = vst.msk [vmem:[#allocation3 + $0x160] sm:$0xff] %vm1472, %v1421
      %1496 = vst.msk [vmem:[#allocation3 + $0x170] sm:$0xff] %vm1472, %v1423
      %1497 = vst.msk [vmem:[#allocation3 + $0x180] sm:$0xff] %vm1472, %v1425
      %1498 = vst.msk [vmem:[#allocation3 + $0x190] sm:$0xff] %vm1472, %v1427
      %1499 = vst.msk [vmem:[#allocation3 + $0x1a0] sm:$0xff] %vm1472, %v1429
      %1500 = vst.msk [vmem:[#allocation3 + $0x1b0] sm:$0xff] %vm1472, %v1431
      %1501 = vst.msk [vmem:[#allocation3 + $0x1c0] sm:$0xff] %vm1472, %v1433
      %1502 = vst.msk [vmem:[#allocation3 + $0x1d0] sm:$0xff] %vm1472, %v1435
      %1503 = vst.msk [vmem:[#allocation3 + $0x1e0] sm:$0xff] %vm1472, %v1437
      %1504 = vst.msk [vmem:[#allocation3 + $0x1f0] sm:$0xff] %vm1472, %v1439
      %v1505 = vld [vmem:[#allocation2 + $0x2] sm:$0xff]
      %v1506 = vld [vmem:[#allocation2 + $0xa] sm:$0xff]
      %v1507 = vld [vmem:[#allocation2 + $0x1a] sm:$0xff]
      %v1508 = vld [vmem:[#allocation2 + $0x22] sm:$0xff]
      %v1509 = vld [vmem:[#allocation2 + $0x32] sm:$0xff]
      %v1510 = vld [vmem:[#allocation2 + $0x3a] sm:$0xff]
      %v1511 = vld [vmem:[#allocation2 + $0x4a] sm:$0xff]
      %v1512 = vld [vmem:[#allocation2 + $0x52] sm:$0xff]
      %v1513 = vld [vmem:[#allocation2 + $0x62] sm:$0xff]
      %v1514 = vld [vmem:[#allocation2 + $0x6a] sm:$0xff]
      %v1515 = vld [vmem:[#allocation2 + $0x7a] sm:$0xff]
      %v1516 = vld [vmem:[#allocation2 + $0x82] sm:$0xff]
      %v1517 = vld [vmem:[#allocation2 + $0x92] sm:$0xff]
      %v1518 = vld [vmem:[#allocation2 + $0x9a] sm:$0xff]
      %v1519 = vld [vmem:[#allocation2 + $0xaa] sm:$0xff]
      %v1520 = vld [vmem:[#allocation2 + $0xb2] sm:$0xff]
      %v1521 = vld [vmem:[#allocation2 + $0xc2] sm:$0xff]
      %v1522 = vld [vmem:[#allocation2 + $0xca] sm:$0xff]
      %v1523 = vld [vmem:[#allocation2 + $0xda] sm:$0xff]
      %v1524 = vld [vmem:[#allocation2 + $0xe2] sm:$0xff]
      %v1525 = vld [vmem:[#allocation2 + $0xf2] sm:$0xff]
      %v1526 = vld [vmem:[#allocation2 + $0xfa] sm:$0xff]
      %v1527 = vld [vmem:[#allocation2 + $0x10a] sm:$0xff]
      %v1528 = vld [vmem:[#allocation2 + $0x112] sm:$0xff]
      %v1529 = vld [vmem:[#allocation2 + $0x122] sm:$0xff]
      %v1530 = vld [vmem:[#allocation2 + $0x12a] sm:$0xff]
      %v1531 = vld [vmem:[#allocation2 + $0x13a] sm:$0xff]
      %v1532 = vld [vmem:[#allocation2 + $0x142] sm:$0xff]
      %v1533 = vld [vmem:[#allocation2 + $0x152] sm:$0xff]
      %v1534 = vld [vmem:[#allocation2 + $0x15a] sm:$0xff]
      %v1535 = vld [vmem:[#allocation2 + $0x16a] sm:$0xff]
      %v1536 = vld [vmem:[#allocation2 + $0x172] sm:$0xff]
      %1569 = vrot.lane.b32.xlu0 %v1505, 32
      %v1570 = vpop.permute.xlu0 %1569
      %1571 = vrot.lane.b32.xlu0 %v1506, 32
      %v1572 = vpop.permute.xlu0 %1571
      %1573 = vrot.lane.b32.xlu0 %v1507, 32
      %v1574 = vpop.permute.xlu0 %1573
      %1575 = vrot.lane.b32.xlu0 %v1508, 32
      %v1576 = vpop.permute.xlu0 %1575
      %1577 = vrot.lane.b32.xlu0 %v1509, 32
      %v1578 = vpop.permute.xlu0 %1577
      %1579 = vrot.lane.b32.xlu0 %v1510, 32
      %v1580 = vpop.permute.xlu0 %1579
      %1581 = vrot.lane.b32.xlu0 %v1511, 32
      %v1582 = vpop.permute.xlu0 %1581
      %1583 = vrot.lane.b32.xlu0 %v1512, 32
      %v1584 = vpop.permute.xlu0 %1583
      %1585 = vrot.lane.b32.xlu0 %v1513, 32
      %v1586 = vpop.permute.xlu0 %1585
      %1587 = vrot.lane.b32.xlu0 %v1514, 32
      %v1588 = vpop.permute.xlu0 %1587
      %1589 = vrot.lane.b32.xlu0 %v1515, 32
      %v1590 = vpop.permute.xlu0 %1589
      %1591 = vrot.lane.b32.xlu0 %v1516, 32
      %v1592 = vpop.permute.xlu0 %1591
      %1593 = vrot.lane.b32.xlu0 %v1517, 32
      %v1594 = vpop.permute.xlu0 %1593
      %1595 = vrot.lane.b32.xlu0 %v1518, 32
      %v1596 = vpop.permute.xlu0 %1595
      %1597 = vrot.lane.b32.xlu0 %v1519, 32
      %v1598 = vpop.permute.xlu0 %1597
      %1599 = vrot.lane.b32.xlu0 %v1520, 32
      %v1600 = vpop.permute.xlu0 %1599
      %1601 = vrot.lane.b32.xlu0 %v1521, 32
      %v1602 = vpop.permute.xlu0 %1601
      %1603 = vrot.lane.b32.xlu0 %v1522, 32
      %v1604 = vpop.permute.xlu0 %1603
      %1605 = vrot.lane.b32.xlu0 %v1523, 32
      %v1606 = vpop.permute.xlu0 %1605
      %1607 = vrot.lane.b32.xlu0 %v1524, 32
      %v1608 = vpop.permute.xlu0 %1607
      %1609 = vrot.lane.b32.xlu0 %v1525, 32
      %v1610 = vpop.permute.xlu0 %1609
      %1611 = vrot.lane.b32.xlu0 %v1526, 32
      %v1612 = vpop.permute.xlu0 %1611
      %1613 = vrot.lane.b32.xlu0 %v1527, 32
      %v1614 = vpop.permute.xlu0 %1613
      %1615 = vrot.lane.b32.xlu0 %v1528, 32
      %v1616 = vpop.permute.xlu0 %1615
      %1617 = vrot.lane.b32.xlu0 %v1529, 32
      %v1618 = vpop.permute.xlu0 %1617
      %1619 = vrot.lane.b32.xlu0 %v1530, 32
      %v1620 = vpop.permute.xlu0 %1619
      %1621 = vrot.lane.b32.xlu0 %v1531, 32
      %v1622 = vpop.permute.xlu0 %1621
      %1623 = vrot.lane.b32.xlu0 %v1532, 32
      %v1624 = vpop.permute.xlu0 %1623
      %1625 = vrot.lane.b32.xlu0 %v1533, 32
      %v1626 = vpop.permute.xlu0 %1625
      %1627 = vrot.lane.b32.xlu0 %v1534, 32
      %v1628 = vpop.permute.xlu0 %1627
      %1629 = vrot.lane.b32.xlu0 %v1535, 32
      %v1630 = vpop.permute.xlu0 %1629
      %1631 = vrot.lane.b32.xlu0 %v1536, 32
      %v1632 = vpop.permute.xlu0 %1631
      %vm1665 = vcmask 392448
      %1666 = vst.msk [vmem:[#allocation3] sm:$0xff] %vm1665, %v1570
      %1667 = vst.msk [vmem:[#allocation3 + $0x10] sm:$0xff] %vm1665, %v1572
      %1668 = vst.msk [vmem:[#allocation3 + $0x20] sm:$0xff] %vm1665, %v1574
      %1669 = vst.msk [vmem:[#allocation3 + $0x30] sm:$0xff] %vm1665, %v1576
      %1670 = vst.msk [vmem:[#allocation3 + $0x40] sm:$0xff] %vm1665, %v1578
      %1671 = vst.msk [vmem:[#allocation3 + $0x50] sm:$0xff] %vm1665, %v1580
      %1672 = vst.msk [vmem:[#allocation3 + $0x60] sm:$0xff] %vm1665, %v1582
      %1673 = vst.msk [vmem:[#allocation3 + $0x70] sm:$0xff] %vm1665, %v1584
      %1674 = vst.msk [vmem:[#allocation3 + $0x80] sm:$0xff] %vm1665, %v1586
      %1675 = vst.msk [vmem:[#allocation3 + $0x90] sm:$0xff] %vm1665, %v1588
      %1676 = vst.msk [vmem:[#allocation3 + $0xa0] sm:$0xff] %vm1665, %v1590
      %1677 = vst.msk [vmem:[#allocation3 + $0xb0] sm:$0xff] %vm1665, %v1592
      %1678 = vst.msk [vmem:[#allocation3 + $0xc0] sm:$0xff] %vm1665, %v1594
      %1679 = vst.msk [vmem:[#allocation3 + $0xd0] sm:$0xff] %vm1665, %v1596
      %1680 = vst.msk [vmem:[#allocation3 + $0xe0] sm:$0xff] %vm1665, %v1598
      %1681 = vst.msk [vmem:[#allocation3 + $0xf0] sm:$0xff] %vm1665, %v1600
      %1682 = vst.msk [vmem:[#allocation3 + $0x100] sm:$0xff] %vm1665, %v1602
      %1683 = vst.msk [vmem:[#allocation3 + $0x110] sm:$0xff] %vm1665, %v1604
      %1684 = vst.msk [vmem:[#allocation3 + $0x120] sm:$0xff] %vm1665, %v1606
      %1685 = vst.msk [vmem:[#allocation3 + $0x130] sm:$0xff] %vm1665, %v1608
      %1686 = vst.msk [vmem:[#allocation3 + $0x140] sm:$0xff] %vm1665, %v1610
      %1687 = vst.msk [vmem:[#allocation3 + $0x150] sm:$0xff] %vm1665, %v1612
      %1688 = vst.msk [vmem:[#allocation3 + $0x160] sm:$0xff] %vm1665, %v1614
      %1689 = vst.msk [vmem:[#allocation3 + $0x170] sm:$0xff] %vm1665, %v1616
      %1690 = vst.msk [vmem:[#allocation3 + $0x180] sm:$0xff] %vm1665, %v1618
      %1691 = vst.msk [vmem:[#allocation3 + $0x190] sm:$0xff] %vm1665, %v1620
      %1692 = vst.msk [vmem:[#allocation3 + $0x1a0] sm:$0xff] %vm1665, %v1622
      %1693 = vst.msk [vmem:[#allocation3 + $0x1b0] sm:$0xff] %vm1665, %v1624
      %1694 = vst.msk [vmem:[#allocation3 + $0x1c0] sm:$0xff] %vm1665, %v1626
      %1695 = vst.msk [vmem:[#allocation3 + $0x1d0] sm:$0xff] %vm1665, %v1628
      %1696 = vst.msk [vmem:[#allocation3 + $0x1e0] sm:$0xff] %vm1665, %v1630
      %1697 = vst.msk [vmem:[#allocation3 + $0x1f0] sm:$0xff] %vm1665, %v1632
      %v1698 = vld [vmem:[%s1053] sm:$0xff]
      %v1699 = vld [vmem:[%s1053 + $0x8] sm:$0xff]
      %v1700 = vld [vmem:[%s1053 + $0x18] sm:$0xff]
      %v1701 = vld [vmem:[%s1053 + $0x20] sm:$0xff]
      %v1702 = vld [vmem:[%s1053 + $0x30] sm:$0xff]
      %v1703 = vld [vmem:[%s1053 + $0x38] sm:$0xff]
      %v1704 = vld [vmem:[%s1053 + $0x48] sm:$0xff]
      %v1705 = vld [vmem:[%s1053 + $0x50] sm:$0xff]
      %v1706 = vld [vmem:[%s1053 + $0x60] sm:$0xff]
      %v1707 = vld [vmem:[%s1053 + $0x68] sm:$0xff]
      %v1708 = vld [vmem:[%s1053 + $0x78] sm:$0xff]
      %v1709 = vld [vmem:[%s1053 + $0x80] sm:$0xff]
      %v1710 = vld [vmem:[%s1053 + $0x90] sm:$0xff]
      %v1711 = vld [vmem:[%s1053 + $0x98] sm:$0xff]
      %v1712 = vld [vmem:[%s1053 + $0xa8] sm:$0xff]
      %v1713 = vld [vmem:[%s1053 + $0xb0] sm:$0xff]
      %v1714 = vld [vmem:[%s1053 + $0xc0] sm:$0xff]
      %v1715 = vld [vmem:[%s1053 + $0xc8] sm:$0xff]
      %v1716 = vld [vmem:[%s1053 + $0xd8] sm:$0xff]
      %v1717 = vld [vmem:[%s1053 + $0xe0] sm:$0xff]
      %v1718 = vld [vmem:[%s1053 + $0xf0] sm:$0xff]
      %v1719 = vld [vmem:[%s1053 + $0xf8] sm:$0xff]
      %v1720 = vld [vmem:[%s1053 + $0x108] sm:$0xff]
      %v1721 = vld [vmem:[%s1053 + $0x110] sm:$0xff]
      %v1722 = vld [vmem:[%s1053 + $0x120] sm:$0xff]
      %v1723 = vld [vmem:[%s1053 + $0x128] sm:$0xff]
      %v1724 = vld [vmem:[%s1053 + $0x138] sm:$0xff]
      %v1725 = vld [vmem:[%s1053 + $0x140] sm:$0xff]
      %v1726 = vld [vmem:[%s1053 + $0x150] sm:$0xff]
      %v1727 = vld [vmem:[%s1053 + $0x158] sm:$0xff]
      %v1728 = vld [vmem:[%s1053 + $0x168] sm:$0xff]
      %v1729 = vld [vmem:[%s1053 + $0x170] sm:$0xff]
      %1762 = vrot.lane.b32.xlu0 %v1698, 48
      %v1763 = vpop.permute.xlu0 %1762
      %1764 = vrot.lane.b32.xlu0 %v1699, 48
      %v1765 = vpop.permute.xlu0 %1764
      %1766 = vrot.lane.b32.xlu0 %v1700, 48
      %v1767 = vpop.permute.xlu0 %1766
      %1768 = vrot.lane.b32.xlu0 %v1701, 48
      %v1769 = vpop.permute.xlu0 %1768
      %1770 = vrot.lane.b32.xlu0 %v1702, 48
      %v1771 = vpop.permute.xlu0 %1770
      %1772 = vrot.lane.b32.xlu0 %v1703, 48
      %v1773 = vpop.permute.xlu0 %1772
      %1774 = vrot.lane.b32.xlu0 %v1704, 48
      %v1775 = vpop.permute.xlu0 %1774
      %1776 = vrot.lane.b32.xlu0 %v1705, 48
      %v1777 = vpop.permute.xlu0 %1776
      %1778 = vrot.lane.b32.xlu0 %v1706, 48
      %v1779 = vpop.permute.xlu0 %1778
      %1780 = vrot.lane.b32.xlu0 %v1707, 48
      %v1781 = vpop.permute.xlu0 %1780
      %1782 = vrot.lane.b32.xlu0 %v1708, 48
      %v1783 = vpop.permute.xlu0 %1782
      %1784 = vrot.lane.b32.xlu0 %v1709, 48
      %v1785 = vpop.permute.xlu0 %1784
      %1786 = vrot.lane.b32.xlu0 %v1710, 48
      %v1787 = vpop.permute.xlu0 %1786
      %1788 = vrot.lane.b32.xlu0 %v1711, 48
      %v1789 = vpop.permute.xlu0 %1788
      %1790 = vrot.lane.b32.xlu0 %v1712, 48
      %v1791 = vpop.permute.xlu0 %1790
      %1792 = vrot.lane.b32.xlu0 %v1713, 48
      %v1793 = vpop.permute.xlu0 %1792
      %1794 = vrot.lane.b32.xlu0 %v1714, 48
      %v1795 = vpop.permute.xlu0 %1794
      %1796 = vrot.lane.b32.xlu0 %v1715, 48
      %v1797 = vpop.permute.xlu0 %1796
      %1798 = vrot.lane.b32.xlu0 %v1716, 48
      %v1799 = vpop.permute.xlu0 %1798
      %1800 = vrot.lane.b32.xlu0 %v1717, 48
      %v1801 = vpop.permute.xlu0 %1800
      %1802 = vrot.lane.b32.xlu0 %v1718, 48
      %v1803 = vpop.permute.xlu0 %1802
      %1804 = vrot.lane.b32.xlu0 %v1719, 48
      %v1805 = vpop.permute.xlu0 %1804
      %1806 = vrot.lane.b32.xlu0 %v1720, 48
      %v1807 = vpop.permute.xlu0 %1806
      %1808 = vrot.lane.b32.xlu0 %v1721, 48
      %v1809 = vpop.permute.xlu0 %1808
      %1810 = vrot.lane.b32.xlu0 %v1722, 48
      %v1811 = vpop.permute.xlu0 %1810
      %1812 = vrot.lane.b32.xlu0 %v1723, 48
      %v1813 = vpop.permute.xlu0 %1812
      %1814 = vrot.lane.b32.xlu0 %v1724, 48
      %v1815 = vpop.permute.xlu0 %1814
      %1816 = vrot.lane.b32.xlu0 %v1725, 48
      %v1817 = vpop.permute.xlu0 %1816
      %1818 = vrot.lane.b32.xlu0 %v1726, 48
      %v1819 = vpop.permute.xlu0 %1818
      %1820 = vrot.lane.b32.xlu0 %v1727, 48
      %v1821 = vpop.permute.xlu0 %1820
      %1822 = vrot.lane.b32.xlu0 %v1728, 48
      %v1823 = vpop.permute.xlu0 %1822
      %1824 = vrot.lane.b32.xlu0 %v1729, 48
      %v1825 = vpop.permute.xlu0 %1824
      %vm1858 = vcmask 523648
      %1859 = vst.msk [vmem:[#allocation3] sm:$0xff] %vm1858, %v1763
      %1860 = vst.msk [vmem:[#allocation3 + $0x10] sm:$0xff] %vm1858, %v1765
      %1861 = vst.msk [vmem:[#allocation3 + $0x20] sm:$0xff] %vm1858, %v1767
      %1862 = vst.msk [vmem:[#allocation3 + $0x30] sm:$0xff] %vm1858, %v1769
      %1863 = vst.msk [vmem:[#allocation3 + $0x40] sm:$0xff] %vm1858, %v1771
      %1864 = vst.msk [vmem:[#allocation3 + $0x50] sm:$0xff] %vm1858, %v1773
      %1865 = vst.msk [vmem:[#allocation3 + $0x60] sm:$0xff] %vm1858, %v1775
      %1866 = vst.msk [vmem:[#allocation3 + $0x70] sm:$0xff] %vm1858, %v1777
      %1867 = vst.msk [vmem:[#allocation3 + $0x80] sm:$0xff] %vm1858, %v1779
      %1868 = vst.msk [vmem:[#allocation3 + $0x90] sm:$0xff] %vm1858, %v1781
      %1869 = vst.msk [vmem:[#allocation3 + $0xa0] sm:$0xff] %vm1858, %v1783
      %1870 = vst.msk [vmem:[#allocation3 + $0xb0] sm:$0xff] %vm1858, %v1785
      %1871 = vst.msk [vmem:[#allocation3 + $0xc0] sm:$0xff] %vm1858, %v1787
      %1872 = vst.msk [vmem:[#allocation3 + $0xd0] sm:$0xff] %vm1858, %v1789
      %1873 = vst.msk [vmem:[#allocation3 + $0xe0] sm:$0xff] %vm1858, %v1791
      %1874 = vst.msk [vmem:[#allocation3 + $0xf0] sm:$0xff] %vm1858, %v1793
      %1875 = vst.msk [vmem:[#allocation3 + $0x100] sm:$0xff] %vm1858, %v1795
      %1876 = vst.msk [vmem:[#allocation3 + $0x110] sm:$0xff] %vm1858, %v1797
      %1877 = vst.msk [vmem:[#allocation3 + $0x120] sm:$0xff] %vm1858, %v1799
      %1878 = vst.msk [vmem:[#allocation3 + $0x130] sm:$0xff] %vm1858, %v1801
      %1879 = vst.msk [vmem:[#allocation3 + $0x140] sm:$0xff] %vm1858, %v1803
      %1880 = vst.msk [vmem:[#allocation3 + $0x150] sm:$0xff] %vm1858, %v1805
      %1881 = vst.msk [vmem:[#allocation3 + $0x160] sm:$0xff] %vm1858, %v1807
      %1882 = vst.msk [vmem:[#allocation3 + $0x170] sm:$0xff] %vm1858, %v1809
      %1883 = vst.msk [vmem:[#allocation3 + $0x180] sm:$0xff] %vm1858, %v1811
      %1884 = vst.msk [vmem:[#allocation3 + $0x190] sm:$0xff] %vm1858, %v1813
      %1885 = vst.msk [vmem:[#allocation3 + $0x1a0] sm:$0xff] %vm1858, %v1815
      %1886 = vst.msk [vmem:[#allocation3 + $0x1b0] sm:$0xff] %vm1858, %v1817
      %1887 = vst.msk [vmem:[#allocation3 + $0x1c0] sm:$0xff] %vm1858, %v1819
      %1888 = vst.msk [vmem:[#allocation3 + $0x1d0] sm:$0xff] %vm1858, %v1821
      %1889 = vst.msk [vmem:[#allocation3 + $0x1e0] sm:$0xff] %vm1858, %v1823
      %1890 = vst.msk [vmem:[#allocation3 + $0x1f0] sm:$0xff] %vm1858, %v1825
      %v1891 = vld [vmem:[%s1053 + $0x1] sm:$0xff]
      %v1892 = vld [vmem:[%s1053 + $0x9] sm:$0xff]
      %v1893 = vld [vmem:[%s1053 + $0x19] sm:$0xff]
      %v1894 = vld [vmem:[%s1053 + $0x21] sm:$0xff]
      %v1895 = vld [vmem:[%s1053 + $0x31] sm:$0xff]
      %v1896 = vld [vmem:[%s1053 + $0x39] sm:$0xff]
      %v1897 = vld [vmem:[%s1053 + $0x49] sm:$0xff]
      %v1898 = vld [vmem:[%s1053 + $0x51] sm:$0xff]
      %v1899 = vld [vmem:[%s1053 + $0x61] sm:$0xff]
      %v1900 = vld [vmem:[%s1053 + $0x69] sm:$0xff]
      %v1901 = vld [vmem:[%s1053 + $0x79] sm:$0xff]
      %v1902 = vld [vmem:[%s1053 + $0x81] sm:$0xff]
      %v1903 = vld [vmem:[%s1053 + $0x91] sm:$0xff]
      %v1904 = vld [vmem:[%s1053 + $0x99] sm:$0xff]
      %v1905 = vld [vmem:[%s1053 + $0xa9] sm:$0xff]
      %v1906 = vld [vmem:[%s1053 + $0xb1] sm:$0xff]
      %v1907 = vld [vmem:[%s1053 + $0xc1] sm:$0xff]
      %v1908 = vld [vmem:[%s1053 + $0xc9] sm:$0xff]
      %v1909 = vld [vmem:[%s1053 + $0xd9] sm:$0xff]
      %v1910 = vld [vmem:[%s1053 + $0xe1] sm:$0xff]
      %v1911 = vld [vmem:[%s1053 + $0xf1] sm:$0xff]
      %v1912 = vld [vmem:[%s1053 + $0xf9] sm:$0xff]
      %v1913 = vld [vmem:[%s1053 + $0x109] sm:$0xff]
      %v1914 = vld [vmem:[%s1053 + $0x111] sm:$0xff]
      %v1915 = vld [vmem:[%s1053 + $0x121] sm:$0xff]
      %v1916 = vld [vmem:[%s1053 + $0x129] sm:$0xff]
      %v1917 = vld [vmem:[%s1053 + $0x139] sm:$0xff]
      %v1918 = vld [vmem:[%s1053 + $0x141] sm:$0xff]
      %v1919 = vld [vmem:[%s1053 + $0x151] sm:$0xff]
      %v1920 = vld [vmem:[%s1053 + $0x159] sm:$0xff]
      %v1921 = vld [vmem:[%s1053 + $0x169] sm:$0xff]
      %v1922 = vld [vmem:[%s1053 + $0x171] sm:$0xff]
      %1955 = vrot.lane.b32.xlu0 %v1891, 64
      %v1956 = vpop.permute.xlu0 %1955
      %1957 = vrot.lane.b32.xlu0 %v1892, 64
      %v1958 = vpop.permute.xlu0 %1957
      %1959 = vrot.lane.b32.xlu0 %v1893, 64
      %v1960 = vpop.permute.xlu0 %1959
      %1961 = vrot.lane.b32.xlu0 %v1894, 64
      %v1962 = vpop.permute.xlu0 %1961
      %1963 = vrot.lane.b32.xlu0 %v1895, 64
      %v1964 = vpop.permute.xlu0 %1963
      %1965 = vrot.lane.b32.xlu0 %v1896, 64
      %v1966 = vpop.permute.xlu0 %1965
      %1967 = vrot.lane.b32.xlu0 %v1897, 64
      %v1968 = vpop.permute.xlu0 %1967
      %1969 = vrot.lane.b32.xlu0 %v1898, 64
      %v1970 = vpop.permute.xlu0 %1969
      %1971 = vrot.lane.b32.xlu0 %v1899, 64
      %v1972 = vpop.permute.xlu0 %1971
      %1973 = vrot.lane.b32.xlu0 %v1900, 64
      %v1974 = vpop.permute.xlu0 %1973
      %1975 = vrot.lane.b32.xlu0 %v1901, 64
      %v1976 = vpop.permute.xlu0 %1975
      %1977 = vrot.lane.b32.xlu0 %v1902, 64
      %v1978 = vpop.permute.xlu0 %1977
      %1979 = vrot.lane.b32.xlu0 %v1903, 64
      %v1980 = vpop.permute.xlu0 %1979
      %1981 = vrot.lane.b32.xlu0 %v1904, 64
      %v1982 = vpop.permute.xlu0 %1981
      %1983 = vrot.lane.b32.xlu0 %v1905, 64
      %v1984 = vpop.permute.xlu0 %1983
      %1985 = vrot.lane.b32.xlu0 %v1906, 64
      %v1986 = vpop.permute.xlu0 %1985
      %1987 = vrot.lane.b32.xlu0 %v1907, 64
      %v1988 = vpop.permute.xlu0 %1987
      %1989 = vrot.lane.b32.xlu0 %v1908, 64
      %v1990 = vpop.permute.xlu0 %1989
      %1991 = vrot.lane.b32.xlu0 %v1909, 64
      %v1992 = vpop.permute.xlu0 %1991
      %1993 = vrot.lane.b32.xlu0 %v1910, 64
      %v1994 = vpop.permute.xlu0 %1993
      %1995 = vrot.lane.b32.xlu0 %v1911, 64
      %v1996 = vpop.permute.xlu0 %1995
      %1997 = vrot.lane.b32.xlu0 %v1912, 64
      %v1998 = vpop.permute.xlu0 %1997
      %1999 = vrot.lane.b32.xlu0 %v1913, 64
      %v2000 = vpop.permute.xlu0 %1999
      %2001 = vrot.lane.b32.xlu0 %v1914, 64
      %v2002 = vpop.permute.xlu0 %2001
      %2003 = vrot.lane.b32.xlu0 %v1915, 64
      %v2004 = vpop.permute.xlu0 %2003
      %2005 = vrot.lane.b32.xlu0 %v1916, 64
      %v2006 = vpop.permute.xlu0 %2005
      %2007 = vrot.lane.b32.xlu0 %v1917, 64
      %v2008 = vpop.permute.xlu0 %2007
      %2009 = vrot.lane.b32.xlu0 %v1918, 64
      %v2010 = vpop.permute.xlu0 %2009
      %2011 = vrot.lane.b32.xlu0 %v1919, 64
      %v2012 = vpop.permute.xlu0 %2011
      %2013 = vrot.lane.b32.xlu0 %v1920, 64
      %v2014 = vpop.permute.xlu0 %2013
      %2015 = vrot.lane.b32.xlu0 %v1921, 64
      %v2016 = vpop.permute.xlu0 %2015
      %2017 = vrot.lane.b32.xlu0 %v1922, 64
      %v2018 = vpop.permute.xlu0 %2017
      %vm2051 = vcmask 654848
      %2052 = vst.msk [vmem:[#allocation3] sm:$0xff] %vm2051, %v1956
      %2053 = vst.msk [vmem:[#allocation3 + $0x10] sm:$0xff] %vm2051, %v1958
      %2054 = vst.msk [vmem:[#allocation3 + $0x20] sm:$0xff] %vm2051, %v1960
      %2055 = vst.msk [vmem:[#allocation3 + $0x30] sm:$0xff] %vm2051, %v1962
      %2056 = vst.msk [vmem:[#allocation3 + $0x40] sm:$0xff] %vm2051, %v1964
      %2057 = vst.msk [vmem:[#allocation3 + $0x50] sm:$0xff] %vm2051, %v1966
      %2058 = vst.msk [vmem:[#allocation3 + $0x60] sm:$0xff] %vm2051, %v1968
      %2059 = vst.msk [vmem:[#allocation3 + $0x70] sm:$0xff] %vm2051, %v1970
      %2060 = vst.msk [vmem:[#allocation3 + $0x80] sm:$0xff] %vm2051, %v1972
      %2061 = vst.msk [vmem:[#allocation3 + $0x90] sm:$0xff] %vm2051, %v1974
      %2062 = vst.msk [vmem:[#allocation3 + $0xa0] sm:$0xff] %vm2051, %v1976
      %2063 = vst.msk [vmem:[#allocation3 + $0xb0] sm:$0xff] %vm2051, %v1978
      %2064 = vst.msk [vmem:[#allocation3 + $0xc0] sm:$0xff] %vm2051, %v1980
      %2065 = vst.msk [vmem:[#allocation3 + $0xd0] sm:$0xff] %vm2051, %v1982
      %2066 = vst.msk [vmem:[#allocation3 + $0xe0] sm:$0xff] %vm2051, %v1984
      %2067 = vst.msk [vmem:[#allocation3 + $0xf0] sm:$0xff] %vm2051, %v1986
      %2068 = vst.msk [vmem:[#allocation3 + $0x100] sm:$0xff] %vm2051, %v1988
      %2069 = vst.msk [vmem:[#allocation3 + $0x110] sm:$0xff] %vm2051, %v1990
      %2070 = vst.msk [vmem:[#allocation3 + $0x120] sm:$0xff] %vm2051, %v1992
      %2071 = vst.msk [vmem:[#allocation3 + $0x130] sm:$0xff] %vm2051, %v1994
      %2072 = vst.msk [vmem:[#allocation3 + $0x140] sm:$0xff] %vm2051, %v1996
      %2073 = vst.msk [vmem:[#allocation3 + $0x150] sm:$0xff] %vm2051, %v1998
      %2074 = vst.msk [vmem:[#allocation3 + $0x160] sm:$0xff] %vm2051, %v2000
      %2075 = vst.msk [vmem:[#allocation3 + $0x170] sm:$0xff] %vm2051, %v2002
      %2076 = vst.msk [vmem:[#allocation3 + $0x180] sm:$0xff] %vm2051, %v2004
      %2077 = vst.msk [vmem:[#allocation3 + $0x190] sm:$0xff] %vm2051, %v2006
      %2078 = vst.msk [vmem:[#allocation3 + $0x1a0] sm:$0xff] %vm2051, %v2008
      %2079 = vst.msk [vmem:[#allocation3 + $0x1b0] sm:$0xff] %vm2051, %v2010
      %2080 = vst.msk [vmem:[#allocation3 + $0x1c0] sm:$0xff] %vm2051, %v2012
      %2081 = vst.msk [vmem:[#allocation3 + $0x1d0] sm:$0xff] %vm2051, %v2014
      %2082 = vst.msk [vmem:[#allocation3 + $0x1e0] sm:$0xff] %vm2051, %v2016
      %2083 = vst.msk [vmem:[#allocation3 + $0x1f0] sm:$0xff] %vm2051, %v2018
      %v2084 = vld [vmem:[%s1053 + $0x2] sm:$0xff]
      %v2085 = vld [vmem:[%s1053 + $0xa] sm:$0xff]
      %v2086 = vld [vmem:[%s1053 + $0x1a] sm:$0xff]
      %v2087 = vld [vmem:[%s1053 + $0x22] sm:$0xff]
      %v2088 = vld [vmem:[%s1053 + $0x32] sm:$0xff]
      %v2089 = vld [vmem:[%s1053 + $0x3a] sm:$0xff]
      %v2090 = vld [vmem:[%s1053 + $0x4a] sm:$0xff]
      %v2091 = vld [vmem:[%s1053 + $0x52] sm:$0xff]
      %v2092 = vld [vmem:[%s1053 + $0x62] sm:$0xff]
      %v2093 = vld [vmem:[%s1053 + $0x6a] sm:$0xff]
      %v2094 = vld [vmem:[%s1053 + $0x7a] sm:$0xff]
      %v2095 = vld [vmem:[%s1053 + $0x82] sm:$0xff]
      %v2096 = vld [vmem:[%s1053 + $0x92] sm:$0xff]
      %v2097 = vld [vmem:[%s1053 + $0x9a] sm:$0xff]
      %v2098 = vld [vmem:[%s1053 + $0xaa] sm:$0xff]
      %v2099 = vld [vmem:[%s1053 + $0xb2] sm:$0xff]
      %v2100 = vld [vmem:[%s1053 + $0xc2] sm:$0xff]
      %v2101 = vld [vmem:[%s1053 + $0xca] sm:$0xff]
      %v2102 = vld [vmem:[%s1053 + $0xda] sm:$0xff]
      %v2103 = vld [vmem:[%s1053 + $0xe2] sm:$0xff]
      %v2104 = vld [vmem:[%s1053 + $0xf2] sm:$0xff]
      %v2105 = vld [vmem:[%s1053 + $0xfa] sm:$0xff]
      %v2106 = vld [vmem:[%s1053 + $0x10a] sm:$0xff]
      %v2107 = vld [vmem:[%s1053 + $0x112] sm:$0xff]
      %v2108 = vld [vmem:[%s1053 + $0x122] sm:$0xff]
      %v2109 = vld [vmem:[%s1053 + $0x12a] sm:$0xff]
      %v2110 = vld [vmem:[%s1053 + $0x13a] sm:$0xff]
      %v2111 = vld [vmem:[%s1053 + $0x142] sm:$0xff]
      %v2112 = vld [vmem:[%s1053 + $0x152] sm:$0xff]
      %v2113 = vld [vmem:[%s1053 + $0x15a] sm:$0xff]
      %v2114 = vld [vmem:[%s1053 + $0x16a] sm:$0xff]
      %v2115 = vld [vmem:[%s1053 + $0x172] sm:$0xff]
      %2148 = vrot.lane.b32.xlu0 %v2084, 80
      %v2149 = vpop.permute.xlu0 %2148
      %2150 = vrot.lane.b32.xlu0 %v2085, 80
      %v2151 = vpop.permute.xlu0 %2150
      %2152 = vrot.lane.b32.xlu0 %v2086, 80
      %v2153 = vpop.permute.xlu0 %2152
      %2154 = vrot.lane.b32.xlu0 %v2087, 80
      %v2155 = vpop.permute.xlu0 %2154
      %2156 = vrot.lane.b32.xlu0 %v2088, 80
      %v2157 = vpop.permute.xlu0 %2156
      %2158 = vrot.lane.b32.xlu0 %v2089, 80
      %v2159 = vpop.permute.xlu0 %2158
      %2160 = vrot.lane.b32.xlu0 %v2090, 80
      %v2161 = vpop.permute.xlu0 %2160
      %2162 = vrot.lane.b32.xlu0 %v2091, 80
      %v2163 = vpop.permute.xlu0 %2162
      %2164 = vrot.lane.b32.xlu0 %v2092, 80
      %v2165 = vpop.permute.xlu0 %2164
      %2166 = vrot.lane.b32.xlu0 %v2093, 80
      %v2167 = vpop.permute.xlu0 %2166
      %2168 = vrot.lane.b32.xlu0 %v2094, 80
      %v2169 = vpop.permute.xlu0 %2168
      %2170 = vrot.lane.b32.xlu0 %v2095, 80
      %v2171 = vpop.permute.xlu0 %2170
      %2172 = vrot.lane.b32.xlu0 %v2096, 80
      %v2173 = vpop.permute.xlu0 %2172
      %2174 = vrot.lane.b32.xlu0 %v2097, 80
      %v2175 = vpop.permute.xlu0 %2174
      %2176 = vrot.lane.b32.xlu0 %v2098, 80
      %v2177 = vpop.permute.xlu0 %2176
      %2178 = vrot.lane.b32.xlu0 %v2099, 80
      %v2179 = vpop.permute.xlu0 %2178
      %2180 = vrot.lane.b32.xlu0 %v2100, 80
      %v2181 = vpop.permute.xlu0 %2180
      %2182 = vrot.lane.b32.xlu0 %v2101, 80
      %v2183 = vpop.permute.xlu0 %2182
      %2184 = vrot.lane.b32.xlu0 %v2102, 80
      %v2185 = vpop.permute.xlu0 %2184
      %2186 = vrot.lane.b32.xlu0 %v2103, 80
      %v2187 = vpop.permute.xlu0 %2186
      %2188 = vrot.lane.b32.xlu0 %v2104, 80
      %v2189 = vpop.permute.xlu0 %2188
      %2190 = vrot.lane.b32.xlu0 %v2105, 80
      %v2191 = vpop.permute.xlu0 %2190
      %2192 = vrot.lane.b32.xlu0 %v2106, 80
      %v2193 = vpop.permute.xlu0 %2192
      %2194 = vrot.lane.b32.xlu0 %v2107, 80
      %v2195 = vpop.permute.xlu0 %2194
      %2196 = vrot.lane.b32.xlu0 %v2108, 80
      %v2197 = vpop.permute.xlu0 %2196
      %2198 = vrot.lane.b32.xlu0 %v2109, 80
      %v2199 = vpop.permute.xlu0 %2198
      %2200 = vrot.lane.b32.xlu0 %v2110, 80
      %v2201 = vpop.permute.xlu0 %2200
      %2202 = vrot.lane.b32.xlu0 %v2111, 80
      %v2203 = vpop.permute.xlu0 %2202
      %2204 = vrot.lane.b32.xlu0 %v2112, 80
      %v2205 = vpop.permute.xlu0 %2204
      %2206 = vrot.lane.b32.xlu0 %v2113, 80
      %v2207 = vpop.permute.xlu0 %2206
      %2208 = vrot.lane.b32.xlu0 %v2114, 80
      %v2209 = vpop.permute.xlu0 %2208
      %2210 = vrot.lane.b32.xlu0 %v2115, 80
      %v2211 = vpop.permute.xlu0 %2210
      %vm2244 = vcmask 786048
      %2245 = vst.msk [vmem:[#allocation3] sm:$0xff] %vm2244, %v2149
      %2246 = vst.msk [vmem:[#allocation3 + $0x10] sm:$0xff] %vm2244, %v2151
      %2247 = vst.msk [vmem:[#allocation3 + $0x20] sm:$0xff] %vm2244, %v2153
      %2248 = vst.msk [vmem:[#allocation3 + $0x30] sm:$0xff] %vm2244, %v2155
      %2249 = vst.msk [vmem:[#allocation3 + $0x40] sm:$0xff] %vm2244, %v2157
      %2250 = vst.msk [vmem:[#allocation3 + $0x50] sm:$0xff] %vm2244, %v2159
      %2251 = vst.msk [vmem:[#allocation3 + $0x60] sm:$0xff] %vm2244, %v2161
      %2252 = vst.msk [vmem:[#allocation3 + $0x70] sm:$0xff] %vm2244, %v2163
      %2253 = vst.msk [vmem:[#allocation3 + $0x80] sm:$0xff] %vm2244, %v2165
      %2254 = vst.msk [vmem:[#allocation3 + $0x90] sm:$0xff] %vm2244, %v2167
      %2255 = vst.msk [vmem:[#allocation3 + $0xa0] sm:$0xff] %vm2244, %v2169
      %2256 = vst.msk [vmem:[#allocation3 + $0xb0] sm:$0xff] %vm2244, %v2171
      %2257 = vst.msk [vmem:[#allocation3 + $0xc0] sm:$0xff] %vm2244, %v2173
      %2258 = vst.msk [vmem:[#allocation3 + $0xd0] sm:$0xff] %vm2244, %v2175
      %2259 = vst.msk [vmem:[#allocation3 + $0xe0] sm:$0xff] %vm2244, %v2177
      %2260 = vst.msk [vmem:[#allocation3 + $0xf0] sm:$0xff] %vm2244, %v2179
      %2261 = vst.msk [vmem:[#allocation3 + $0x100] sm:$0xff] %vm2244, %v2181
      %2262 = vst.msk [vmem:[#allocation3 + $0x110] sm:$0xff] %vm2244, %v2183
      %2263 = vst.msk [vmem:[#allocation3 + $0x120] sm:$0xff] %vm2244, %v2185
      %2264 = vst.msk [vmem:[#allocation3 + $0x130] sm:$0xff] %vm2244, %v2187
      %2265 = vst.msk [vmem:[#allocation3 + $0x140] sm:$0xff] %vm2244, %v2189
      %2266 = vst.msk [vmem:[#allocation3 + $0x150] sm:$0xff] %vm2244, %v2191
      %2267 = vst.msk [vmem:[#allocation3 + $0x160] sm:$0xff] %vm2244, %v2193
      %2268 = vst.msk [vmem:[#allocation3 + $0x170] sm:$0xff] %vm2244, %v2195
      %2269 = vst.msk [vmem:[#allocation3 + $0x180] sm:$0xff] %vm2244, %v2197
      %2270 = vst.msk [vmem:[#allocation3 + $0x190] sm:$0xff] %vm2244, %v2199
      %2271 = vst.msk [vmem:[#allocation3 + $0x1a0] sm:$0xff] %vm2244, %v2201
      %2272 = vst.msk [vmem:[#allocation3 + $0x1b0] sm:$0xff] %vm2244, %v2203
      %2273 = vst.msk [vmem:[#allocation3 + $0x1c0] sm:$0xff] %vm2244, %v2205
      %2274 = vst.msk [vmem:[#allocation3 + $0x1d0] sm:$0xff] %vm2244, %v2207
      %2275 = vst.msk [vmem:[#allocation3 + $0x1e0] sm:$0xff] %vm2244, %v2209
      %2276 = vst.msk [vmem:[#allocation3 + $0x1f0] sm:$0xff] %vm2244, %v2211
      %s2277 = scalar_lea.vmem [#allocation2], 48
      %v2278 = vld [vmem:[%s2277] sm:$0xff]
      %v2279 = vld [vmem:[%s2277 + $0x8] sm:$0xff]
      %v2280 = vld [vmem:[%s2277 + $0x18] sm:$0xff]
      %v2281 = vld [vmem:[%s2277 + $0x20] sm:$0xff]
      %v2282 = vld [vmem:[%s2277 + $0x30] sm:$0xff]
      %v2283 = vld [vmem:[%s2277 + $0x38] sm:$0xff]
      %v2284 = vld [vmem:[%s2277 + $0x48] sm:$0xff]
      %v2285 = vld [vmem:[%s2277 + $0x50] sm:$0xff]
      %v2286 = vld [vmem:[%s2277 + $0x60] sm:$0xff]
      %v2287 = vld [vmem:[%s2277 + $0x68] sm:$0xff]
      %v2288 = vld [vmem:[%s2277 + $0x78] sm:$0xff]
      %v2289 = vld [vmem:[%s2277 + $0x80] sm:$0xff]
      %v2290 = vld [vmem:[%s2277 + $0x90] sm:$0xff]
      %v2291 = vld [vmem:[%s2277 + $0x98] sm:$0xff]
      %v2292 = vld [vmem:[%s2277 + $0xa8] sm:$0xff]
      %v2293 = vld [vmem:[%s2277 + $0xb0] sm:$0xff]
      %v2294 = vld [vmem:[%s2277 + $0xc0] sm:$0xff]
      %v2295 = vld [vmem:[%s2277 + $0xc8] sm:$0xff]
      %v2296 = vld [vmem:[%s2277 + $0xd8] sm:$0xff]
      %v2297 = vld [vmem:[%s2277 + $0xe0] sm:$0xff]
      %v2298 = vld [vmem:[%s2277 + $0xf0] sm:$0xff]
      %v2299 = vld [vmem:[%s2277 + $0xf8] sm:$0xff]
      %v2300 = vld [vmem:[%s2277 + $0x108] sm:$0xff]
      %v2301 = vld [vmem:[%s2277 + $0x110] sm:$0xff]
      %v2302 = vld [vmem:[%s2277 + $0x120] sm:$0xff]
      %v2303 = vld [vmem:[%s2277 + $0x128] sm:$0xff]
      %v2304 = vld [vmem:[%s2277 + $0x138] sm:$0xff]
      %v2305 = vld [vmem:[%s2277 + $0x140] sm:$0xff]
      %v2306 = vld [vmem:[%s2277 + $0x150] sm:$0xff]
      %v2307 = vld [vmem:[%s2277 + $0x158] sm:$0xff]
      %v2308 = vld [vmem:[%s2277 + $0x168] sm:$0xff]
      %v2309 = vld [vmem:[%s2277 + $0x170] sm:$0xff]
      %2342 = vrot.lane.b32.xlu0 %v2278, 96
      %v2343 = vpop.permute.xlu0 %2342
      %2344 = vrot.lane.b32.xlu0 %v2279, 96
      %v2345 = vpop.permute.xlu0 %2344
      %2346 = vrot.lane.b32.xlu0 %v2280, 96
      %v2347 = vpop.permute.xlu0 %2346
      %2348 = vrot.lane.b32.xlu0 %v2281, 96
      %v2349 = vpop.permute.xlu0 %2348
      %2350 = vrot.lane.b32.xlu0 %v2282, 96
      %v2351 = vpop.permute.xlu0 %2350
      %2352 = vrot.lane.b32.xlu0 %v2283, 96
      %v2353 = vpop.permute.xlu0 %2352
      %2354 = vrot.lane.b32.xlu0 %v2284, 96
      %v2355 = vpop.permute.xlu0 %2354
      %2356 = vrot.lane.b32.xlu0 %v2285, 96
      %v2357 = vpop.permute.xlu0 %2356
      %2358 = vrot.lane.b32.xlu0 %v2286, 96
      %v2359 = vpop.permute.xlu0 %2358
      %2360 = vrot.lane.b32.xlu0 %v2287, 96
      %v2361 = vpop.permute.xlu0 %2360
      %2362 = vrot.lane.b32.xlu0 %v2288, 96
      %v2363 = vpop.permute.xlu0 %2362
      %2364 = vrot.lane.b32.xlu0 %v2289, 96
      %v2365 = vpop.permute.xlu0 %2364
      %2366 = vrot.lane.b32.xlu0 %v2290, 96
      %v2367 = vpop.permute.xlu0 %2366
      %2368 = vrot.lane.b32.xlu0 %v2291, 96
      %v2369 = vpop.permute.xlu0 %2368
      %2370 = vrot.lane.b32.xlu0 %v2292, 96
      %v2371 = vpop.permute.xlu0 %2370
      %2372 = vrot.lane.b32.xlu0 %v2293, 96
      %v2373 = vpop.permute.xlu0 %2372
      %2374 = vrot.lane.b32.xlu0 %v2294, 96
      %v2375 = vpop.permute.xlu0 %2374
      %2376 = vrot.lane.b32.xlu0 %v2295, 96
      %v2377 = vpop.permute.xlu0 %2376
      %2378 = vrot.lane.b32.xlu0 %v2296, 96
      %v2379 = vpop.permute.xlu0 %2378
      %2380 = vrot.lane.b32.xlu0 %v2297, 96
      %v2381 = vpop.permute.xlu0 %2380
      %2382 = vrot.lane.b32.xlu0 %v2298, 96
      %v2383 = vpop.permute.xlu0 %2382
      %2384 = vrot.lane.b32.xlu0 %v2299, 96
      %v2385 = vpop.permute.xlu0 %2384
      %2386 = vrot.lane.b32.xlu0 %v2300, 96
      %v2387 = vpop.permute.xlu0 %2386
      %2388 = vrot.lane.b32.xlu0 %v2301, 96
      %v2389 = vpop.permute.xlu0 %2388
      %2390 = vrot.lane.b32.xlu0 %v2302, 96
      %v2391 = vpop.permute.xlu0 %2390
      %2392 = vrot.lane.b32.xlu0 %v2303, 96
      %v2393 = vpop.permute.xlu0 %2392
      %2394 = vrot.lane.b32.xlu0 %v2304, 96
      %v2395 = vpop.permute.xlu0 %2394
      %2396 = vrot.lane.b32.xlu0 %v2305, 96
      %v2397 = vpop.permute.xlu0 %2396
      %2398 = vrot.lane.b32.xlu0 %v2306, 96
      %v2399 = vpop.permute.xlu0 %2398
      %2400 = vrot.lane.b32.xlu0 %v2307, 96
      %v2401 = vpop.permute.xlu0 %2400
      %2402 = vrot.lane.b32.xlu0 %v2308, 96
      %v2403 = vpop.permute.xlu0 %2402
      %2404 = vrot.lane.b32.xlu0 %v2309, 96
      %v2405 = vpop.permute.xlu0 %2404
      %vm2438 = vcmask 917248
      %2439 = vst.msk [vmem:[#allocation3] sm:$0xff] %vm2438, %v2343
      %2440 = vst.msk [vmem:[#allocation3 + $0x10] sm:$0xff] %vm2438, %v2345
      %2441 = vst.msk [vmem:[#allocation3 + $0x20] sm:$0xff] %vm2438, %v2347
      %2442 = vst.msk [vmem:[#allocation3 + $0x30] sm:$0xff] %vm2438, %v2349
      %2443 = vst.msk [vmem:[#allocation3 + $0x40] sm:$0xff] %vm2438, %v2351
      %2444 = vst.msk [vmem:[#allocation3 + $0x50] sm:$0xff] %vm2438, %v2353
      %2445 = vst.msk [vmem:[#allocation3 + $0x60] sm:$0xff] %vm2438, %v2355
      %2446 = vst.msk [vmem:[#allocation3 + $0x70] sm:$0xff] %vm2438, %v2357
      %2447 = vst.msk [vmem:[#allocation3 + $0x80] sm:$0xff] %vm2438, %v2359
      %2448 = vst.msk [vmem:[#allocation3 + $0x90] sm:$0xff] %vm2438, %v2361
      %2449 = vst.msk [vmem:[#allocation3 + $0xa0] sm:$0xff] %vm2438, %v2363
      %2450 = vst.msk [vmem:[#allocation3 + $0xb0] sm:$0xff] %vm2438, %v2365
      %2451 = vst.msk [vmem:[#allocation3 + $0xc0] sm:$0xff] %vm2438, %v2367
      %2452 = vst.msk [vmem:[#allocation3 + $0xd0] sm:$0xff] %vm2438, %v2369
      %2453 = vst.msk [vmem:[#allocation3 + $0xe0] sm:$0xff] %vm2438, %v2371
      %2454 = vst.msk [vmem:[#allocation3 + $0xf0] sm:$0xff] %vm2438, %v2373
      %2455 = vst.msk [vmem:[#allocation3 + $0x100] sm:$0xff] %vm2438, %v2375
      %2456 = vst.msk [vmem:[#allocation3 + $0x110] sm:$0xff] %vm2438, %v2377
      %2457 = vst.msk [vmem:[#allocation3 + $0x120] sm:$0xff] %vm2438, %v2379
      %2458 = vst.msk [vmem:[#allocation3 + $0x130] sm:$0xff] %vm2438, %v2381
      %2459 = vst.msk [vmem:[#allocation3 + $0x140] sm:$0xff] %vm2438, %v2383
      %2460 = vst.msk [vmem:[#allocation3 + $0x150] sm:$0xff] %vm2438, %v2385
      %2461 = vst.msk [vmem:[#allocation3 + $0x160] sm:$0xff] %vm2438, %v2387
      %2462 = vst.msk [vmem:[#allocation3 + $0x170] sm:$0xff] %vm2438, %v2389
      %2463 = vst.msk [vmem:[#allocation3 + $0x180] sm:$0xff] %vm2438, %v2391
      %2464 = vst.msk [vmem:[#allocation3 + $0x190] sm:$0xff] %vm2438, %v2393
      %2465 = vst.msk [vmem:[#allocation3 + $0x1a0] sm:$0xff] %vm2438, %v2395
      %2466 = vst.msk [vmem:[#allocation3 + $0x1b0] sm:$0xff] %vm2438, %v2397
      %2467 = vst.msk [vmem:[#allocation3 + $0x1c0] sm:$0xff] %vm2438, %v2399
      %2468 = vst.msk [vmem:[#allocation3 + $0x1d0] sm:$0xff] %vm2438, %v2401
      %2469 = vst.msk [vmem:[#allocation3 + $0x1e0] sm:$0xff] %vm2438, %v2403
      %2470 = vst.msk [vmem:[#allocation3 + $0x1f0] sm:$0xff] %vm2438, %v2405
      %v2471 = vld [vmem:[%s2277 + $0x1] sm:$0xff]
      %v2472 = vld [vmem:[%s2277 + $0x9] sm:$0xff]
      %v2473 = vld [vmem:[%s2277 + $0x19] sm:$0xff]
      %v2474 = vld [vmem:[%s2277 + $0x21] sm:$0xff]
      %v2475 = vld [vmem:[%s2277 + $0x31] sm:$0xff]
      %v2476 = vld [vmem:[%s2277 + $0x39] sm:$0xff]
      %v2477 = vld [vmem:[%s2277 + $0x49] sm:$0xff]
      %v2478 = vld [vmem:[%s2277 + $0x51] sm:$0xff]
      %v2479 = vld [vmem:[%s2277 + $0x61] sm:$0xff]
      %v2480 = vld [vmem:[%s2277 + $0x69] sm:$0xff]
      %v2481 = vld [vmem:[%s2277 + $0x79] sm:$0xff]
      %v2482 = vld [vmem:[%s2277 + $0x81] sm:$0xff]
      %v2483 = vld [vmem:[%s2277 + $0x91] sm:$0xff]
      %v2484 = vld [vmem:[%s2277 + $0x99] sm:$0xff]
      %v2485 = vld [vmem:[%s2277 + $0xa9] sm:$0xff]
      %v2486 = vld [vmem:[%s2277 + $0xb1] sm:$0xff]
      %v2487 = vld [vmem:[%s2277 + $0xc1] sm:$0xff]
      %v2488 = vld [vmem:[%s2277 + $0xc9] sm:$0xff]
      %v2489 = vld [vmem:[%s2277 + $0xd9] sm:$0xff]
      %v2490 = vld [vmem:[%s2277 + $0xe1] sm:$0xff]
      %v2491 = vld [vmem:[%s2277 + $0xf1] sm:$0xff]
      %v2492 = vld [vmem:[%s2277 + $0xf9] sm:$0xff]
      %v2493 = vld [vmem:[%s2277 + $0x109] sm:$0xff]
      %v2494 = vld [vmem:[%s2277 + $0x111] sm:$0xff]
      %v2495 = vld [vmem:[%s2277 + $0x121] sm:$0xff]
      %v2496 = vld [vmem:[%s2277 + $0x129] sm:$0xff]
      %v2497 = vld [vmem:[%s2277 + $0x139] sm:$0xff]
      %v2498 = vld [vmem:[%s2277 + $0x141] sm:$0xff]
      %v2499 = vld [vmem:[%s2277 + $0x151] sm:$0xff]
      %v2500 = vld [vmem:[%s2277 + $0x159] sm:$0xff]
      %v2501 = vld [vmem:[%s2277 + $0x169] sm:$0xff]
      %v2502 = vld [vmem:[%s2277 + $0x171] sm:$0xff]
      %2535 = vrot.lane.b32.xlu0 %v2471, 112
      %v2536 = vpop.permute.xlu0 %2535
      %2537 = vrot.lane.b32.xlu0 %v2472, 112
      %v2538 = vpop.permute.xlu0 %2537
      %2539 = vrot.lane.b32.xlu0 %v2473, 112
      %v2540 = vpop.permute.xlu0 %2539
      %2541 = vrot.lane.b32.xlu0 %v2474, 112
      %v2542 = vpop.permute.xlu0 %2541
      %2543 = vrot.lane.b32.xlu0 %v2475, 112
      %v2544 = vpop.permute.xlu0 %2543
      %2545 = vrot.lane.b32.xlu0 %v2476, 112
      %v2546 = vpop.permute.xlu0 %2545
      %2547 = vrot.lane.b32.xlu0 %v2477, 112
      %v2548 = vpop.permute.xlu0 %2547
      %2549 = vrot.lane.b32.xlu0 %v2478, 112
      %v2550 = vpop.permute.xlu0 %2549
      %2551 = vrot.lane.b32.xlu0 %v2479, 112
      %v2552 = vpop.permute.xlu0 %2551
      %2553 = vrot.lane.b32.xlu0 %v2480, 112
      %v2554 = vpop.permute.xlu0 %2553
      %2555 = vrot.lane.b32.xlu0 %v2481, 112
      %v2556 = vpop.permute.xlu0 %2555
      %2557 = vrot.lane.b32.xlu0 %v2482, 112
      %v2558 = vpop.permute.xlu0 %2557
      %2559 = vrot.lane.b32.xlu0 %v2483, 112
      %v2560 = vpop.permute.xlu0 %2559
      %2561 = vrot.lane.b32.xlu0 %v2484, 112
      %v2562 = vpop.permute.xlu0 %2561
      %2563 = vrot.lane.b32.xlu0 %v2485, 112
      %v2564 = vpop.permute.xlu0 %2563
      %2565 = vrot.lane.b32.xlu0 %v2486, 112
      %v2566 = vpop.permute.xlu0 %2565
      %2567 = vrot.lane.b32.xlu0 %v2487, 112
      %v2568 = vpop.permute.xlu0 %2567
      %2569 = vrot.lane.b32.xlu0 %v2488, 112
      %v2570 = vpop.permute.xlu0 %2569
      %2571 = vrot.lane.b32.xlu0 %v2489, 112
      %v2572 = vpop.permute.xlu0 %2571
      %2573 = vrot.lane.b32.xlu0 %v2490, 112
      %v2574 = vpop.permute.xlu0 %2573
      %2575 = vrot.lane.b32.xlu0 %v2491, 112
      %v2576 = vpop.permute.xlu0 %2575
      %2577 = vrot.lane.b32.xlu0 %v2492, 112
      %v2578 = vpop.permute.xlu0 %2577
      %2579 = vrot.lane.b32.xlu0 %v2493, 112
      %v2580 = vpop.permute.xlu0 %2579
      %2581 = vrot.lane.b32.xlu0 %v2494, 112
      %v2582 = vpop.permute.xlu0 %2581
      %2583 = vrot.lane.b32.xlu0 %v2495, 112
      %v2584 = vpop.permute.xlu0 %2583
      %2585 = vrot.lane.b32.xlu0 %v2496, 112
      %v2586 = vpop.permute.xlu0 %2585
      %2587 = vrot.lane.b32.xlu0 %v2497, 112
      %v2588 = vpop.permute.xlu0 %2587
      %2589 = vrot.lane.b32.xlu0 %v2498, 112
      %v2590 = vpop.permute.xlu0 %2589
      %2591 = vrot.lane.b32.xlu0 %v2499, 112
      %v2592 = vpop.permute.xlu0 %2591
      %2593 = vrot.lane.b32.xlu0 %v2500, 112
      %v2594 = vpop.permute.xlu0 %2593
      %2595 = vrot.lane.b32.xlu0 %v2501, 112
      %v2596 = vpop.permute.xlu0 %2595
      %2597 = vrot.lane.b32.xlu0 %v2502, 112
      %v2598 = vpop.permute.xlu0 %2597
      %vm2631 = vcmask 1048448
      %2632 = vst.msk [vmem:[#allocation3] sm:$0xff] %vm2631, %v2536
      %2633 = vst.msk [vmem:[#allocation3 + $0x10] sm:$0xff] %vm2631, %v2538
      %2634 = vst.msk [vmem:[#allocation3 + $0x20] sm:$0xff] %vm2631, %v2540
      %2635 = vst.msk [vmem:[#allocation3 + $0x30] sm:$0xff] %vm2631, %v2542
      %2636 = vst.msk [vmem:[#allocation3 + $0x40] sm:$0xff] %vm2631, %v2544
      %2637 = vst.msk [vmem:[#allocation3 + $0x50] sm:$0xff] %vm2631, %v2546
      %2638 = vst.msk [vmem:[#allocation3 + $0x60] sm:$0xff] %vm2631, %v2548
      %2639 = vst.msk [vmem:[#allocation3 + $0x70] sm:$0xff] %vm2631, %v2550
      %2640 = vst.msk [vmem:[#allocation3 + $0x80] sm:$0xff] %vm2631, %v2552
      %2641 = vst.msk [vmem:[#allocation3 + $0x90] sm:$0xff] %vm2631, %v2554
      %2642 = vst.msk [vmem:[#allocation3 + $0xa0] sm:$0xff] %vm2631, %v2556
      %2643 = vst.msk [vmem:[#allocation3 + $0xb0] sm:$0xff] %vm2631, %v2558
      %2644 = vst.msk [vmem:[#allocation3 + $0xc0] sm:$0xff] %vm2631, %v2560
      %2645 = vst.msk [vmem:[#allocation3 + $0xd0] sm:$0xff] %vm2631, %v2562
      %2646 = vst.msk [vmem:[#allocation3 + $0xe0] sm:$0xff] %vm2631, %v2564
      %2647 = vst.msk [vmem:[#allocation3 + $0xf0] sm:$0xff] %vm2631, %v2566
      %2648 = vst.msk [vmem:[#allocation3 + $0x100] sm:$0xff] %vm2631, %v2568
      %2649 = vst.msk [vmem:[#allocation3 + $0x110] sm:$0xff] %vm2631, %v2570
      %2650 = vst.msk [vmem:[#allocation3 + $0x120] sm:$0xff] %vm2631, %v2572
      %2651 = vst.msk [vmem:[#allocation3 + $0x130] sm:$0xff] %vm2631, %v2574
      %2652 = vst.msk [vmem:[#allocation3 + $0x140] sm:$0xff] %vm2631, %v2576
      %2653 = vst.msk [vmem:[#allocation3 + $0x150] sm:$0xff] %vm2631, %v2578
      %2654 = vst.msk [vmem:[#allocation3 + $0x160] sm:$0xff] %vm2631, %v2580
      %2655 = vst.msk [vmem:[#allocation3 + $0x170] sm:$0xff] %vm2631, %v2582
      %2656 = vst.msk [vmem:[#allocation3 + $0x180] sm:$0xff] %vm2631, %v2584
      %2657 = vst.msk [vmem:[#allocation3 + $0x190] sm:$0xff] %vm2631, %v2586
      %2658 = vst.msk [vmem:[#allocation3 + $0x1a0] sm:$0xff] %vm2631, %v2588
      %2659 = vst.msk [vmem:[#allocation3 + $0x1b0] sm:$0xff] %vm2631, %v2590
      %2660 = vst.msk [vmem:[#allocation3 + $0x1c0] sm:$0xff] %vm2631, %v2592
      %2661 = vst.msk [vmem:[#allocation3 + $0x1d0] sm:$0xff] %vm2631, %v2594
      %2662 = vst.msk [vmem:[#allocation3 + $0x1e0] sm:$0xff] %vm2631, %v2596
      %2663 = vst.msk [vmem:[#allocation3 + $0x1f0] sm:$0xff] %vm2631, %v2598
      %v2664 = vld [vmem:[%s2277 + $0x2] sm:$0xff]
      %v2665 = vld [vmem:[%s2277 + $0xa] sm:$0xff]
      %v2666 = vld [vmem:[%s2277 + $0x1a] sm:$0xff]
      %v2667 = vld [vmem:[%s2277 + $0x22] sm:$0xff]
      %v2668 = vld [vmem:[%s2277 + $0x32] sm:$0xff]
      %v2669 = vld [vmem:[%s2277 + $0x3a] sm:$0xff]
      %v2670 = vld [vmem:[%s2277 + $0x4a] sm:$0xff]
      %v2671 = vld [vmem:[%s2277 + $0x52] sm:$0xff]
      %v2672 = vld [vmem:[%s2277 + $0x62] sm:$0xff]
      %v2673 = vld [vmem:[%s2277 + $0x6a] sm:$0xff]
      %v2674 = vld [vmem:[%s2277 + $0x7a] sm:$0xff]
      %v2675 = vld [vmem:[%s2277 + $0x82] sm:$0xff]
      %v2676 = vld [vmem:[%s2277 + $0x92] sm:$0xff]
      %v2677 = vld [vmem:[%s2277 + $0x9a] sm:$0xff]
      %v2678 = vld [vmem:[%s2277 + $0xaa] sm:$0xff]
      %v2679 = vld [vmem:[%s2277 + $0xb2] sm:$0xff]
      %v2680 = vld [vmem:[%s2277 + $0xc2] sm:$0xff]
      %v2681 = vld [vmem:[%s2277 + $0xca] sm:$0xff]
      %v2682 = vld [vmem:[%s2277 + $0xda] sm:$0xff]
      %v2683 = vld [vmem:[%s2277 + $0xe2] sm:$0xff]
      %v2684 = vld [vmem:[%s2277 + $0xf2] sm:$0xff]
      %v2685 = vld [vmem:[%s2277 + $0xfa] sm:$0xff]
      %v2686 = vld [vmem:[%s2277 + $0x10a] sm:$0xff]
      %v2687 = vld [vmem:[%s2277 + $0x112] sm:$0xff]
      %v2688 = vld [vmem:[%s2277 + $0x122] sm:$0xff]
      %v2689 = vld [vmem:[%s2277 + $0x12a] sm:$0xff]
      %v2690 = vld [vmem:[%s2277 + $0x13a] sm:$0xff]
      %v2691 = vld [vmem:[%s2277 + $0x142] sm:$0xff]
      %v2692 = vld [vmem:[%s2277 + $0x152] sm:$0xff]
      %v2693 = vld [vmem:[%s2277 + $0x15a] sm:$0xff]
      %v2694 = vld [vmem:[%s2277 + $0x16a] sm:$0xff]
      %v2695 = vld [vmem:[%s2277 + $0x172] sm:$0xff]
      %2696 = vst.msk [vmem:[#allocation3 + $0x8] sm:$0xff] %vm444, %v2664
      %2697 = vst.msk [vmem:[#allocation3 + $0x18] sm:$0xff] %vm444, %v2665
      %2698 = vst.msk [vmem:[#allocation3 + $0x28] sm:$0xff] %vm444, %v2666
      %2699 = vst.msk [vmem:[#allocation3 + $0x38] sm:$0xff] %vm444, %v2667
      %2700 = vst.msk [vmem:[#allocation3 + $0x48] sm:$0xff] %vm444, %v2668
      %2701 = vst.msk [vmem:[#allocation3 + $0x58] sm:$0xff] %vm444, %v2669
      %2702 = vst.msk [vmem:[#allocation3 + $0x68] sm:$0xff] %vm444, %v2670
      %2703 = vst.msk [vmem:[#allocation3 + $0x78] sm:$0xff] %vm444, %v2671
      %2704 = vst.msk [vmem:[#allocation3 + $0x88] sm:$0xff] %vm444, %v2672
      %2705 = vst.msk [vmem:[#allocation3 + $0x98] sm:$0xff] %vm444, %v2673
      %2706 = vst.msk [vmem:[#allocation3 + $0xa8] sm:$0xff] %vm444, %v2674
      %2707 = vst.msk [vmem:[#allocation3 + $0xb8] sm:$0xff] %vm444, %v2675
      %2708 = vst.msk [vmem:[#allocation3 + $0xc8] sm:$0xff] %vm444, %v2676
      %2709 = vst.msk [vmem:[#allocation3 + $0xd8] sm:$0xff] %vm444, %v2677
      %2710 = vst.msk [vmem:[#allocation3 + $0xe8] sm:$0xff] %vm444, %v2678
      %2711 = vst.msk [vmem:[#allocation3 + $0xf8] sm:$0xff] %vm444, %v2679
      %2712 = vst.msk [vmem:[#allocation3 + $0x108] sm:$0xff] %vm444, %v2680
      %2713 = vst.msk [vmem:[#allocation3 + $0x118] sm:$0xff] %vm444, %v2681
      %2714 = vst.msk [vmem:[#allocation3 + $0x128] sm:$0xff] %vm444, %v2682
      %2715 = vst.msk [vmem:[#allocation3 + $0x138] sm:$0xff] %vm444, %v2683
      %2716 = vst.msk [vmem:[#allocation3 + $0x148] sm:$0xff] %vm444, %v2684
      %2717 = vst.msk [vmem:[#allocation3 + $0x158] sm:$0xff] %vm444, %v2685
      %2718 = vst.msk [vmem:[#allocation3 + $0x168] sm:$0xff] %vm444, %v2686
      %2719 = vst.msk [vmem:[#allocation3 + $0x178] sm:$0xff] %vm444, %v2687
      %2720 = vst.msk [vmem:[#allocation3 + $0x188] sm:$0xff] %vm444, %v2688
      %2721 = vst.msk [vmem:[#allocation3 + $0x198] sm:$0xff] %vm444, %v2689
      %2722 = vst.msk [vmem:[#allocation3 + $0x1a8] sm:$0xff] %vm444, %v2690
      %2723 = vst.msk [vmem:[#allocation3 + $0x1b8] sm:$0xff] %vm444, %v2691
      %2724 = vst.msk [vmem:[#allocation3 + $0x1c8] sm:$0xff] %vm444, %v2692
      %2725 = vst.msk [vmem:[#allocation3 + $0x1d8] sm:$0xff] %vm444, %v2693
      %2726 = vst.msk [vmem:[#allocation3 + $0x1e8] sm:$0xff] %vm444, %v2694
      %2727 = vst.msk [vmem:[#allocation3 + $0x1f8] sm:$0xff] %vm444, %v2695
      %v2728 = vld [vmem:[#allocation3] sm:$0xff]
      %v2729 = vld [vmem:[#allocation3 + $0x8] sm:$0xff]
      %v2730 = vld [vmem:[#allocation3 + $0x10] sm:$0xff]
      %v2731 = vld [vmem:[#allocation3 + $0x18] sm:$0xff]
      %v2732 = vld [vmem:[#allocation3 + $0x20] sm:$0xff]
      %v2733 = vld [vmem:[#allocation3 + $0x28] sm:$0xff]
      %v2734 = vld [vmem:[#allocation3 + $0x30] sm:$0xff]
      %v2735 = vld [vmem:[#allocation3 + $0x38] sm:$0xff]
      %v2736 = vld [vmem:[#allocation3 + $0x40] sm:$0xff]
      %v2737 = vld [vmem:[#allocation3 + $0x48] sm:$0xff]
      %v2738 = vld [vmem:[#allocation3 + $0x50] sm:$0xff]
      %v2739 = vld [vmem:[#allocation3 + $0x58] sm:$0xff]
      %v2740 = vld [vmem:[#allocation3 + $0x60] sm:$0xff]
      %v2741 = vld [vmem:[#allocation3 + $0x68] sm:$0xff]
      %v2742 = vld [vmem:[#allocation3 + $0x70] sm:$0xff]
      %v2743 = vld [vmem:[#allocation3 + $0x78] sm:$0xff]
      %v2744 = vld [vmem:[#allocation3 + $0x80] sm:$0xff]
      %v2745 = vld [vmem:[#allocation3 + $0x88] sm:$0xff]
      %v2746 = vld [vmem:[#allocation3 + $0x90] sm:$0xff]
      %v2747 = vld [vmem:[#allocation3 + $0x98] sm:$0xff]
      %v2748 = vld [vmem:[#allocation3 + $0xa0] sm:$0xff]
      %v2749 = vld [vmem:[#allocation3 + $0xa8] sm:$0xff]
      %v2750 = vld [vmem:[#allocation3 + $0xb0] sm:$0xff]
      %v2751 = vld [vmem:[#allocation3 + $0xb8] sm:$0xff]
      %v2752 = vld [vmem:[#allocation3 + $0xc0] sm:$0xff]
      %v2753 = vld [vmem:[#allocation3 + $0xc8] sm:$0xff]
      %v2754 = vld [vmem:[#allocation3 + $0xd0] sm:$0xff]
      %v2755 = vld [vmem:[#allocation3 + $0xd8] sm:$0xff]
      %v2756 = vld [vmem:[#allocation3 + $0xe0] sm:$0xff]
      %v2757 = vld [vmem:[#allocation3 + $0xe8] sm:$0xff]
      %v2758 = vld [vmem:[#allocation3 + $0xf0] sm:$0xff]
      %v2759 = vld [vmem:[#allocation3 + $0xf8] sm:$0xff]
      %v2760 = vld [vmem:[#allocation3 + $0x100] sm:$0xff]
      %v2761 = vld [vmem:[#allocation3 + $0x108] sm:$0xff]
      %v2762 = vld [vmem:[#allocation3 + $0x110] sm:$0xff]
      %v2763 = vld [vmem:[#allocation3 + $0x118] sm:$0xff]
      %v2764 = vld [vmem:[#allocation3 + $0x120] sm:$0xff]
      %v2765 = vld [vmem:[#allocation3 + $0x128] sm:$0xff]
      %v2766 = vld [vmem:[#allocation3 + $0x130] sm:$0xff]
      %v2767 = vld [vmem:[#allocation3 + $0x138] sm:$0xff]
      %v2768 = vld [vmem:[#allocation3 + $0x140] sm:$0xff]
      %v2769 = vld [vmem:[#allocation3 + $0x148] sm:$0xff]
      %v2770 = vld [vmem:[#allocation3 + $0x150] sm:$0xff]
      %v2771 = vld [vmem:[#allocation3 + $0x158] sm:$0xff]
      %v2772 = vld [vmem:[#allocation3 + $0x160] sm:$0xff]
      %v2773 = vld [vmem:[#allocation3 + $0x168] sm:$0xff]
      %v2774 = vld [vmem:[#allocation3 + $0x170] sm:$0xff]
      %v2775 = vld [vmem:[#allocation3 + $0x178] sm:$0xff]
      %v2776 = vld [vmem:[#allocation3 + $0x180] sm:$0xff]
      %v2777 = vld [vmem:[#allocation3 + $0x188] sm:$0xff]
      %v2778 = vld [vmem:[#allocation3 + $0x190] sm:$0xff]
      %v2779 = vld [vmem:[#allocation3 + $0x198] sm:$0xff]
      %v2780 = vld [vmem:[#allocation3 + $0x1a0] sm:$0xff]
      %v2781 = vld [vmem:[#allocation3 + $0x1a8] sm:$0xff]
      %v2782 = vld [vmem:[#allocation3 + $0x1b0] sm:$0xff]
      %v2783 = vld [vmem:[#allocation3 + $0x1b8] sm:$0xff]
      %v2784 = vld [vmem:[#allocation3 + $0x1c0] sm:$0xff]
      %v2785 = vld [vmem:[#allocation3 + $0x1c8] sm:$0xff]
      %v2786 = vld [vmem:[#allocation3 + $0x1d0] sm:$0xff]
      %v2787 = vld [vmem:[#allocation3 + $0x1d8] sm:$0xff]
      %v2788 = vld [vmem:[#allocation3 + $0x1e0] sm:$0xff]
      %v2789 = vld [vmem:[#allocation3 + $0x1e8] sm:$0xff]
      %v2790 = vld [vmem:[#allocation3 + $0x1f0] sm:$0xff]
      %v2791 = vld [vmem:[#allocation3 + $0x1f8] sm:$0xff]
      %v2792 = vld [vmem:[%s6] sm:$0xff]
      %v2793 = vld [vmem:[%s6 + $0x8] sm:$0xff]
      %v2794 = vld [vmem:[%s6 + $0x10] sm:$0xff]
      %v2795 = vld [vmem:[%s6 + $0x18] sm:$0xff]
      %v2796 = vld [vmem:[%s6 + $0x20] sm:$0xff]
      %v2797 = vld [vmem:[%s6 + $0x28] sm:$0xff]
      %v2798 = vld [vmem:[%s6 + $0x30] sm:$0xff]
      %v2799 = vld [vmem:[%s6 + $0x38] sm:$0xff]
      %v2800 = vld [vmem:[%s6 + $0x40] sm:$0xff]
      %v2801 = vld [vmem:[%s6 + $0x48] sm:$0xff]
      %v2802 = vld [vmem:[%s6 + $0x50] sm:$0xff]
      %v2803 = vld [vmem:[%s6 + $0x58] sm:$0xff]
      %v2804 = vld [vmem:[%s6 + $0x60] sm:$0xff]
      %v2805 = vld [vmem:[%s6 + $0x68] sm:$0xff]
      %v2806 = vld [vmem:[%s6 + $0x70] sm:$0xff]
      %v2807 = vld [vmem:[%s6 + $0x78] sm:$0xff]
      %v2808 = vld [vmem:[%s6 + $0x80] sm:$0xff]
      %v2809 = vld [vmem:[%s6 + $0x88] sm:$0xff]
      %v2811 = vsel %vm444, %v2729, 0
      %v2814 = vsel %vm444, %v2731, 0
      %v2817 = vsel %vm444, %v2733, 0
      %v2820 = vsel %vm444, %v2735, 0
      %v2823 = vsel %vm444, %v2737, 0
      %v2826 = vsel %vm444, %v2739, 0
      %v2829 = vsel %vm444, %v2741, 0
      %v2832 = vsel %vm444, %v2743, 0
      %v2835 = vsel %vm444, %v2745, 0
      %v2838 = vsel %vm444, %v2747, 0
      %v2841 = vsel %vm444, %v2749, 0
      %v2844 = vsel %vm444, %v2751, 0
      %v2847 = vsel %vm444, %v2753, 0
      %v2850 = vsel %vm444, %v2755, 0
      %v2853 = vsel %vm444, %v2757, 0
      %v2856 = vsel %vm444, %v2759, 0
      %v2859 = vsel %vm444, %v2761, 0
      %v2862 = vsel %vm444, %v2763, 0
      %v2865 = vsel %vm444, %v2765, 0
      %v2868 = vsel %vm444, %v2767, 0
      %v2871 = vsel %vm444, %v2769, 0
      %v2874 = vsel %vm444, %v2771, 0
      %v2877 = vsel %vm444, %v2773, 0
      %v2880 = vsel %vm444, %v2775, 0
      %v2883 = vsel %vm444, %v2777, 0
      %v2886 = vsel %vm444, %v2779, 0
      %v2889 = vsel %vm444, %v2781, 0
      %v2892 = vsel %vm444, %v2783, 0
      %v2895 = vsel %vm444, %v2785, 0
      %v2898 = vsel %vm444, %v2787, 0
      %v2901 = vsel %vm444, %v2789, 0
      %v2904 = vsel %vm444, %v2791, 0
      %2906 = vmatprep.subr.mxu0 0.0
      %2907 = vmatpush1.msra.mxu0 %v2792
      %2908 = vmatprep.subr.mxu0 0.0
      %2909 = vmatpush1.msra.mxu0 %v2793
      %2910 = vmatprep.subr.mxu0 0.0
      %2911 = vmatpush1.msra.mxu0 %v2794
      %2912 = vmatprep.subr.mxu0 0.0
      %2913 = vmatpush1.msra.mxu0 %v2795
      %2914 = vmatprep.subr.mxu0 0.0
      %2915 = vmatpush1.msra.mxu0 %v2796
      %2916 = vmatprep.subr.mxu0 0.0
      %2917 = vmatpush1.msra.mxu0 %v2797
      %2918 = vmatprep.subr.mxu0 0.0
      %2919 = vmatpush1.msra.mxu0 %v2798
      %2920 = vmatprep.subr.mxu0 0.0
      %2921 = vmatpush1.msra.mxu0 %v2799
      %2922 = vmatprep.subr.mxu0 0.0
      %2923 = vmatpush1.msra.mxu0 %v2800
      %2924 = vmatprep.subr.mxu0 0.0
      %2925 = vmatpush1.msra.mxu0 %v2801
      %2926 = vmatprep.subr.mxu0 0.0
      %2927 = vmatpush1.msra.mxu0 %v2802
      %2928 = vmatprep.subr.mxu0 0.0
      %2929 = vmatpush1.msra.mxu0 %v2803
      %2930 = vmatprep.subr.mxu0 0.0
      %2931 = vmatpush1.msra.mxu0 %v2804
      %2932 = vmatprep.subr.mxu0 0.0
      %2933 = vmatpush1.msra.mxu0 %v2805
      %2934 = vmatprep.subr.mxu0 0.0
      %2935 = vmatpush1.msra.mxu0 %v2806
      %2936 = vmatprep.subr.mxu0 0.0
      %2937 = vmatpush1.msra.mxu0 %v2807
      %2938 = vmatprep.subr.mxu0 0.0
      %2939 = vmatpush1.msra.mxu0 %v2808
      %2940 = vmatprep.subr.mxu0 0.0
      %2941 = vmatpush1.msra.mxu0 %v2809
      %2942 = vmatprep.subr.mxu0 0.0
      %2943 = vmatpush1.msra.mxu0 0.0
      %2944 = vmatprep.subr.mxu0 0.0
      %2945 = vmatpush1.msra.mxu0 0.0
      %2946 = vmatprep.subr.mxu0 0.0
      %2947 = vmatpush1.msra.mxu0 0.0
      %2948 = vmatprep.subr.mxu0 0.0
      %2949 = vmatpush1.msra.mxu0 0.0
      %2950 = vmatprep.subr.mxu0 0.0
      %2951 = vmatpush1.msra.mxu0 0.0
      %2952 = vmatprep.subr.mxu0 0.0
      %2953 = vmatpush1.msra.mxu0 0.0
      %2954 = vmatprep.subr.mxu0 0.0
      %2955 = vmatpush1.msra.mxu0 0.0
      %2956 = vmatprep.subr.mxu0 0.0
      %2957 = vmatpush1.msra.mxu0 0.0
      %2958 = vmatprep.subr.mxu0 0.0
      %2959 = vmatpush1.msra.mxu0 0.0
      %2960 = vmatprep.subr.mxu0 0.0
      %2961 = vmatpush1.msra.mxu0 0.0
      %2962 = vmatprep.subr.mxu0 0.0
      %2963 = vmatpush1.msra.mxu0 0.0
      %2964 = vmatprep.subr.mxu0 0.0
      %2965 = vmatpush1.msra.mxu0 0.0
      %2966 = vmatprep.subr.mxu0 0.0
      %2967 = vmatpush1.msra.mxu0 0.0
      %2968 = vmatprep.subr.mxu0 0.0
      %2969 = vmatpush1.msra.mxu0 0.0
      %2970 = vmatprep.mubr.f32.mxu0 %v2811
      %2971 = vmatmul.mubr.f32.gmra.mrb[0].mxu0 %v2728
      %v2972 = vpop.f32.mrb[0].mxu0
      %v2973 = vadd.f32 0.0, %v2972
      %v2974 = vpop.f32.mrb[0].mxu0
      %2975 = vmatprep.mubr.f32.mxu0 %v2814
      %2976 = vmatmul.mubr.f32.gmra.mrb[0].mxu0 %v2730
      %v2977 = vpop.f32.mrb[0].mxu0
      %v2978 = vadd.f32 0.0, %v2977
      %v2979 = vpop.f32.mrb[0].mxu0
      %2980 = vmatprep.mubr.f32.mxu0 %v2817
      %2981 = vmatmul.mubr.f32.gmra.mrb[0].mxu0 %v2732
      %v2982 = vpop.f32.mrb[0].mxu0
      %v2983 = vadd.f32 0.0, %v2982
      %v2984 = vpop.f32.mrb[0].mxu0
      %2985 = vmatprep.mubr.f32.mxu0 %v2820
      %2986 = vmatmul.mubr.f32.gmra.mrb[0].mxu0 %v2734
      %v2987 = vpop.f32.mrb[0].mxu0
      %v2988 = vadd.f32 0.0, %v2987
      %v2989 = vpop.f32.mrb[0].mxu0
      %2990 = vmatprep.mubr.f32.mxu0 %v2823
      %2991 = vmatmul.mubr.f32.gmra.mrb[0].mxu0 %v2736
      %v2992 = vpop.f32.mrb[0].mxu0
      %v2993 = vadd.f32 0.0, %v2992
      %v2994 = vpop.f32.mrb[0].mxu0
      %2995 = vmatprep.mubr.f32.mxu0 %v2826
      %2996 = vmatmul.mubr.f32.gmra.mrb[0].mxu0 %v2738
      %v2997 = vpop.f32.mrb[0].mxu0
      %v2998 = vadd.f32 0.0, %v2997
      %v2999 = vpop.f32.mrb[0].mxu0
      %3000 = vmatprep.mubr.f32.mxu0 %v2829
      %3001 = vmatmul.mubr.f32.gmra.mrb[0].mxu0 %v2740
      %v3002 = vpop.f32.mrb[0].mxu0
      %v3003 = vadd.f32 0.0, %v3002
      %v3004 = vpop.f32.mrb[0].mxu0
      %3005 = vmatprep.mubr.f32.mxu0 %v2832
      %3006 = vmatmul.mubr.f32.gmra.mrb[0].mxu0 %v2742
      %v3007 = vpop.f32.mrb[0].mxu0
      %v3008 = vadd.f32 0.0, %v3007
      %v3009 = vpop.f32.mrb[0].mxu0
      %3010 = vmatprep.mubr.f32.mxu0 %v2835
      %3011 = vmatmul.mubr.f32.gmra.mrb[0].mxu0 %v2744
      %v3012 = vpop.f32.mrb[0].mxu0
      %v3013 = vadd.f32 0.0, %v3012
      %v3014 = vpop.f32.mrb[0].mxu0
      %3015 = vmatprep.mubr.f32.mxu0 %v2838
      %3016 = vmatmul.mubr.f32.gmra.mrb[0].mxu0 %v2746
      %v3017 = vpop.f32.mrb[0].mxu0
      %v3018 = vadd.f32 0.0, %v3017
      %v3019 = vpop.f32.mrb[0].mxu0
      %3020 = vmatprep.mubr.f32.mxu0 %v2841
      %3021 = vmatmul.mubr.f32.gmra.mrb[0].mxu0 %v2748
      %v3022 = vpop.f32.mrb[0].mxu0
      %v3023 = vadd.f32 0.0, %v3022
      %v3024 = vpop.f32.mrb[0].mxu0
      %3025 = vmatprep.mubr.f32.mxu0 %v2844
      %3026 = vmatmul.mubr.f32.gmra.mrb[0].mxu0 %v2750
      %v3027 = vpop.f32.mrb[0].mxu0
      %v3028 = vadd.f32 0.0, %v3027
      %v3029 = vpop.f32.mrb[0].mxu0
      %3030 = vmatprep.mubr.f32.mxu0 %v2847
      %3031 = vmatmul.mubr.f32.gmra.mrb[0].mxu0 %v2752
      %v3032 = vpop.f32.mrb[0].mxu0
      %v3033 = vadd.f32 0.0, %v3032
      %v3034 = vpop.f32.mrb[0].mxu0
      %3035 = vmatprep.mubr.f32.mxu0 %v2850
      %3036 = vmatmul.mubr.f32.gmra.mrb[0].mxu0 %v2754
      %v3037 = vpop.f32.mrb[0].mxu0
      %v3038 = vadd.f32 0.0, %v3037
      %v3039 = vpop.f32.mrb[0].mxu0
      %3040 = vmatprep.mubr.f32.mxu0 %v2853
      %3041 = vmatmul.mubr.f32.gmra.mrb[0].mxu0 %v2756
      %v3042 = vpop.f32.mrb[0].mxu0
      %v3043 = vadd.f32 0.0, %v3042
      %v3044 = vpop.f32.mrb[0].mxu0
      %3045 = vmatprep.mubr.f32.mxu0 %v2856
      %3046 = vmatmul.mubr.f32.gmra.mrb[0].mxu0 %v2758
      %v3047 = vpop.f32.mrb[0].mxu0
      %v3048 = vadd.f32 0.0, %v3047
      %v3049 = vpop.f32.mrb[0].mxu0
      %3050 = vmatprep.mubr.f32.mxu0 %v2859
      %3051 = vmatmul.mubr.f32.gmra.mrb[0].mxu0 %v2760
      %v3052 = vpop.f32.mrb[0].mxu0
      %v3053 = vadd.f32 0.0, %v3052
      %v3054 = vpop.f32.mrb[0].mxu0
      %3055 = vmatprep.mubr.f32.mxu0 %v2862
      %3056 = vmatmul.mubr.f32.gmra.mrb[0].mxu0 %v2762
      %v3057 = vpop.f32.mrb[0].mxu0
      %v3058 = vadd.f32 0.0, %v3057
      %v3059 = vpop.f32.mrb[0].mxu0
      %3060 = vmatprep.mubr.f32.mxu0 %v2865
      %3061 = vmatmul.mubr.f32.gmra.mrb[0].mxu0 %v2764
      %v3062 = vpop.f32.mrb[0].mxu0
      %v3063 = vadd.f32 0.0, %v3062
      %v3064 = vpop.f32.mrb[0].mxu0
      %3065 = vmatprep.mubr.f32.mxu0 %v2868
      %3066 = vmatmul.mubr.f32.gmra.mrb[0].mxu0 %v2766
      %v3067 = vpop.f32.mrb[0].mxu0
      %v3068 = vadd.f32 0.0, %v3067
      %v3069 = vpop.f32.mrb[0].mxu0
      %3070 = vmatprep.mubr.f32.mxu0 %v2871
      %3071 = vmatmul.mubr.f32.gmra.mrb[0].mxu0 %v2768
      %v3072 = vpop.f32.mrb[0].mxu0
      %v3073 = vadd.f32 0.0, %v3072
      %v3074 = vpop.f32.mrb[0].mxu0
      %3075 = vmatprep.mubr.f32.mxu0 %v2874
      %3076 = vmatmul.mubr.f32.gmra.mrb[0].mxu0 %v2770
      %v3077 = vpop.f32.mrb[0].mxu0
      %v3078 = vadd.f32 0.0, %v3077
      %v3079 = vpop.f32.mrb[0].mxu0
      %3080 = vmatprep.mubr.f32.mxu0 %v2877
      %3081 = vmatmul.mubr.f32.gmra.mrb[0].mxu0 %v2772
      %v3082 = vpop.f32.mrb[0].mxu0
      %v3083 = vadd.f32 0.0, %v3082
      %v3084 = vpop.f32.mrb[0].mxu0
      %3085 = vmatprep.mubr.f32.mxu0 %v2880
      %3086 = vmatmul.mubr.f32.gmra.mrb[0].mxu0 %v2774
      %v3087 = vpop.f32.mrb[0].mxu0
      %v3088 = vadd.f32 0.0, %v3087
      %v3089 = vpop.f32.mrb[0].mxu0
      %3090 = vmatprep.mubr.f32.mxu0 %v2883
      %3091 = vmatmul.mubr.f32.gmra.mrb[0].mxu0 %v2776
      %v3092 = vpop.f32.mrb[0].mxu0
      %v3093 = vadd.f32 0.0, %v3092
      %v3094 = vpop.f32.mrb[0].mxu0
      %3095 = vmatprep.mubr.f32.mxu0 %v2886
      %3096 = vmatmul.mubr.f32.gmra.mrb[0].mxu0 %v2778
      %v3097 = vpop.f32.mrb[0].mxu0
      %v3098 = vadd.f32 0.0, %v3097
      %v3099 = vpop.f32.mrb[0].mxu0
      %3100 = vmatprep.mubr.f32.mxu0 %v2889
      %3101 = vmatmul.mubr.f32.gmra.mrb[0].mxu0 %v2780
      %v3102 = vpop.f32.mrb[0].mxu0
      %v3103 = vadd.f32 0.0, %v3102
      %v3104 = vpop.f32.mrb[0].mxu0
      %3105 = vmatprep.mubr.f32.mxu0 %v2892
      %3106 = vmatmul.mubr.f32.gmra.mrb[0].mxu0 %v2782
      %v3107 = vpop.f32.mrb[0].mxu0
      %v3108 = vadd.f32 0.0, %v3107
      %v3109 = vpop.f32.mrb[0].mxu0
      %3110 = vmatprep.mubr.f32.mxu0 %v2895
      %3111 = vmatmul.mubr.f32.gmra.mrb[0].mxu0 %v2784
      %v3112 = vpop.f32.mrb[0].mxu0
      %v3113 = vadd.f32 0.0, %v3112
      %v3114 = vpop.f32.mrb[0].mxu0
      %3115 = vmatprep.mubr.f32.mxu0 %v2898
      %3116 = vmatmul.mubr.f32.gmra.mrb[0].mxu0 %v2786
      %v3117 = vpop.f32.mrb[0].mxu0
      %v3118 = vadd.f32 0.0, %v3117
      %v3119 = vpop.f32.mrb[0].mxu0
      %3120 = vmatprep.mubr.f32.mxu0 %v2901
      %3121 = vmatmul.mubr.f32.gmra.mrb[0].mxu0 %v2788
      %v3122 = vpop.f32.mrb[0].mxu0
      %v3123 = vadd.f32 0.0, %v3122
      %v3124 = vpop.f32.mrb[0].mxu0
      %3125 = vmatprep.mubr.f32.mxu0 %v2904
      %3126 = vmatmul.mubr.f32.gmra.mrb[0].mxu0 %v2790
      %v3127 = vpop.f32.mrb[0].mxu0
      %v3128 = vadd.f32 0.0, %v3127
      %v3129 = vpop.f32.mrb[0].mxu0
      %3130 = vdwg.mxu0
      %v3131 = vld [vmem:[%s7] sm:$0x1]
      %v3133 = vlaneseq
      %v3134 = vshrl.u32 %v3133, 7
      %v3135 = vsub.s32 0, %v3134
      %v3136 = vrot.slane %v3131, %v3135
      %v3138 = vmul.f32 %v2973, %v3136
      %v3139 = vmul.f32 %v2978, %v3136
      %v3140 = vmul.f32 %v2983, %v3136
      %v3141 = vmul.f32 %v2988, %v3136
      %v3142 = vmul.f32 %v2993, %v3136
      %v3143 = vmul.f32 %v2998, %v3136
      %v3144 = vmul.f32 %v3003, %v3136
      %v3145 = vmul.f32 %v3008, %v3136
      %v3146 = vmul.f32 %v3013, %v3136
      %v3147 = vmul.f32 %v3018, %v3136
      %v3148 = vmul.f32 %v3023, %v3136
      %v3149 = vmul.f32 %v3028, %v3136
      %v3150 = vmul.f32 %v3033, %v3136
      %v3151 = vmul.f32 %v3038, %v3136
      %v3152 = vmul.f32 %v3043, %v3136
      %v3153 = vmul.f32 %v3048, %v3136
      %v3154 = vmul.f32 %v3053, %v3136
      %v3155 = vmul.f32 %v3058, %v3136
      %v3156 = vmul.f32 %v3063, %v3136
      %v3157 = vmul.f32 %v3068, %v3136
      %v3158 = vmul.f32 %v3073, %v3136
      %v3159 = vmul.f32 %v3078, %v3136
      %v3160 = vmul.f32 %v3083, %v3136
      %v3161 = vmul.f32 %v3088, %v3136
      %v3162 = vmul.f32 %v3093, %v3136
      %v3163 = vmul.f32 %v3098, %v3136
      %v3164 = vmul.f32 %v3103, %v3136
      %v3165 = vmul.f32 %v3108, %v3136
      %v3166 = vmul.f32 %v3113, %v3136
      %v3167 = vmul.f32 %v3118, %v3136
      %v3168 = vmul.f32 %v3123, %v3136
      %v3169 = vmul.f32 %v3128, %v3136
      %v3170 = vld [vmem:[%s8] sm:$0x1]
      %v3172 = vlaneseq
      %v3173 = vshrl.u32 %v3172, 7
      %v3174 = vsub.s32 0, %v3173
      %v3175 = vrot.slane %v3170, %v3174
      %v3177 = vadd.f32 %v3138, %v3175
      %v3178 = vadd.f32 %v3139, %v3175
      %v3179 = vadd.f32 %v3140, %v3175
      %v3180 = vadd.f32 %v3141, %v3175
      %v3181 = vadd.f32 %v3142, %v3175
      %v3182 = vadd.f32 %v3143, %v3175
      %v3183 = vadd.f32 %v3144, %v3175
      %v3184 = vadd.f32 %v3145, %v3175
      %v3185 = vadd.f32 %v3146, %v3175
      %v3186 = vadd.f32 %v3147, %v3175
      %v3187 = vadd.f32 %v3148, %v3175
      %v3188 = vadd.f32 %v3149, %v3175
      %v3189 = vadd.f32 %v3150, %v3175
      %v3190 = vadd.f32 %v3151, %v3175
      %v3191 = vadd.f32 %v3152, %v3175
      %v3192 = vadd.f32 %v3153, %v3175
      %v3193 = vadd.f32 %v3154, %v3175
      %v3194 = vadd.f32 %v3155, %v3175
      %v3195 = vadd.f32 %v3156, %v3175
      %v3196 = vadd.f32 %v3157, %v3175
      %v3197 = vadd.f32 %v3158, %v3175
      %v3198 = vadd.f32 %v3159, %v3175
      %v3199 = vadd.f32 %v3160, %v3175
      %v3200 = vadd.f32 %v3161, %v3175
      %v3201 = vadd.f32 %v3162, %v3175
      %v3202 = vadd.f32 %v3163, %v3175
      %v3203 = vadd.f32 %v3164, %v3175
      %v3204 = vadd.f32 %v3165, %v3175
      %v3205 = vadd.f32 %v3166, %v3175
      %v3206 = vadd.f32 %v3167, %v3175
      %v3207 = vadd.f32 %v3168, %v3175
      %v3208 = vadd.f32 %v3169, %v3175
      %v3209 = vmax.f32 %v3177, 0.0
      %v3210 = vmax.f32 %v3178, 0.0
      %v3211 = vmax.f32 %v3179, 0.0
      %v3212 = vmax.f32 %v3180, 0.0
      %v3213 = vmax.f32 %v3181, 0.0
      %v3214 = vmax.f32 %v3182, 0.0
      %v3215 = vmax.f32 %v3183, 0.0
      %v3216 = vmax.f32 %v3184, 0.0
      %v3217 = vmax.f32 %v3185, 0.0
      %v3218 = vmax.f32 %v3186, 0.0
      %v3219 = vmax.f32 %v3187, 0.0
      %v3220 = vmax.f32 %v3188, 0.0
      %v3221 = vmax.f32 %v3189, 0.0
      %v3222 = vmax.f32 %v3190, 0.0
      %v3223 = vmax.f32 %v3191, 0.0
      %v3224 = vmax.f32 %v3192, 0.0
      %v3225 = vmax.f32 %v3193, 0.0
      %v3226 = vmax.f32 %v3194, 0.0
      %v3227 = vmax.f32 %v3195, 0.0
      %v3228 = vmax.f32 %v3196, 0.0
      %v3229 = vmax.f32 %v3197, 0.0
      %v3230 = vmax.f32 %v3198, 0.0
      %v3231 = vmax.f32 %v3199, 0.0
      %v3232 = vmax.f32 %v3200, 0.0
      %v3233 = vmax.f32 %v3201, 0.0
      %v3234 = vmax.f32 %v3202, 0.0
      %v3235 = vmax.f32 %v3203, 0.0
      %v3236 = vmax.f32 %v3204, 0.0
      %v3237 = vmax.f32 %v3205, 0.0
      %v3238 = vmax.f32 %v3206, 0.0
      %v3239 = vmax.f32 %v3207, 0.0
      %v3240 = vmax.f32 %v3208, 0.0
      %3241 = vst.msk [vmem:[#allocation4] sm:$0xff] %vm1054, 0.0
      %3242 = vst.msk [vmem:[#allocation4 + $0x8] sm:$0xff] %vm1054, 0.0
      %vm3243 = vcmask 58368
      %3244 = vst.msk [vmem:[#allocation4 + $0x10] sm:$0x3] %vm3243, 0.0
      %3245 = vst.msk [vmem:[#allocation4 + $0x18] sm:$0xff] %vm1054, 0.0
      %3246 = vst.msk [vmem:[#allocation4 + $0x20] sm:$0xff] %vm1054, 0.0
      %3247 = vst.msk [vmem:[#allocation4 + $0x28] sm:$0x3] %vm3243, 0.0
      %3248 = vst.msk [vmem:[#allocation4 + $0x30] sm:$0xff] %vm1054, 0.0
      %3249 = vst.msk [vmem:[#allocation4 + $0x38] sm:$0xff] %vm1054, 0.0
      %3250 = vst.msk [vmem:[#allocation4 + $0x40] sm:$0x3] %vm3243, 0.0
      %3251 = vst.msk [vmem:[#allocation4 + $0x48] sm:$0xff] %vm1054, 0.0
      %3252 = vst.msk [vmem:[#allocation4 + $0x50] sm:$0xff] %vm1054, 0.0
      %3253 = vst.msk [vmem:[#allocation4 + $0x58] sm:$0x3] %vm3243, 0.0
      %3254 = vst.msk [vmem:[#allocation4 + $0x60] sm:$0xff] %vm1054, 0.0
      %3255 = vst.msk [vmem:[#allocation4 + $0x68] sm:$0xff] %vm1054, 0.0
      %3256 = vst.msk [vmem:[#allocation4 + $0x70] sm:$0x3] %vm3243, 0.0
      %3257 = vst.msk [vmem:[#allocation4 + $0x78] sm:$0xff] %vm1054, 0.0
      %3258 = vst.msk [vmem:[#allocation4 + $0x80] sm:$0xff] %vm1054, 0.0
      %3259 = vst.msk [vmem:[#allocation4 + $0x88] sm:$0x3] %vm3243, 0.0
      %3260 = vst.msk [vmem:[#allocation4 + $0x90] sm:$0xff] %vm1054, 0.0
      %3261 = vst.msk [vmem:[#allocation4 + $0x98] sm:$0xff] %vm1054, 0.0
      %3262 = vst.msk [vmem:[#allocation4 + $0xa0] sm:$0x3] %vm3243, 0.0
      %3263 = vst.msk [vmem:[#allocation4 + $0xa8] sm:$0xff] %vm1054, 0.0
      %3264 = vst.msk [vmem:[#allocation4 + $0xb0] sm:$0xff] %vm1054, 0.0
      %3265 = vst.msk [vmem:[#allocation4 + $0xb8] sm:$0x3] %vm3243, 0.0
      %3266 = vst.msk [vmem:[#allocation4 + $0xc0] sm:$0xff] %vm1054, 0.0
      %3267 = vst.msk [vmem:[#allocation4 + $0xc8] sm:$0xff] %vm1054, 0.0
      %3268 = vst.msk [vmem:[#allocation4 + $0xd0] sm:$0x3] %vm3243, 0.0
      %3269 = vst.msk [vmem:[#allocation4 + $0xd8] sm:$0xff] %vm1054, 0.0
      %3270 = vst.msk [vmem:[#allocation4 + $0xe0] sm:$0xff] %vm1054, 0.0
      %3271 = vst.msk [vmem:[#allocation4 + $0xe8] sm:$0x3] %vm3243, 0.0
      %3272 = vst.msk [vmem:[#allocation4 + $0xf0] sm:$0xff] %vm1054, 0.0
      %3273 = vst.msk [vmem:[#allocation4 + $0xf8] sm:$0xff] %vm1054, 0.0
      %3274 = vst.msk [vmem:[#allocation4 + $0x100] sm:$0x3] %vm3243, 0.0
      %3275 = vst.msk [vmem:[#allocation4 + $0x108] sm:$0xff] %vm1054, 0.0
      %3276 = vst.msk [vmem:[#allocation4 + $0x110] sm:$0xff] %vm1054, 0.0
      %3277 = vst.msk [vmem:[#allocation4 + $0x118] sm:$0x3] %vm3243, 0.0
      %3278 = vst.msk [vmem:[#allocation4 + $0x120] sm:$0xff] %vm1054, 0.0
      %3279 = vst.msk [vmem:[#allocation4 + $0x128] sm:$0xff] %vm1054, 0.0
      %3280 = vst.msk [vmem:[#allocation4 + $0x130] sm:$0x3] %vm3243, 0.0
      %3281 = vst.msk [vmem:[#allocation4 + $0x138] sm:$0xff] %vm1054, 0.0
      %3282 = vst.msk [vmem:[#allocation4 + $0x140] sm:$0xff] %vm1054, 0.0
      %3283 = vst.msk [vmem:[#allocation4 + $0x148] sm:$0x3] %vm3243, 0.0
      %3284 = vst.msk [vmem:[#allocation4 + $0x150] sm:$0xff] %vm1054, 0.0
      %3285 = vst.msk [vmem:[#allocation4 + $0x158] sm:$0xff] %vm1054, 0.0
      %3286 = vst.msk [vmem:[#allocation4 + $0x160] sm:$0x3] %vm3243, 0.0
      %3287 = vst.msk [vmem:[#allocation4 + $0x168] sm:$0xff] %vm1054, 0.0
      %3288 = vst.msk [vmem:[#allocation4 + $0x170] sm:$0xff] %vm1054, 0.0
      %3289 = vst.msk [vmem:[#allocation4 + $0x178] sm:$0x3] %vm3243, 0.0
      %3290 = vst.msk [vmem:[#allocation4 + $0x180] sm:$0xff] %vm1054, 0.0
      %3291 = vst.msk [vmem:[#allocation4 + $0x188] sm:$0xff] %vm1054, 0.0
      %3292 = vst.msk [vmem:[#allocation4 + $0x190] sm:$0x3] %vm3243, 0.0
      %3293 = vst.msk [vmem:[#allocation4 + $0x198] sm:$0xff] %vm1054, 0.0
      %3294 = vst.msk [vmem:[#allocation4 + $0x1a0] sm:$0xff] %vm1054, 0.0
      %3295 = vst.msk [vmem:[#allocation4 + $0x1a8] sm:$0x3] %vm3243, 0.0
      %s3296 = scalar_lea.vmem [#allocation4], 24
      %3297 = vst.msk [vmem:[%s3296 + $0x1] sm:$0xff] %vm1054, %v3209
      %3298 = vst.msk [vmem:[%s3296 + $0x9] sm:$0xff] %vm1054, %v3210
      %3299 = vst.msk [vmem:[%s3296 + $0x19] sm:$0xff] %vm1054, %v3211
      %3300 = vst.msk [vmem:[%s3296 + $0x21] sm:$0xff] %vm1054, %v3212
      %3301 = vst.msk [vmem:[%s3296 + $0x31] sm:$0xff] %vm1054, %v3213
      %3302 = vst.msk [vmem:[%s3296 + $0x39] sm:$0xff] %vm1054, %v3214
      %3303 = vst.msk [vmem:[%s3296 + $0x49] sm:$0xff] %vm1054, %v3215
      %3304 = vst.msk [vmem:[%s3296 + $0x51] sm:$0xff] %vm1054, %v3216
      %3305 = vst.msk [vmem:[%s3296 + $0x61] sm:$0xff] %vm1054, %v3217
      %3306 = vst.msk [vmem:[%s3296 + $0x69] sm:$0xff] %vm1054, %v3218
      %3307 = vst.msk [vmem:[%s3296 + $0x79] sm:$0xff] %vm1054, %v3219
      %3308 = vst.msk [vmem:[%s3296 + $0x81] sm:$0xff] %vm1054, %v3220
      %3309 = vst.msk [vmem:[%s3296 + $0x91] sm:$0xff] %vm1054, %v3221
      %3310 = vst.msk [vmem:[%s3296 + $0x99] sm:$0xff] %vm1054, %v3222
      %3311 = vst.msk [vmem:[%s3296 + $0xa9] sm:$0xff] %vm1054, %v3223
      %3312 = vst.msk [vmem:[%s3296 + $0xb1] sm:$0xff] %vm1054, %v3224
      %3313 = vst.msk [vmem:[%s3296 + $0xc1] sm:$0xff] %vm1054, %v3225
      %3314 = vst.msk [vmem:[%s3296 + $0xc9] sm:$0xff] %vm1054, %v3226
      %3315 = vst.msk [vmem:[%s3296 + $0xd9] sm:$0xff] %vm1054, %v3227
      %3316 = vst.msk [vmem:[%s3296 + $0xe1] sm:$0xff] %vm1054, %v3228
      %3317 = vst.msk [vmem:[%s3296 + $0xf1] sm:$0xff] %vm1054, %v3229
      %3318 = vst.msk [vmem:[%s3296 + $0xf9] sm:$0xff] %vm1054, %v3230
      %3319 = vst.msk [vmem:[%s3296 + $0x109] sm:$0xff] %vm1054, %v3231
      %3320 = vst.msk [vmem:[%s3296 + $0x111] sm:$0xff] %vm1054, %v3232
      %3321 = vst.msk [vmem:[%s3296 + $0x121] sm:$0xff] %vm1054, %v3233
      %3322 = vst.msk [vmem:[%s3296 + $0x129] sm:$0xff] %vm1054, %v3234
      %3323 = vst.msk [vmem:[%s3296 + $0x139] sm:$0xff] %vm1054, %v3235
      %3324 = vst.msk [vmem:[%s3296 + $0x141] sm:$0xff] %vm1054, %v3236
      %3325 = vst.msk [vmem:[%s3296 + $0x151] sm:$0xff] %vm1054, %v3237
      %3326 = vst.msk [vmem:[%s3296 + $0x159] sm:$0xff] %vm1054, %v3238
      %3327 = vst.msk [vmem:[%s3296 + $0x169] sm:$0xff] %vm1054, %v3239
      %3328 = vst.msk [vmem:[%s3296 + $0x171] sm:$0xff] %vm1054, %v3240
      %v3329 = vld [vmem:[#allocation4] sm:$0xff]
      %v3330 = vld [vmem:[#allocation4 + $0x8] sm:$0xff]
      %v3331 = vld [vmem:[#allocation4 + $0x18] sm:$0xff]
      %v3332 = vld [vmem:[#allocation4 + $0x20] sm:$0xff]
      %v3333 = vld [vmem:[#allocation4 + $0x30] sm:$0xff]
      %v3334 = vld [vmem:[#allocation4 + $0x38] sm:$0xff]
      %v3335 = vld [vmem:[#allocation4 + $0x48] sm:$0xff]
      %v3336 = vld [vmem:[#allocation4 + $0x50] sm:$0xff]
      %v3337 = vld [vmem:[#allocation4 + $0x60] sm:$0xff]
      %v3338 = vld [vmem:[#allocation4 + $0x68] sm:$0xff]
      %v3339 = vld [vmem:[#allocation4 + $0x78] sm:$0xff]
      %v3340 = vld [vmem:[#allocation4 + $0x80] sm:$0xff]
      %v3341 = vld [vmem:[#allocation4 + $0x90] sm:$0xff]
      %v3342 = vld [vmem:[#allocation4 + $0x98] sm:$0xff]
      %v3343 = vld [vmem:[#allocation4 + $0xa8] sm:$0xff]
      %v3344 = vld [vmem:[#allocation4 + $0xb0] sm:$0xff]
      %v3345 = vld [vmem:[#allocation4 + $0xc0] sm:$0xff]
      %v3346 = vld [vmem:[#allocation4 + $0xc8] sm:$0xff]
      %v3347 = vld [vmem:[#allocation4 + $0xd8] sm:$0xff]
      %v3348 = vld [vmem:[#allocation4 + $0xe0] sm:$0xff]
      %v3349 = vld [vmem:[#allocation4 + $0xf0] sm:$0xff]
      %v3350 = vld [vmem:[#allocation4 + $0xf8] sm:$0xff]
      %v3351 = vld [vmem:[#allocation4 + $0x108] sm:$0xff]
      %v3352 = vld [vmem:[#allocation4 + $0x110] sm:$0xff]
      %v3353 = vld [vmem:[#allocation4 + $0x120] sm:$0xff]
      %v3354 = vld [vmem:[#allocation4 + $0x128] sm:$0xff]
      %v3355 = vld [vmem:[#allocation4 + $0x138] sm:$0xff]
      %v3356 = vld [vmem:[#allocation4 + $0x140] sm:$0xff]
      %v3357 = vld [vmem:[#allocation4 + $0x150] sm:$0xff]
      %v3358 = vld [vmem:[#allocation4 + $0x158] sm:$0xff]
      %v3359 = vld [vmem:[#allocation4 + $0x168] sm:$0xff]
      %v3360 = vld [vmem:[#allocation4 + $0x170] sm:$0xff]
      %3361 = vst.msk [vmem:[#allocation5] sm:$0xff] %vm1054, %v3329
      %3362 = vst.msk [vmem:[#allocation5 + $0x8] sm:$0xff] %vm1054, %v3330
      %3363 = vst.msk [vmem:[#allocation5 + $0x10] sm:$0xff] %vm1054, %v3331
      %3364 = vst.msk [vmem:[#allocation5 + $0x18] sm:$0xff] %vm1054, %v3332
      %3365 = vst.msk [vmem:[#allocation5 + $0x20] sm:$0xff] %vm1054, %v3333
      %3366 = vst.msk [vmem:[#allocation5 + $0x28] sm:$0xff] %vm1054, %v3334
      %3367 = vst.msk [vmem:[#allocation5 + $0x30] sm:$0xff] %vm1054, %v3335
      %3368 = vst.msk [vmem:[#allocation5 + $0x38] sm:$0xff] %vm1054, %v3336
      %3369 = vst.msk [vmem:[#allocation5 + $0x40] sm:$0xff] %vm1054, %v3337
      %3370 = vst.msk [vmem:[#allocation5 + $0x48] sm:$0xff] %vm1054, %v3338
      %3371 = vst.msk [vmem:[#allocation5 + $0x50] sm:$0xff] %vm1054, %v3339
      %3372 = vst.msk [vmem:[#allocation5 + $0x58] sm:$0xff] %vm1054, %v3340
      %3373 = vst.msk [vmem:[#allocation5 + $0x60] sm:$0xff] %vm1054, %v3341
      %3374 = vst.msk [vmem:[#allocation5 + $0x68] sm:$0xff] %vm1054, %v3342
      %3375 = vst.msk [vmem:[#allocation5 + $0x70] sm:$0xff] %vm1054, %v3343
      %3376 = vst.msk [vmem:[#allocation5 + $0x78] sm:$0xff] %vm1054, %v3344
      %3377 = vst.msk [vmem:[#allocation5 + $0x80] sm:$0xff] %vm1054, %v3345
      %3378 = vst.msk [vmem:[#allocation5 + $0x88] sm:$0xff] %vm1054, %v3346
      %3379 = vst.msk [vmem:[#allocation5 + $0x90] sm:$0xff] %vm1054, %v3347
      %3380 = vst.msk [vmem:[#allocation5 + $0x98] sm:$0xff] %vm1054, %v3348
      %3381 = vst.msk [vmem:[#allocation5 + $0xa0] sm:$0xff] %vm1054, %v3349
      %3382 = vst.msk [vmem:[#allocation5 + $0xa8] sm:$0xff] %vm1054, %v3350
      %3383 = vst.msk [vmem:[#allocation5 + $0xb0] sm:$0xff] %vm1054, %v3351
      %3384 = vst.msk [vmem:[#allocation5 + $0xb8] sm:$0xff] %vm1054, %v3352
      %3385 = vst.msk [vmem:[#allocation5 + $0xc0] sm:$0xff] %vm1054, %v3353
      %3386 = vst.msk [vmem:[#allocation5 + $0xc8] sm:$0xff] %vm1054, %v3354
      %3387 = vst.msk [vmem:[#allocation5 + $0xd0] sm:$0xff] %vm1054, %v3355
      %3388 = vst.msk [vmem:[#allocation5 + $0xd8] sm:$0xff] %vm1054, %v3356
      %3389 = vst.msk [vmem:[#allocation5 + $0xe0] sm:$0xff] %vm1054, %v3357
      %3390 = vst.msk [vmem:[#allocation5 + $0xe8] sm:$0xff] %vm1054, %v3358
      %3391 = vst.msk [vmem:[#allocation5 + $0xf0] sm:$0xff] %vm1054, %v3359
      %3392 = vst.msk [vmem:[#allocation5 + $0xf8] sm:$0xff] %vm1054, %v3360
      %v3393 = vld [vmem:[#allocation4 + $0x1] sm:$0xff]
      %v3394 = vld [vmem:[#allocation4 + $0x9] sm:$0xff]
      %v3395 = vld [vmem:[#allocation4 + $0x19] sm:$0xff]
      %v3396 = vld [vmem:[#allocation4 + $0x21] sm:$0xff]
      %v3397 = vld [vmem:[#allocation4 + $0x31] sm:$0xff]
      %v3398 = vld [vmem:[#allocation4 + $0x39] sm:$0xff]
      %v3399 = vld [vmem:[#allocation4 + $0x49] sm:$0xff]
      %v3400 = vld [vmem:[#allocation4 + $0x51] sm:$0xff]
      %v3401 = vld [vmem:[#allocation4 + $0x61] sm:$0xff]
      %v3402 = vld [vmem:[#allocation4 + $0x69] sm:$0xff]
      %v3403 = vld [vmem:[#allocation4 + $0x79] sm:$0xff]
      %v3404 = vld [vmem:[#allocation4 + $0x81] sm:$0xff]
      %v3405 = vld [vmem:[#allocation4 + $0x91] sm:$0xff]
      %v3406 = vld [vmem:[#allocation4 + $0x99] sm:$0xff]
      %v3407 = vld [vmem:[#allocation4 + $0xa9] sm:$0xff]
      %v3408 = vld [vmem:[#allocation4 + $0xb1] sm:$0xff]
      %v3409 = vld [vmem:[#allocation4 + $0xc1] sm:$0xff]
      %v3410 = vld [vmem:[#allocation4 + $0xc9] sm:$0xff]
      %v3411 = vld [vmem:[#allocation4 + $0xd9] sm:$0xff]
      %v3412 = vld [vmem:[#allocation4 + $0xe1] sm:$0xff]
      %v3413 = vld [vmem:[#allocation4 + $0xf1] sm:$0xff]
      %v3414 = vld [vmem:[#allocation4 + $0xf9] sm:$0xff]
      %v3415 = vld [vmem:[#allocation4 + $0x109] sm:$0xff]
      %v3416 = vld [vmem:[#allocation4 + $0x111] sm:$0xff]
      %v3417 = vld [vmem:[#allocation4 + $0x121] sm:$0xff]
      %v3418 = vld [vmem:[#allocation4 + $0x129] sm:$0xff]
      %v3419 = vld [vmem:[#allocation4 + $0x139] sm:$0xff]
      %v3420 = vld [vmem:[#allocation4 + $0x141] sm:$0xff]
      %v3421 = vld [vmem:[#allocation4 + $0x151] sm:$0xff]
      %v3422 = vld [vmem:[#allocation4 + $0x159] sm:$0xff]
      %v3423 = vld [vmem:[#allocation4 + $0x169] sm:$0xff]
      %v3424 = vld [vmem:[#allocation4 + $0x171] sm:$0xff]
      %3457 = vrot.lane.b32.xlu0 %v3393, 8
      %v3458 = vpop.permute.xlu0 %3457
      %3459 = vrot.lane.b32.xlu0 %v3394, 8
      %v3460 = vpop.permute.xlu0 %3459
      %3461 = vrot.lane.b32.xlu0 %v3395, 8
      %v3462 = vpop.permute.xlu0 %3461
      %3463 = vrot.lane.b32.xlu0 %v3396, 8
      %v3464 = vpop.permute.xlu0 %3463
      %3465 = vrot.lane.b32.xlu0 %v3397, 8
      %v3466 = vpop.permute.xlu0 %3465
      %3467 = vrot.lane.b32.xlu0 %v3398, 8
      %v3468 = vpop.permute.xlu0 %3467
      %3469 = vrot.lane.b32.xlu0 %v3399, 8
      %v3470 = vpop.permute.xlu0 %3469
      %3471 = vrot.lane.b32.xlu0 %v3400, 8
      %v3472 = vpop.permute.xlu0 %3471
      %3473 = vrot.lane.b32.xlu0 %v3401, 8
      %v3474 = vpop.permute.xlu0 %3473
      %3475 = vrot.lane.b32.xlu0 %v3402, 8
      %v3476 = vpop.permute.xlu0 %3475
      %3477 = vrot.lane.b32.xlu0 %v3403, 8
      %v3478 = vpop.permute.xlu0 %3477
      %3479 = vrot.lane.b32.xlu0 %v3404, 8
      %v3480 = vpop.permute.xlu0 %3479
      %3481 = vrot.lane.b32.xlu0 %v3405, 8
      %v3482 = vpop.permute.xlu0 %3481
      %3483 = vrot.lane.b32.xlu0 %v3406, 8
      %v3484 = vpop.permute.xlu0 %3483
      %3485 = vrot.lane.b32.xlu0 %v3407, 8
      %v3486 = vpop.permute.xlu0 %3485
      %3487 = vrot.lane.b32.xlu0 %v3408, 8
      %v3488 = vpop.permute.xlu0 %3487
      %3489 = vrot.lane.b32.xlu0 %v3409, 8
      %v3490 = vpop.permute.xlu0 %3489
      %3491 = vrot.lane.b32.xlu0 %v3410, 8
      %v3492 = vpop.permute.xlu0 %3491
      %3493 = vrot.lane.b32.xlu0 %v3411, 8
      %v3494 = vpop.permute.xlu0 %3493
      %3495 = vrot.lane.b32.xlu0 %v3412, 8
      %v3496 = vpop.permute.xlu0 %3495
      %3497 = vrot.lane.b32.xlu0 %v3413, 8
      %v3498 = vpop.permute.xlu0 %3497
      %3499 = vrot.lane.b32.xlu0 %v3414, 8
      %v3500 = vpop.permute.xlu0 %3499
      %3501 = vrot.lane.b32.xlu0 %v3415, 8
      %v3502 = vpop.permute.xlu0 %3501
      %3503 = vrot.lane.b32.xlu0 %v3416, 8
      %v3504 = vpop.permute.xlu0 %3503
      %3505 = vrot.lane.b32.xlu0 %v3417, 8
      %v3506 = vpop.permute.xlu0 %3505
      %3507 = vrot.lane.b32.xlu0 %v3418, 8
      %v3508 = vpop.permute.xlu0 %3507
      %3509 = vrot.lane.b32.xlu0 %v3419, 8
      %v3510 = vpop.permute.xlu0 %3509
      %3511 = vrot.lane.b32.xlu0 %v3420, 8
      %v3512 = vpop.permute.xlu0 %3511
      %3513 = vrot.lane.b32.xlu0 %v3421, 8
      %v3514 = vpop.permute.xlu0 %3513
      %3515 = vrot.lane.b32.xlu0 %v3422, 8
      %v3516 = vpop.permute.xlu0 %3515
      %3517 = vrot.lane.b32.xlu0 %v3423, 8
      %v3518 = vpop.permute.xlu0 %3517
      %3519 = vrot.lane.b32.xlu0 %v3424, 8
      %v3520 = vpop.permute.xlu0 %3519
      %3553 = vst.msk [vmem:[#allocation5] sm:$0xff] %vm1215, %v3458
      %3554 = vst.msk [vmem:[#allocation5 + $0x8] sm:$0xff] %vm1215, %v3460
      %3555 = vst.msk [vmem:[#allocation5 + $0x10] sm:$0xff] %vm1215, %v3462
      %3556 = vst.msk [vmem:[#allocation5 + $0x18] sm:$0xff] %vm1215, %v3464
      %3557 = vst.msk [vmem:[#allocation5 + $0x20] sm:$0xff] %vm1215, %v3466
      %3558 = vst.msk [vmem:[#allocation5 + $0x28] sm:$0xff] %vm1215, %v3468
      %3559 = vst.msk [vmem:[#allocation5 + $0x30] sm:$0xff] %vm1215, %v3470
      %3560 = vst.msk [vmem:[#allocation5 + $0x38] sm:$0xff] %vm1215, %v3472
      %3561 = vst.msk [vmem:[#allocation5 + $0x40] sm:$0xff] %vm1215, %v3474
      %3562 = vst.msk [vmem:[#allocation5 + $0x48] sm:$0xff] %vm1215, %v3476
      %3563 = vst.msk [vmem:[#allocation5 + $0x50] sm:$0xff] %vm1215, %v3478
      %3564 = vst.msk [vmem:[#allocation5 + $0x58] sm:$0xff] %vm1215, %v3480
      %3565 = vst.msk [vmem:[#allocation5 + $0x60] sm:$0xff] %vm1215, %v3482
      %3566 = vst.msk [vmem:[#allocation5 + $0x68] sm:$0xff] %vm1215, %v3484
      %3567 = vst.msk [vmem:[#allocation5 + $0x70] sm:$0xff] %vm1215, %v3486
      %3568 = vst.msk [vmem:[#allocation5 + $0x78] sm:$0xff] %vm1215, %v3488
      %3569 = vst.msk [vmem:[#allocation5 + $0x80] sm:$0xff] %vm1215, %v3490
      %3570 = vst.msk [vmem:[#allocation5 + $0x88] sm:$0xff] %vm1215, %v3492
      %3571 = vst.msk [vmem:[#allocation5 + $0x90] sm:$0xff] %vm1215, %v3494
      %3572 = vst.msk [vmem:[#allocation5 + $0x98] sm:$0xff] %vm1215, %v3496
      %3573 = vst.msk [vmem:[#allocation5 + $0xa0] sm:$0xff] %vm1215, %v3498
      %3574 = vst.msk [vmem:[#allocation5 + $0xa8] sm:$0xff] %vm1215, %v3500
      %3575 = vst.msk [vmem:[#allocation5 + $0xb0] sm:$0xff] %vm1215, %v3502
      %3576 = vst.msk [vmem:[#allocation5 + $0xb8] sm:$0xff] %vm1215, %v3504
      %3577 = vst.msk [vmem:[#allocation5 + $0xc0] sm:$0xff] %vm1215, %v3506
      %3578 = vst.msk [vmem:[#allocation5 + $0xc8] sm:$0xff] %vm1215, %v3508
      %3579 = vst.msk [vmem:[#allocation5 + $0xd0] sm:$0xff] %vm1215, %v3510
      %3580 = vst.msk [vmem:[#allocation5 + $0xd8] sm:$0xff] %vm1215, %v3512
      %3581 = vst.msk [vmem:[#allocation5 + $0xe0] sm:$0xff] %vm1215, %v3514
      %3582 = vst.msk [vmem:[#allocation5 + $0xe8] sm:$0xff] %vm1215, %v3516
      %3583 = vst.msk [vmem:[#allocation5 + $0xf0] sm:$0xff] %vm1215, %v3518
      %3584 = vst.msk [vmem:[#allocation5 + $0xf8] sm:$0xff] %vm1215, %v3520
      %v3585 = vld [vmem:[#allocation4 + $0x2] sm:$0xff]
      %v3586 = vld [vmem:[#allocation4 + $0xa] sm:$0xff]
      %v3587 = vld [vmem:[#allocation4 + $0x1a] sm:$0xff]
      %v3588 = vld [vmem:[#allocation4 + $0x22] sm:$0xff]
      %v3589 = vld [vmem:[#allocation4 + $0x32] sm:$0xff]
      %v3590 = vld [vmem:[#allocation4 + $0x3a] sm:$0xff]
      %v3591 = vld [vmem:[#allocation4 + $0x4a] sm:$0xff]
      %v3592 = vld [vmem:[#allocation4 + $0x52] sm:$0xff]
      %v3593 = vld [vmem:[#allocation4 + $0x62] sm:$0xff]
      %v3594 = vld [vmem:[#allocation4 + $0x6a] sm:$0xff]
      %v3595 = vld [vmem:[#allocation4 + $0x7a] sm:$0xff]
      %v3596 = vld [vmem:[#allocation4 + $0x82] sm:$0xff]
      %v3597 = vld [vmem:[#allocation4 + $0x92] sm:$0xff]
      %v3598 = vld [vmem:[#allocation4 + $0x9a] sm:$0xff]
      %v3599 = vld [vmem:[#allocation4 + $0xaa] sm:$0xff]
      %v3600 = vld [vmem:[#allocation4 + $0xb2] sm:$0xff]
      %v3601 = vld [vmem:[#allocation4 + $0xc2] sm:$0xff]
      %v3602 = vld [vmem:[#allocation4 + $0xca] sm:$0xff]
      %v3603 = vld [vmem:[#allocation4 + $0xda] sm:$0xff]
      %v3604 = vld [vmem:[#allocation4 + $0xe2] sm:$0xff]
      %v3605 = vld [vmem:[#allocation4 + $0xf2] sm:$0xff]
      %v3606 = vld [vmem:[#allocation4 + $0xfa] sm:$0xff]
      %v3607 = vld [vmem:[#allocation4 + $0x10a] sm:$0xff]
      %v3608 = vld [vmem:[#allocation4 + $0x112] sm:$0xff]
      %v3609 = vld [vmem:[#allocation4 + $0x122] sm:$0xff]
      %v3610 = vld [vmem:[#allocation4 + $0x12a] sm:$0xff]
      %v3611 = vld [vmem:[#allocation4 + $0x13a] sm:$0xff]
      %v3612 = vld [vmem:[#allocation4 + $0x142] sm:$0xff]
      %v3613 = vld [vmem:[#allocation4 + $0x152] sm:$0xff]
      %v3614 = vld [vmem:[#allocation4 + $0x15a] sm:$0xff]
      %v3615 = vld [vmem:[#allocation4 + $0x16a] sm:$0xff]
      %v3616 = vld [vmem:[#allocation4 + $0x172] sm:$0xff]
      %3649 = vrot.lane.b32.xlu0 %v3585, 16
      %v3650 = vpop.permute.xlu0 %3649
      %3651 = vrot.lane.b32.xlu0 %v3586, 16
      %v3652 = vpop.permute.xlu0 %3651
      %3653 = vrot.lane.b32.xlu0 %v3587, 16
      %v3654 = vpop.permute.xlu0 %3653
      %3655 = vrot.lane.b32.xlu0 %v3588, 16
      %v3656 = vpop.permute.xlu0 %3655
      %3657 = vrot.lane.b32.xlu0 %v3589, 16
      %v3658 = vpop.permute.xlu0 %3657
      %3659 = vrot.lane.b32.xlu0 %v3590, 16
      %v3660 = vpop.permute.xlu0 %3659
      %3661 = vrot.lane.b32.xlu0 %v3591, 16
      %v3662 = vpop.permute.xlu0 %3661
      %3663 = vrot.lane.b32.xlu0 %v3592, 16
      %v3664 = vpop.permute.xlu0 %3663
      %3665 = vrot.lane.b32.xlu0 %v3593, 16
      %v3666 = vpop.permute.xlu0 %3665
      %3667 = vrot.lane.b32.xlu0 %v3594, 16
      %v3668 = vpop.permute.xlu0 %3667
      %3669 = vrot.lane.b32.xlu0 %v3595, 16
      %v3670 = vpop.permute.xlu0 %3669
      %3671 = vrot.lane.b32.xlu0 %v3596, 16
      %v3672 = vpop.permute.xlu0 %3671
      %3673 = vrot.lane.b32.xlu0 %v3597, 16
      %v3674 = vpop.permute.xlu0 %3673
      %3675 = vrot.lane.b32.xlu0 %v3598, 16
      %v3676 = vpop.permute.xlu0 %3675
      %3677 = vrot.lane.b32.xlu0 %v3599, 16
      %v3678 = vpop.permute.xlu0 %3677
      %3679 = vrot.lane.b32.xlu0 %v3600, 16
      %v3680 = vpop.permute.xlu0 %3679
      %3681 = vrot.lane.b32.xlu0 %v3601, 16
      %v3682 = vpop.permute.xlu0 %3681
      %3683 = vrot.lane.b32.xlu0 %v3602, 16
      %v3684 = vpop.permute.xlu0 %3683
      %3685 = vrot.lane.b32.xlu0 %v3603, 16
      %v3686 = vpop.permute.xlu0 %3685
      %3687 = vrot.lane.b32.xlu0 %v3604, 16
      %v3688 = vpop.permute.xlu0 %3687
      %3689 = vrot.lane.b32.xlu0 %v3605, 16
      %v3690 = vpop.permute.xlu0 %3689
      %3691 = vrot.lane.b32.xlu0 %v3606, 16
      %v3692 = vpop.permute.xlu0 %3691
      %3693 = vrot.lane.b32.xlu0 %v3607, 16
      %v3694 = vpop.permute.xlu0 %3693
      %3695 = vrot.lane.b32.xlu0 %v3608, 16
      %v3696 = vpop.permute.xlu0 %3695
      %3697 = vrot.lane.b32.xlu0 %v3609, 16
      %v3698 = vpop.permute.xlu0 %3697
      %3699 = vrot.lane.b32.xlu0 %v3610, 16
      %v3700 = vpop.permute.xlu0 %3699
      %3701 = vrot.lane.b32.xlu0 %v3611, 16
      %v3702 = vpop.permute.xlu0 %3701
      %3703 = vrot.lane.b32.xlu0 %v3612, 16
      %v3704 = vpop.permute.xlu0 %3703
      %3705 = vrot.lane.b32.xlu0 %v3613, 16
      %v3706 = vpop.permute.xlu0 %3705
      %3707 = vrot.lane.b32.xlu0 %v3614, 16
      %v3708 = vpop.permute.xlu0 %3707
      %3709 = vrot.lane.b32.xlu0 %v3615, 16
      %v3710 = vpop.permute.xlu0 %3709
      %3711 = vrot.lane.b32.xlu0 %v3616, 16
      %v3712 = vpop.permute.xlu0 %3711
      %vm3745 = vcmask 195712
      %3746 = vst.msk [vmem:[#allocation5] sm:$0xff] %vm3745, %v3650
      %3747 = vst.msk [vmem:[#allocation5 + $0x8] sm:$0xff] %vm3745, %v3652
      %3748 = vst.msk [vmem:[#allocation5 + $0x10] sm:$0xff] %vm3745, %v3654
      %3749 = vst.msk [vmem:[#allocation5 + $0x18] sm:$0xff] %vm3745, %v3656
      %3750 = vst.msk [vmem:[#allocation5 + $0x20] sm:$0xff] %vm3745, %v3658
      %3751 = vst.msk [vmem:[#allocation5 + $0x28] sm:$0xff] %vm3745, %v3660
      %3752 = vst.msk [vmem:[#allocation5 + $0x30] sm:$0xff] %vm3745, %v3662
      %3753 = vst.msk [vmem:[#allocation5 + $0x38] sm:$0xff] %vm3745, %v3664
      %3754 = vst.msk [vmem:[#allocation5 + $0x40] sm:$0xff] %vm3745, %v3666
      %3755 = vst.msk [vmem:[#allocation5 + $0x48] sm:$0xff] %vm3745, %v3668
      %3756 = vst.msk [vmem:[#allocation5 + $0x50] sm:$0xff] %vm3745, %v3670
      %3757 = vst.msk [vmem:[#allocation5 + $0x58] sm:$0xff] %vm3745, %v3672
      %3758 = vst.msk [vmem:[#allocation5 + $0x60] sm:$0xff] %vm3745, %v3674
      %3759 = vst.msk [vmem:[#allocation5 + $0x68] sm:$0xff] %vm3745, %v3676
      %3760 = vst.msk [vmem:[#allocation5 + $0x70] sm:$0xff] %vm3745, %v3678
      %3761 = vst.msk [vmem:[#allocation5 + $0x78] sm:$0xff] %vm3745, %v3680
      %3762 = vst.msk [vmem:[#allocation5 + $0x80] sm:$0xff] %vm3745, %v3682
      %3763 = vst.msk [vmem:[#allocation5 + $0x88] sm:$0xff] %vm3745, %v3684
      %3764 = vst.msk [vmem:[#allocation5 + $0x90] sm:$0xff] %vm3745, %v3686
      %3765 = vst.msk [vmem:[#allocation5 + $0x98] sm:$0xff] %vm3745, %v3688
      %3766 = vst.msk [vmem:[#allocation5 + $0xa0] sm:$0xff] %vm3745, %v3690
      %3767 = vst.msk [vmem:[#allocation5 + $0xa8] sm:$0xff] %vm3745, %v3692
      %3768 = vst.msk [vmem:[#allocation5 + $0xb0] sm:$0xff] %vm3745, %v3694
      %3769 = vst.msk [vmem:[#allocation5 + $0xb8] sm:$0xff] %vm3745, %v3696
      %3770 = vst.msk [vmem:[#allocation5 + $0xc0] sm:$0xff] %vm3745, %v3698
      %3771 = vst.msk [vmem:[#allocation5 + $0xc8] sm:$0xff] %vm3745, %v3700
      %3772 = vst.msk [vmem:[#allocation5 + $0xd0] sm:$0xff] %vm3745, %v3702
      %3773 = vst.msk [vmem:[#allocation5 + $0xd8] sm:$0xff] %vm3745, %v3704
      %3774 = vst.msk [vmem:[#allocation5 + $0xe0] sm:$0xff] %vm3745, %v3706
      %3775 = vst.msk [vmem:[#allocation5 + $0xe8] sm:$0xff] %vm3745, %v3708
      %3776 = vst.msk [vmem:[#allocation5 + $0xf0] sm:$0xff] %vm3745, %v3710
      %3777 = vst.msk [vmem:[#allocation5 + $0xf8] sm:$0xff] %vm3745, %v3712
      %v3778 = vld [vmem:[%s3296] sm:$0xff]
      %v3779 = vld [vmem:[%s3296 + $0x8] sm:$0xff]
      %v3780 = vld [vmem:[%s3296 + $0x18] sm:$0xff]
      %v3781 = vld [vmem:[%s3296 + $0x20] sm:$0xff]
      %v3782 = vld [vmem:[%s3296 + $0x30] sm:$0xff]
      %v3783 = vld [vmem:[%s3296 + $0x38] sm:$0xff]
      %v3784 = vld [vmem:[%s3296 + $0x48] sm:$0xff]
      %v3785 = vld [vmem:[%s3296 + $0x50] sm:$0xff]
      %v3786 = vld [vmem:[%s3296 + $0x60] sm:$0xff]
      %v3787 = vld [vmem:[%s3296 + $0x68] sm:$0xff]
      %v3788 = vld [vmem:[%s3296 + $0x78] sm:$0xff]
      %v3789 = vld [vmem:[%s3296 + $0x80] sm:$0xff]
      %v3790 = vld [vmem:[%s3296 + $0x90] sm:$0xff]
      %v3791 = vld [vmem:[%s3296 + $0x98] sm:$0xff]
      %v3792 = vld [vmem:[%s3296 + $0xa8] sm:$0xff]
      %v3793 = vld [vmem:[%s3296 + $0xb0] sm:$0xff]
      %v3794 = vld [vmem:[%s3296 + $0xc0] sm:$0xff]
      %v3795 = vld [vmem:[%s3296 + $0xc8] sm:$0xff]
      %v3796 = vld [vmem:[%s3296 + $0xd8] sm:$0xff]
      %v3797 = vld [vmem:[%s3296 + $0xe0] sm:$0xff]
      %v3798 = vld [vmem:[%s3296 + $0xf0] sm:$0xff]
      %v3799 = vld [vmem:[%s3296 + $0xf8] sm:$0xff]
      %v3800 = vld [vmem:[%s3296 + $0x108] sm:$0xff]
      %v3801 = vld [vmem:[%s3296 + $0x110] sm:$0xff]
      %v3802 = vld [vmem:[%s3296 + $0x120] sm:$0xff]
      %v3803 = vld [vmem:[%s3296 + $0x128] sm:$0xff]
      %v3804 = vld [vmem:[%s3296 + $0x138] sm:$0xff]
      %v3805 = vld [vmem:[%s3296 + $0x140] sm:$0xff]
      %v3806 = vld [vmem:[%s3296 + $0x150] sm:$0xff]
      %v3807 = vld [vmem:[%s3296 + $0x158] sm:$0xff]
      %v3808 = vld [vmem:[%s3296 + $0x168] sm:$0xff]
      %v3809 = vld [vmem:[%s3296 + $0x170] sm:$0xff]
      %3842 = vrot.lane.b32.xlu0 %v3778, 24
      %v3843 = vpop.permute.xlu0 %3842
      %3844 = vrot.lane.b32.xlu0 %v3779, 24
      %v3845 = vpop.permute.xlu0 %3844
      %3846 = vrot.lane.b32.xlu0 %v3780, 24
      %v3847 = vpop.permute.xlu0 %3846
      %3848 = vrot.lane.b32.xlu0 %v3781, 24
      %v3849 = vpop.permute.xlu0 %3848
      %3850 = vrot.lane.b32.xlu0 %v3782, 24
      %v3851 = vpop.permute.xlu0 %3850
      %3852 = vrot.lane.b32.xlu0 %v3783, 24
      %v3853 = vpop.permute.xlu0 %3852
      %3854 = vrot.lane.b32.xlu0 %v3784, 24
      %v3855 = vpop.permute.xlu0 %3854
      %3856 = vrot.lane.b32.xlu0 %v3785, 24
      %v3857 = vpop.permute.xlu0 %3856
      %3858 = vrot.lane.b32.xlu0 %v3786, 24
      %v3859 = vpop.permute.xlu0 %3858
      %3860 = vrot.lane.b32.xlu0 %v3787, 24
      %v3861 = vpop.permute.xlu0 %3860
      %3862 = vrot.lane.b32.xlu0 %v3788, 24
      %v3863 = vpop.permute.xlu0 %3862
      %3864 = vrot.lane.b32.xlu0 %v3789, 24
      %v3865 = vpop.permute.xlu0 %3864
      %3866 = vrot.lane.b32.xlu0 %v3790, 24
      %v3867 = vpop.permute.xlu0 %3866
      %3868 = vrot.lane.b32.xlu0 %v3791, 24
      %v3869 = vpop.permute.xlu0 %3868
      %3870 = vrot.lane.b32.xlu0 %v3792, 24
      %v3871 = vpop.permute.xlu0 %3870
      %3872 = vrot.lane.b32.xlu0 %v3793, 24
      %v3873 = vpop.permute.xlu0 %3872
      %3874 = vrot.lane.b32.xlu0 %v3794, 24
      %v3875 = vpop.permute.xlu0 %3874
      %3876 = vrot.lane.b32.xlu0 %v3795, 24
      %v3877 = vpop.permute.xlu0 %3876
      %3878 = vrot.lane.b32.xlu0 %v3796, 24
      %v3879 = vpop.permute.xlu0 %3878
      %3880 = vrot.lane.b32.xlu0 %v3797, 24
      %v3881 = vpop.permute.xlu0 %3880
      %3882 = vrot.lane.b32.xlu0 %v3798, 24
      %v3883 = vpop.permute.xlu0 %3882
      %3884 = vrot.lane.b32.xlu0 %v3799, 24
      %v3885 = vpop.permute.xlu0 %3884
      %3886 = vrot.lane.b32.xlu0 %v3800, 24
      %v3887 = vpop.permute.xlu0 %3886
      %3888 = vrot.lane.b32.xlu0 %v3801, 24
      %v3889 = vpop.permute.xlu0 %3888
      %3890 = vrot.lane.b32.xlu0 %v3802, 24
      %v3891 = vpop.permute.xlu0 %3890
      %3892 = vrot.lane.b32.xlu0 %v3803, 24
      %v3893 = vpop.permute.xlu0 %3892
      %3894 = vrot.lane.b32.xlu0 %v3804, 24
      %v3895 = vpop.permute.xlu0 %3894
      %3896 = vrot.lane.b32.xlu0 %v3805, 24
      %v3897 = vpop.permute.xlu0 %3896
      %3898 = vrot.lane.b32.xlu0 %v3806, 24
      %v3899 = vpop.permute.xlu0 %3898
      %3900 = vrot.lane.b32.xlu0 %v3807, 24
      %v3901 = vpop.permute.xlu0 %3900
      %3902 = vrot.lane.b32.xlu0 %v3808, 24
      %v3903 = vpop.permute.xlu0 %3902
      %3904 = vrot.lane.b32.xlu0 %v3809, 24
      %v3905 = vpop.permute.xlu0 %3904
      %vm3938 = vcmask 261312
      %3939 = vst.msk [vmem:[#allocation5] sm:$0xff] %vm3938, %v3843
      %3940 = vst.msk [vmem:[#allocation5 + $0x8] sm:$0xff] %vm3938, %v3845
      %3941 = vst.msk [vmem:[#allocation5 + $0x10] sm:$0xff] %vm3938, %v3847
      %3942 = vst.msk [vmem:[#allocation5 + $0x18] sm:$0xff] %vm3938, %v3849
      %3943 = vst.msk [vmem:[#allocation5 + $0x20] sm:$0xff] %vm3938, %v3851
      %3944 = vst.msk [vmem:[#allocation5 + $0x28] sm:$0xff] %vm3938, %v3853
      %3945 = vst.msk [vmem:[#allocation5 + $0x30] sm:$0xff] %vm3938, %v3855
      %3946 = vst.msk [vmem:[#allocation5 + $0x38] sm:$0xff] %vm3938, %v3857
      %3947 = vst.msk [vmem:[#allocation5 + $0x40] sm:$0xff] %vm3938, %v3859
      %3948 = vst.msk [vmem:[#allocation5 + $0x48] sm:$0xff] %vm3938, %v3861
      %3949 = vst.msk [vmem:[#allocation5 + $0x50] sm:$0xff] %vm3938, %v3863
      %3950 = vst.msk [vmem:[#allocation5 + $0x58] sm:$0xff] %vm3938, %v3865
      %3951 = vst.msk [vmem:[#allocation5 + $0x60] sm:$0xff] %vm3938, %v3867
      %3952 = vst.msk [vmem:[#allocation5 + $0x68] sm:$0xff] %vm3938, %v3869
      %3953 = vst.msk [vmem:[#allocation5 + $0x70] sm:$0xff] %vm3938, %v3871
      %3954 = vst.msk [vmem:[#allocation5 + $0x78] sm:$0xff] %vm3938, %v3873
      %3955 = vst.msk [vmem:[#allocation5 + $0x80] sm:$0xff] %vm3938, %v3875
      %3956 = vst.msk [vmem:[#allocation5 + $0x88] sm:$0xff] %vm3938, %v3877
      %3957 = vst.msk [vmem:[#allocation5 + $0x90] sm:$0xff] %vm3938, %v3879
      %3958 = vst.msk [vmem:[#allocation5 + $0x98] sm:$0xff] %vm3938, %v3881
      %3959 = vst.msk [vmem:[#allocation5 + $0xa0] sm:$0xff] %vm3938, %v3883
      %3960 = vst.msk [vmem:[#allocation5 + $0xa8] sm:$0xff] %vm3938, %v3885
      %3961 = vst.msk [vmem:[#allocation5 + $0xb0] sm:$0xff] %vm3938, %v3887
      %3962 = vst.msk [vmem:[#allocation5 + $0xb8] sm:$0xff] %vm3938, %v3889
      %3963 = vst.msk [vmem:[#allocation5 + $0xc0] sm:$0xff] %vm3938, %v3891
      %3964 = vst.msk [vmem:[#allocation5 + $0xc8] sm:$0xff] %vm3938, %v3893
      %3965 = vst.msk [vmem:[#allocation5 + $0xd0] sm:$0xff] %vm3938, %v3895
      %3966 = vst.msk [vmem:[#allocation5 + $0xd8] sm:$0xff] %vm3938, %v3897
      %3967 = vst.msk [vmem:[#allocation5 + $0xe0] sm:$0xff] %vm3938, %v3899
      %3968 = vst.msk [vmem:[#allocation5 + $0xe8] sm:$0xff] %vm3938, %v3901
      %3969 = vst.msk [vmem:[#allocation5 + $0xf0] sm:$0xff] %vm3938, %v3903
      %3970 = vst.msk [vmem:[#allocation5 + $0xf8] sm:$0xff] %vm3938, %v3905
      %v3971 = vld [vmem:[%s3296 + $0x1] sm:$0xff]
      %v3972 = vld [vmem:[%s3296 + $0x9] sm:$0xff]
      %v3973 = vld [vmem:[%s3296 + $0x19] sm:$0xff]
      %v3974 = vld [vmem:[%s3296 + $0x21] sm:$0xff]
      %v3975 = vld [vmem:[%s3296 + $0x31] sm:$0xff]
      %v3976 = vld [vmem:[%s3296 + $0x39] sm:$0xff]
      %v3977 = vld [vmem:[%s3296 + $0x49] sm:$0xff]
      %v3978 = vld [vmem:[%s3296 + $0x51] sm:$0xff]
      %v3979 = vld [vmem:[%s3296 + $0x61] sm:$0xff]
      %v3980 = vld [vmem:[%s3296 + $0x69] sm:$0xff]
      %v3981 = vld [vmem:[%s3296 + $0x79] sm:$0xff]
      %v3982 = vld [vmem:[%s3296 + $0x81] sm:$0xff]
      %v3983 = vld [vmem:[%s3296 + $0x91] sm:$0xff]
      %v3984 = vld [vmem:[%s3296 + $0x99] sm:$0xff]
      %v3985 = vld [vmem:[%s3296 + $0xa9] sm:$0xff]
      %v3986 = vld [vmem:[%s3296 + $0xb1] sm:$0xff]
      %v3987 = vld [vmem:[%s3296 + $0xc1] sm:$0xff]
      %v3988 = vld [vmem:[%s3296 + $0xc9] sm:$0xff]
      %v3989 = vld [vmem:[%s3296 + $0xd9] sm:$0xff]
      %v3990 = vld [vmem:[%s3296 + $0xe1] sm:$0xff]
      %v3991 = vld [vmem:[%s3296 + $0xf1] sm:$0xff]
      %v3992 = vld [vmem:[%s3296 + $0xf9] sm:$0xff]
      %v3993 = vld [vmem:[%s3296 + $0x109] sm:$0xff]
      %v3994 = vld [vmem:[%s3296 + $0x111] sm:$0xff]
      %v3995 = vld [vmem:[%s3296 + $0x121] sm:$0xff]
      %v3996 = vld [vmem:[%s3296 + $0x129] sm:$0xff]
      %v3997 = vld [vmem:[%s3296 + $0x139] sm:$0xff]
      %v3998 = vld [vmem:[%s3296 + $0x141] sm:$0xff]
      %v3999 = vld [vmem:[%s3296 + $0x151] sm:$0xff]
      %v4000 = vld [vmem:[%s3296 + $0x159] sm:$0xff]
      %v4001 = vld [vmem:[%s3296 + $0x169] sm:$0xff]
      %v4002 = vld [vmem:[%s3296 + $0x171] sm:$0xff]
      %4035 = vrot.lane.b32.xlu0 %v3971, 32
      %v4036 = vpop.permute.xlu0 %4035
      %4037 = vrot.lane.b32.xlu0 %v3972, 32
      %v4038 = vpop.permute.xlu0 %4037
      %4039 = vrot.lane.b32.xlu0 %v3973, 32
      %v4040 = vpop.permute.xlu0 %4039
      %4041 = vrot.lane.b32.xlu0 %v3974, 32
      %v4042 = vpop.permute.xlu0 %4041
      %4043 = vrot.lane.b32.xlu0 %v3975, 32
      %v4044 = vpop.permute.xlu0 %4043
      %4045 = vrot.lane.b32.xlu0 %v3976, 32
      %v4046 = vpop.permute.xlu0 %4045
      %4047 = vrot.lane.b32.xlu0 %v3977, 32
      %v4048 = vpop.permute.xlu0 %4047
      %4049 = vrot.lane.b32.xlu0 %v3978, 32
      %v4050 = vpop.permute.xlu0 %4049
      %4051 = vrot.lane.b32.xlu0 %v3979, 32
      %v4052 = vpop.permute.xlu0 %4051
      %4053 = vrot.lane.b32.xlu0 %v3980, 32
      %v4054 = vpop.permute.xlu0 %4053
      %4055 = vrot.lane.b32.xlu0 %v3981, 32
      %v4056 = vpop.permute.xlu0 %4055
      %4057 = vrot.lane.b32.xlu0 %v3982, 32
      %v4058 = vpop.permute.xlu0 %4057
      %4059 = vrot.lane.b32.xlu0 %v3983, 32
      %v4060 = vpop.permute.xlu0 %4059
      %4061 = vrot.lane.b32.xlu0 %v3984, 32
      %v4062 = vpop.permute.xlu0 %4061
      %4063 = vrot.lane.b32.xlu0 %v3985, 32
      %v4064 = vpop.permute.xlu0 %4063
      %4065 = vrot.lane.b32.xlu0 %v3986, 32
      %v4066 = vpop.permute.xlu0 %4065
      %4067 = vrot.lane.b32.xlu0 %v3987, 32
      %v4068 = vpop.permute.xlu0 %4067
      %4069 = vrot.lane.b32.xlu0 %v3988, 32
      %v4070 = vpop.permute.xlu0 %4069
      %4071 = vrot.lane.b32.xlu0 %v3989, 32
      %v4072 = vpop.permute.xlu0 %4071
      %4073 = vrot.lane.b32.xlu0 %v3990, 32
      %v4074 = vpop.permute.xlu0 %4073
      %4075 = vrot.lane.b32.xlu0 %v3991, 32
      %v4076 = vpop.permute.xlu0 %4075
      %4077 = vrot.lane.b32.xlu0 %v3992, 32
      %v4078 = vpop.permute.xlu0 %4077
      %4079 = vrot.lane.b32.xlu0 %v3993, 32
      %v4080 = vpop.permute.xlu0 %4079
      %4081 = vrot.lane.b32.xlu0 %v3994, 32
      %v4082 = vpop.permute.xlu0 %4081
      %4083 = vrot.lane.b32.xlu0 %v3995, 32
      %v4084 = vpop.permute.xlu0 %4083
      %4085 = vrot.lane.b32.xlu0 %v3996, 32
      %v4086 = vpop.permute.xlu0 %4085
      %4087 = vrot.lane.b32.xlu0 %v3997, 32
      %v4088 = vpop.permute.xlu0 %4087
      %4089 = vrot.lane.b32.xlu0 %v3998, 32
      %v4090 = vpop.permute.xlu0 %4089
      %4091 = vrot.lane.b32.xlu0 %v3999, 32
      %v4092 = vpop.permute.xlu0 %4091
      %4093 = vrot.lane.b32.xlu0 %v4000, 32
      %v4094 = vpop.permute.xlu0 %4093
      %4095 = vrot.lane.b32.xlu0 %v4001, 32
      %v4096 = vpop.permute.xlu0 %4095
      %4097 = vrot.lane.b32.xlu0 %v4002, 32
      %v4098 = vpop.permute.xlu0 %4097
      %vm4131 = vcmask 326912
      %4132 = vst.msk [vmem:[#allocation5] sm:$0xff] %vm4131, %v4036
      %4133 = vst.msk [vmem:[#allocation5 + $0x8] sm:$0xff] %vm4131, %v4038
      %4134 = vst.msk [vmem:[#allocation5 + $0x10] sm:$0xff] %vm4131, %v4040
      %4135 = vst.msk [vmem:[#allocation5 + $0x18] sm:$0xff] %vm4131, %v4042
      %4136 = vst.msk [vmem:[#allocation5 + $0x20] sm:$0xff] %vm4131, %v4044
      %4137 = vst.msk [vmem:[#allocation5 + $0x28] sm:$0xff] %vm4131, %v4046
      %4138 = vst.msk [vmem:[#allocation5 + $0x30] sm:$0xff] %vm4131, %v4048
      %4139 = vst.msk [vmem:[#allocation5 + $0x38] sm:$0xff] %vm4131, %v4050
      %4140 = vst.msk [vmem:[#allocation5 + $0x40] sm:$0xff] %vm4131, %v4052
      %4141 = vst.msk [vmem:[#allocation5 + $0x48] sm:$0xff] %vm4131, %v4054
      %4142 = vst.msk [vmem:[#allocation5 + $0x50] sm:$0xff] %vm4131, %v4056
      %4143 = vst.msk [vmem:[#allocation5 + $0x58] sm:$0xff] %vm4131, %v4058
      %4144 = vst.msk [vmem:[#allocation5 + $0x60] sm:$0xff] %vm4131, %v4060
      %4145 = vst.msk [vmem:[#allocation5 + $0x68] sm:$0xff] %vm4131, %v4062
      %4146 = vst.msk [vmem:[#allocation5 + $0x70] sm:$0xff] %vm4131, %v4064
      %4147 = vst.msk [vmem:[#allocation5 + $0x78] sm:$0xff] %vm4131, %v4066
      %4148 = vst.msk [vmem:[#allocation5 + $0x80] sm:$0xff] %vm4131, %v4068
      %4149 = vst.msk [vmem:[#allocation5 + $0x88] sm:$0xff] %vm4131, %v4070
      %4150 = vst.msk [vmem:[#allocation5 + $0x90] sm:$0xff] %vm4131, %v4072
      %4151 = vst.msk [vmem:[#allocation5 + $0x98] sm:$0xff] %vm4131, %v4074
      %4152 = vst.msk [vmem:[#allocation5 + $0xa0] sm:$0xff] %vm4131, %v4076
      %4153 = vst.msk [vmem:[#allocation5 + $0xa8] sm:$0xff] %vm4131, %v4078
      %4154 = vst.msk [vmem:[#allocation5 + $0xb0] sm:$0xff] %vm4131, %v4080
      %4155 = vst.msk [vmem:[#allocation5 + $0xb8] sm:$0xff] %vm4131, %v4082
      %4156 = vst.msk [vmem:[#allocation5 + $0xc0] sm:$0xff] %vm4131, %v4084
      %4157 = vst.msk [vmem:[#allocation5 + $0xc8] sm:$0xff] %vm4131, %v4086
      %4158 = vst.msk [vmem:[#allocation5 + $0xd0] sm:$0xff] %vm4131, %v4088
      %4159 = vst.msk [vmem:[#allocation5 + $0xd8] sm:$0xff] %vm4131, %v4090
      %4160 = vst.msk [vmem:[#allocation5 + $0xe0] sm:$0xff] %vm4131, %v4092
      %4161 = vst.msk [vmem:[#allocation5 + $0xe8] sm:$0xff] %vm4131, %v4094
      %4162 = vst.msk [vmem:[#allocation5 + $0xf0] sm:$0xff] %vm4131, %v4096
      %4163 = vst.msk [vmem:[#allocation5 + $0xf8] sm:$0xff] %vm4131, %v4098
      %v4164 = vld [vmem:[%s3296 + $0x2] sm:$0xff]
      %v4165 = vld [vmem:[%s3296 + $0xa] sm:$0xff]
      %v4166 = vld [vmem:[%s3296 + $0x1a] sm:$0xff]
      %v4167 = vld [vmem:[%s3296 + $0x22] sm:$0xff]
      %v4168 = vld [vmem:[%s3296 + $0x32] sm:$0xff]
      %v4169 = vld [vmem:[%s3296 + $0x3a] sm:$0xff]
      %v4170 = vld [vmem:[%s3296 + $0x4a] sm:$0xff]
      %v4171 = vld [vmem:[%s3296 + $0x52] sm:$0xff]
      %v4172 = vld [vmem:[%s3296 + $0x62] sm:$0xff]
      %v4173 = vld [vmem:[%s3296 + $0x6a] sm:$0xff]
      %v4174 = vld [vmem:[%s3296 + $0x7a] sm:$0xff]
      %v4175 = vld [vmem:[%s3296 + $0x82] sm:$0xff]
      %v4176 = vld [vmem:[%s3296 + $0x92] sm:$0xff]
      %v4177 = vld [vmem:[%s3296 + $0x9a] sm:$0xff]
      %v4178 = vld [vmem:[%s3296 + $0xaa] sm:$0xff]
      %v4179 = vld [vmem:[%s3296 + $0xb2] sm:$0xff]
      %v4180 = vld [vmem:[%s3296 + $0xc2] sm:$0xff]
      %v4181 = vld [vmem:[%s3296 + $0xca] sm:$0xff]
      %v4182 = vld [vmem:[%s3296 + $0xda] sm:$0xff]
      %v4183 = vld [vmem:[%s3296 + $0xe2] sm:$0xff]
      %v4184 = vld [vmem:[%s3296 + $0xf2] sm:$0xff]
      %v4185 = vld [vmem:[%s3296 + $0xfa] sm:$0xff]
      %v4186 = vld [vmem:[%s3296 + $0x10a] sm:$0xff]
      %v4187 = vld [vmem:[%s3296 + $0x112] sm:$0xff]
      %v4188 = vld [vmem:[%s3296 + $0x122] sm:$0xff]
      %v4189 = vld [vmem:[%s3296 + $0x12a] sm:$0xff]
      %v4190 = vld [vmem:[%s3296 + $0x13a] sm:$0xff]
      %v4191 = vld [vmem:[%s3296 + $0x142] sm:$0xff]
      %v4192 = vld [vmem:[%s3296 + $0x152] sm:$0xff]
      %v4193 = vld [vmem:[%s3296 + $0x15a] sm:$0xff]
      %v4194 = vld [vmem:[%s3296 + $0x16a] sm:$0xff]
      %v4195 = vld [vmem:[%s3296 + $0x172] sm:$0xff]
      %4228 = vrot.lane.b32.xlu0 %v4164, 40
      %v4229 = vpop.permute.xlu0 %4228
      %4230 = vrot.lane.b32.xlu0 %v4165, 40
      %v4231 = vpop.permute.xlu0 %4230
      %4232 = vrot.lane.b32.xlu0 %v4166, 40
      %v4233 = vpop.permute.xlu0 %4232
      %4234 = vrot.lane.b32.xlu0 %v4167, 40
      %v4235 = vpop.permute.xlu0 %4234
      %4236 = vrot.lane.b32.xlu0 %v4168, 40
      %v4237 = vpop.permute.xlu0 %4236
      %4238 = vrot.lane.b32.xlu0 %v4169, 40
      %v4239 = vpop.permute.xlu0 %4238
      %4240 = vrot.lane.b32.xlu0 %v4170, 40
      %v4241 = vpop.permute.xlu0 %4240
      %4242 = vrot.lane.b32.xlu0 %v4171, 40
      %v4243 = vpop.permute.xlu0 %4242
      %4244 = vrot.lane.b32.xlu0 %v4172, 40
      %v4245 = vpop.permute.xlu0 %4244
      %4246 = vrot.lane.b32.xlu0 %v4173, 40
      %v4247 = vpop.permute.xlu0 %4246
      %4248 = vrot.lane.b32.xlu0 %v4174, 40
      %v4249 = vpop.permute.xlu0 %4248
      %4250 = vrot.lane.b32.xlu0 %v4175, 40
      %v4251 = vpop.permute.xlu0 %4250
      %4252 = vrot.lane.b32.xlu0 %v4176, 40
      %v4253 = vpop.permute.xlu0 %4252
      %4254 = vrot.lane.b32.xlu0 %v4177, 40
      %v4255 = vpop.permute.xlu0 %4254
      %4256 = vrot.lane.b32.xlu0 %v4178, 40
      %v4257 = vpop.permute.xlu0 %4256
      %4258 = vrot.lane.b32.xlu0 %v4179, 40
      %v4259 = vpop.permute.xlu0 %4258
      %4260 = vrot.lane.b32.xlu0 %v4180, 40
      %v4261 = vpop.permute.xlu0 %4260
      %4262 = vrot.lane.b32.xlu0 %v4181, 40
      %v4263 = vpop.permute.xlu0 %4262
      %4264 = vrot.lane.b32.xlu0 %v4182, 40
      %v4265 = vpop.permute.xlu0 %4264
      %4266 = vrot.lane.b32.xlu0 %v4183, 40
      %v4267 = vpop.permute.xlu0 %4266
      %4268 = vrot.lane.b32.xlu0 %v4184, 40
      %v4269 = vpop.permute.xlu0 %4268
      %4270 = vrot.lane.b32.xlu0 %v4185, 40
      %v4271 = vpop.permute.xlu0 %4270
      %4272 = vrot.lane.b32.xlu0 %v4186, 40
      %v4273 = vpop.permute.xlu0 %4272
      %4274 = vrot.lane.b32.xlu0 %v4187, 40
      %v4275 = vpop.permute.xlu0 %4274
      %4276 = vrot.lane.b32.xlu0 %v4188, 40
      %v4277 = vpop.permute.xlu0 %4276
      %4278 = vrot.lane.b32.xlu0 %v4189, 40
      %v4279 = vpop.permute.xlu0 %4278
      %4280 = vrot.lane.b32.xlu0 %v4190, 40
      %v4281 = vpop.permute.xlu0 %4280
      %4282 = vrot.lane.b32.xlu0 %v4191, 40
      %v4283 = vpop.permute.xlu0 %4282
      %4284 = vrot.lane.b32.xlu0 %v4192, 40
      %v4285 = vpop.permute.xlu0 %4284
      %4286 = vrot.lane.b32.xlu0 %v4193, 40
      %v4287 = vpop.permute.xlu0 %4286
      %4288 = vrot.lane.b32.xlu0 %v4194, 40
      %v4289 = vpop.permute.xlu0 %4288
      %4290 = vrot.lane.b32.xlu0 %v4195, 40
      %v4291 = vpop.permute.xlu0 %4290
      %vm4324 = vcmask 392512
      %4325 = vst.msk [vmem:[#allocation5] sm:$0xff] %vm4324, %v4229
      %4326 = vst.msk [vmem:[#allocation5 + $0x8] sm:$0xff] %vm4324, %v4231
      %4327 = vst.msk [vmem:[#allocation5 + $0x10] sm:$0xff] %vm4324, %v4233
      %4328 = vst.msk [vmem:[#allocation5 + $0x18] sm:$0xff] %vm4324, %v4235
      %4329 = vst.msk [vmem:[#allocation5 + $0x20] sm:$0xff] %vm4324, %v4237
      %4330 = vst.msk [vmem:[#allocation5 + $0x28] sm:$0xff] %vm4324, %v4239
      %4331 = vst.msk [vmem:[#allocation5 + $0x30] sm:$0xff] %vm4324, %v4241
      %4332 = vst.msk [vmem:[#allocation5 + $0x38] sm:$0xff] %vm4324, %v4243
      %4333 = vst.msk [vmem:[#allocation5 + $0x40] sm:$0xff] %vm4324, %v4245
      %4334 = vst.msk [vmem:[#allocation5 + $0x48] sm:$0xff] %vm4324, %v4247
      %4335 = vst.msk [vmem:[#allocation5 + $0x50] sm:$0xff] %vm4324, %v4249
      %4336 = vst.msk [vmem:[#allocation5 + $0x58] sm:$0xff] %vm4324, %v4251
      %4337 = vst.msk [vmem:[#allocation5 + $0x60] sm:$0xff] %vm4324, %v4253
      %4338 = vst.msk [vmem:[#allocation5 + $0x68] sm:$0xff] %vm4324, %v4255
      %4339 = vst.msk [vmem:[#allocation5 + $0x70] sm:$0xff] %vm4324, %v4257
      %4340 = vst.msk [vmem:[#allocation5 + $0x78] sm:$0xff] %vm4324, %v4259
      %4341 = vst.msk [vmem:[#allocation5 + $0x80] sm:$0xff] %vm4324, %v4261
      %4342 = vst.msk [vmem:[#allocation5 + $0x88] sm:$0xff] %vm4324, %v4263
      %4343 = vst.msk [vmem:[#allocation5 + $0x90] sm:$0xff] %vm4324, %v4265
      %4344 = vst.msk [vmem:[#allocation5 + $0x98] sm:$0xff] %vm4324, %v4267
      %4345 = vst.msk [vmem:[#allocation5 + $0xa0] sm:$0xff] %vm4324, %v4269
      %4346 = vst.msk [vmem:[#allocation5 + $0xa8] sm:$0xff] %vm4324, %v4271
      %4347 = vst.msk [vmem:[#allocation5 + $0xb0] sm:$0xff] %vm4324, %v4273
      %4348 = vst.msk [vmem:[#allocation5 + $0xb8] sm:$0xff] %vm4324, %v4275
      %4349 = vst.msk [vmem:[#allocation5 + $0xc0] sm:$0xff] %vm4324, %v4277
      %4350 = vst.msk [vmem:[#allocation5 + $0xc8] sm:$0xff] %vm4324, %v4279
      %4351 = vst.msk [vmem:[#allocation5 + $0xd0] sm:$0xff] %vm4324, %v4281
      %4352 = vst.msk [vmem:[#allocation5 + $0xd8] sm:$0xff] %vm4324, %v4283
      %4353 = vst.msk [vmem:[#allocation5 + $0xe0] sm:$0xff] %vm4324, %v4285
      %4354 = vst.msk [vmem:[#allocation5 + $0xe8] sm:$0xff] %vm4324, %v4287
      %4355 = vst.msk [vmem:[#allocation5 + $0xf0] sm:$0xff] %vm4324, %v4289
      %4356 = vst.msk [vmem:[#allocation5 + $0xf8] sm:$0xff] %vm4324, %v4291
      %s4357 = scalar_lea.vmem [#allocation4], 48
      %v4358 = vld [vmem:[%s4357] sm:$0xff]
      %v4359 = vld [vmem:[%s4357 + $0x8] sm:$0xff]
      %v4360 = vld [vmem:[%s4357 + $0x18] sm:$0xff]
      %v4361 = vld [vmem:[%s4357 + $0x20] sm:$0xff]
      %v4362 = vld [vmem:[%s4357 + $0x30] sm:$0xff]
      %v4363 = vld [vmem:[%s4357 + $0x38] sm:$0xff]
      %v4364 = vld [vmem:[%s4357 + $0x48] sm:$0xff]
      %v4365 = vld [vmem:[%s4357 + $0x50] sm:$0xff]
      %v4366 = vld [vmem:[%s4357 + $0x60] sm:$0xff]
      %v4367 = vld [vmem:[%s4357 + $0x68] sm:$0xff]
      %v4368 = vld [vmem:[%s4357 + $0x78] sm:$0xff]
      %v4369 = vld [vmem:[%s4357 + $0x80] sm:$0xff]
      %v4370 = vld [vmem:[%s4357 + $0x90] sm:$0xff]
      %v4371 = vld [vmem:[%s4357 + $0x98] sm:$0xff]
      %v4372 = vld [vmem:[%s4357 + $0xa8] sm:$0xff]
      %v4373 = vld [vmem:[%s4357 + $0xb0] sm:$0xff]
      %v4374 = vld [vmem:[%s4357 + $0xc0] sm:$0xff]
      %v4375 = vld [vmem:[%s4357 + $0xc8] sm:$0xff]
      %v4376 = vld [vmem:[%s4357 + $0xd8] sm:$0xff]
      %v4377 = vld [vmem:[%s4357 + $0xe0] sm:$0xff]
      %v4378 = vld [vmem:[%s4357 + $0xf0] sm:$0xff]
      %v4379 = vld [vmem:[%s4357 + $0xf8] sm:$0xff]
      %v4380 = vld [vmem:[%s4357 + $0x108] sm:$0xff]
      %v4381 = vld [vmem:[%s4357 + $0x110] sm:$0xff]
      %v4382 = vld [vmem:[%s4357 + $0x120] sm:$0xff]
      %v4383 = vld [vmem:[%s4357 + $0x128] sm:$0xff]
      %v4384 = vld [vmem:[%s4357 + $0x138] sm:$0xff]
      %v4385 = vld [vmem:[%s4357 + $0x140] sm:$0xff]
      %v4386 = vld [vmem:[%s4357 + $0x150] sm:$0xff]
      %v4387 = vld [vmem:[%s4357 + $0x158] sm:$0xff]
      %v4388 = vld [vmem:[%s4357 + $0x168] sm:$0xff]
      %v4389 = vld [vmem:[%s4357 + $0x170] sm:$0xff]
      %4422 = vrot.lane.b32.xlu0 %v4358, 48
      %v4423 = vpop.permute.xlu0 %4422
      %4424 = vrot.lane.b32.xlu0 %v4359, 48
      %v4425 = vpop.permute.xlu0 %4424
      %4426 = vrot.lane.b32.xlu0 %v4360, 48
      %v4427 = vpop.permute.xlu0 %4426
      %4428 = vrot.lane.b32.xlu0 %v4361, 48
      %v4429 = vpop.permute.xlu0 %4428
      %4430 = vrot.lane.b32.xlu0 %v4362, 48
      %v4431 = vpop.permute.xlu0 %4430
      %4432 = vrot.lane.b32.xlu0 %v4363, 48
      %v4433 = vpop.permute.xlu0 %4432
      %4434 = vrot.lane.b32.xlu0 %v4364, 48
      %v4435 = vpop.permute.xlu0 %4434
      %4436 = vrot.lane.b32.xlu0 %v4365, 48
      %v4437 = vpop.permute.xlu0 %4436
      %4438 = vrot.lane.b32.xlu0 %v4366, 48
      %v4439 = vpop.permute.xlu0 %4438
      %4440 = vrot.lane.b32.xlu0 %v4367, 48
      %v4441 = vpop.permute.xlu0 %4440
      %4442 = vrot.lane.b32.xlu0 %v4368, 48
      %v4443 = vpop.permute.xlu0 %4442
      %4444 = vrot.lane.b32.xlu0 %v4369, 48
      %v4445 = vpop.permute.xlu0 %4444
      %4446 = vrot.lane.b32.xlu0 %v4370, 48
      %v4447 = vpop.permute.xlu0 %4446
      %4448 = vrot.lane.b32.xlu0 %v4371, 48
      %v4449 = vpop.permute.xlu0 %4448
      %4450 = vrot.lane.b32.xlu0 %v4372, 48
      %v4451 = vpop.permute.xlu0 %4450
      %4452 = vrot.lane.b32.xlu0 %v4373, 48
      %v4453 = vpop.permute.xlu0 %4452
      %4454 = vrot.lane.b32.xlu0 %v4374, 48
      %v4455 = vpop.permute.xlu0 %4454
      %4456 = vrot.lane.b32.xlu0 %v4375, 48
      %v4457 = vpop.permute.xlu0 %4456
      %4458 = vrot.lane.b32.xlu0 %v4376, 48
      %v4459 = vpop.permute.xlu0 %4458
      %4460 = vrot.lane.b32.xlu0 %v4377, 48
      %v4461 = vpop.permute.xlu0 %4460
      %4462 = vrot.lane.b32.xlu0 %v4378, 48
      %v4463 = vpop.permute.xlu0 %4462
      %4464 = vrot.lane.b32.xlu0 %v4379, 48
      %v4465 = vpop.permute.xlu0 %4464
      %4466 = vrot.lane.b32.xlu0 %v4380, 48
      %v4467 = vpop.permute.xlu0 %4466
      %4468 = vrot.lane.b32.xlu0 %v4381, 48
      %v4469 = vpop.permute.xlu0 %4468
      %4470 = vrot.lane.b32.xlu0 %v4382, 48
      %v4471 = vpop.permute.xlu0 %4470
      %4472 = vrot.lane.b32.xlu0 %v4383, 48
      %v4473 = vpop.permute.xlu0 %4472
      %4474 = vrot.lane.b32.xlu0 %v4384, 48
      %v4475 = vpop.permute.xlu0 %4474
      %4476 = vrot.lane.b32.xlu0 %v4385, 48
      %v4477 = vpop.permute.xlu0 %4476
      %4478 = vrot.lane.b32.xlu0 %v4386, 48
      %v4479 = vpop.permute.xlu0 %4478
      %4480 = vrot.lane.b32.xlu0 %v4387, 48
      %v4481 = vpop.permute.xlu0 %4480
      %4482 = vrot.lane.b32.xlu0 %v4388, 48
      %v4483 = vpop.permute.xlu0 %4482
      %4484 = vrot.lane.b32.xlu0 %v4389, 48
      %v4485 = vpop.permute.xlu0 %4484
      %vm4518 = vcmask 458112
      %4519 = vst.msk [vmem:[#allocation5] sm:$0xff] %vm4518, %v4423
      %4520 = vst.msk [vmem:[#allocation5 + $0x8] sm:$0xff] %vm4518, %v4425
      %4521 = vst.msk [vmem:[#allocation5 + $0x10] sm:$0xff] %vm4518, %v4427
      %4522 = vst.msk [vmem:[#allocation5 + $0x18] sm:$0xff] %vm4518, %v4429
      %4523 = vst.msk [vmem:[#allocation5 + $0x20] sm:$0xff] %vm4518, %v4431
      %4524 = vst.msk [vmem:[#allocation5 + $0x28] sm:$0xff] %vm4518, %v4433
      %4525 = vst.msk [vmem:[#allocation5 + $0x30] sm:$0xff] %vm4518, %v4435
      %4526 = vst.msk [vmem:[#allocation5 + $0x38] sm:$0xff] %vm4518, %v4437
      %4527 = vst.msk [vmem:[#allocation5 + $0x40] sm:$0xff] %vm4518, %v4439
      %4528 = vst.msk [vmem:[#allocation5 + $0x48] sm:$0xff] %vm4518, %v4441
      %4529 = vst.msk [vmem:[#allocation5 + $0x50] sm:$0xff] %vm4518, %v4443
      %4530 = vst.msk [vmem:[#allocation5 + $0x58] sm:$0xff] %vm4518, %v4445
      %4531 = vst.msk [vmem:[#allocation5 + $0x60] sm:$0xff] %vm4518, %v4447
      %4532 = vst.msk [vmem:[#allocation5 + $0x68] sm:$0xff] %vm4518, %v4449
      %4533 = vst.msk [vmem:[#allocation5 + $0x70] sm:$0xff] %vm4518, %v4451
      %4534 = vst.msk [vmem:[#allocation5 + $0x78] sm:$0xff] %vm4518, %v4453
      %4535 = vst.msk [vmem:[#allocation5 + $0x80] sm:$0xff] %vm4518, %v4455
      %4536 = vst.msk [vmem:[#allocation5 + $0x88] sm:$0xff] %vm4518, %v4457
      %4537 = vst.msk [vmem:[#allocation5 + $0x90] sm:$0xff] %vm4518, %v4459
      %4538 = vst.msk [vmem:[#allocation5 + $0x98] sm:$0xff] %vm4518, %v4461
      %4539 = vst.msk [vmem:[#allocation5 + $0xa0] sm:$0xff] %vm4518, %v4463
      %4540 = vst.msk [vmem:[#allocation5 + $0xa8] sm:$0xff] %vm4518, %v4465
      %4541 = vst.msk [vmem:[#allocation5 + $0xb0] sm:$0xff] %vm4518, %v4467
      %4542 = vst.msk [vmem:[#allocation5 + $0xb8] sm:$0xff] %vm4518, %v4469
      %4543 = vst.msk [vmem:[#allocation5 + $0xc0] sm:$0xff] %vm4518, %v4471
      %4544 = vst.msk [vmem:[#allocation5 + $0xc8] sm:$0xff] %vm4518, %v4473
      %4545 = vst.msk [vmem:[#allocation5 + $0xd0] sm:$0xff] %vm4518, %v4475
      %4546 = vst.msk [vmem:[#allocation5 + $0xd8] sm:$0xff] %vm4518, %v4477
      %4547 = vst.msk [vmem:[#allocation5 + $0xe0] sm:$0xff] %vm4518, %v4479
      %4548 = vst.msk [vmem:[#allocation5 + $0xe8] sm:$0xff] %vm4518, %v4481
      %4549 = vst.msk [vmem:[#allocation5 + $0xf0] sm:$0xff] %vm4518, %v4483
      %4550 = vst.msk [vmem:[#allocation5 + $0xf8] sm:$0xff] %vm4518, %v4485
      %v4551 = vld [vmem:[%s4357 + $0x1] sm:$0xff]
      %v4552 = vld [vmem:[%s4357 + $0x9] sm:$0xff]
      %v4553 = vld [vmem:[%s4357 + $0x19] sm:$0xff]
      %v4554 = vld [vmem:[%s4357 + $0x21] sm:$0xff]
      %v4555 = vld [vmem:[%s4357 + $0x31] sm:$0xff]
      %v4556 = vld [vmem:[%s4357 + $0x39] sm:$0xff]
      %v4557 = vld [vmem:[%s4357 + $0x49] sm:$0xff]
      %v4558 = vld [vmem:[%s4357 + $0x51] sm:$0xff]
      %v4559 = vld [vmem:[%s4357 + $0x61] sm:$0xff]
      %v4560 = vld [vmem:[%s4357 + $0x69] sm:$0xff]
      %v4561 = vld [vmem:[%s4357 + $0x79] sm:$0xff]
      %v4562 = vld [vmem:[%s4357 + $0x81] sm:$0xff]
      %v4563 = vld [vmem:[%s4357 + $0x91] sm:$0xff]
      %v4564 = vld [vmem:[%s4357 + $0x99] sm:$0xff]
      %v4565 = vld [vmem:[%s4357 + $0xa9] sm:$0xff]
      %v4566 = vld [vmem:[%s4357 + $0xb1] sm:$0xff]
      %v4567 = vld [vmem:[%s4357 + $0xc1] sm:$0xff]
      %v4568 = vld [vmem:[%s4357 + $0xc9] sm:$0xff]
      %v4569 = vld [vmem:[%s4357 + $0xd9] sm:$0xff]
      %v4570 = vld [vmem:[%s4357 + $0xe1] sm:$0xff]
      %v4571 = vld [vmem:[%s4357 + $0xf1] sm:$0xff]
      %v4572 = vld [vmem:[%s4357 + $0xf9] sm:$0xff]
      %v4573 = vld [vmem:[%s4357 + $0x109] sm:$0xff]
      %v4574 = vld [vmem:[%s4357 + $0x111] sm:$0xff]
      %v4575 = vld [vmem:[%s4357 + $0x121] sm:$0xff]
      %v4576 = vld [vmem:[%s4357 + $0x129] sm:$0xff]
      %v4577 = vld [vmem:[%s4357 + $0x139] sm:$0xff]
      %v4578 = vld [vmem:[%s4357 + $0x141] sm:$0xff]
      %v4579 = vld [vmem:[%s4357 + $0x151] sm:$0xff]
      %v4580 = vld [vmem:[%s4357 + $0x159] sm:$0xff]
      %v4581 = vld [vmem:[%s4357 + $0x169] sm:$0xff]
      %v4582 = vld [vmem:[%s4357 + $0x171] sm:$0xff]
      %4615 = vrot.lane.b32.xlu0 %v4551, 56
      %v4616 = vpop.permute.xlu0 %4615
      %4617 = vrot.lane.b32.xlu0 %v4552, 56
      %v4618 = vpop.permute.xlu0 %4617
      %4619 = vrot.lane.b32.xlu0 %v4553, 56
      %v4620 = vpop.permute.xlu0 %4619
      %4621 = vrot.lane.b32.xlu0 %v4554, 56
      %v4622 = vpop.permute.xlu0 %4621
      %4623 = vrot.lane.b32.xlu0 %v4555, 56
      %v4624 = vpop.permute.xlu0 %4623
      %4625 = vrot.lane.b32.xlu0 %v4556, 56
      %v4626 = vpop.permute.xlu0 %4625
      %4627 = vrot.lane.b32.xlu0 %v4557, 56
      %v4628 = vpop.permute.xlu0 %4627
      %4629 = vrot.lane.b32.xlu0 %v4558, 56
      %v4630 = vpop.permute.xlu0 %4629
      %4631 = vrot.lane.b32.xlu0 %v4559, 56
      %v4632 = vpop.permute.xlu0 %4631
      %4633 = vrot.lane.b32.xlu0 %v4560, 56
      %v4634 = vpop.permute.xlu0 %4633
      %4635 = vrot.lane.b32.xlu0 %v4561, 56
      %v4636 = vpop.permute.xlu0 %4635
      %4637 = vrot.lane.b32.xlu0 %v4562, 56
      %v4638 = vpop.permute.xlu0 %4637
      %4639 = vrot.lane.b32.xlu0 %v4563, 56
      %v4640 = vpop.permute.xlu0 %4639
      %4641 = vrot.lane.b32.xlu0 %v4564, 56
      %v4642 = vpop.permute.xlu0 %4641
      %4643 = vrot.lane.b32.xlu0 %v4565, 56
      %v4644 = vpop.permute.xlu0 %4643
      %4645 = vrot.lane.b32.xlu0 %v4566, 56
      %v4646 = vpop.permute.xlu0 %4645
      %4647 = vrot.lane.b32.xlu0 %v4567, 56
      %v4648 = vpop.permute.xlu0 %4647
      %4649 = vrot.lane.b32.xlu0 %v4568, 56
      %v4650 = vpop.permute.xlu0 %4649
      %4651 = vrot.lane.b32.xlu0 %v4569, 56
      %v4652 = vpop.permute.xlu0 %4651
      %4653 = vrot.lane.b32.xlu0 %v4570, 56
      %v4654 = vpop.permute.xlu0 %4653
      %4655 = vrot.lane.b32.xlu0 %v4571, 56
      %v4656 = vpop.permute.xlu0 %4655
      %4657 = vrot.lane.b32.xlu0 %v4572, 56
      %v4658 = vpop.permute.xlu0 %4657
      %4659 = vrot.lane.b32.xlu0 %v4573, 56
      %v4660 = vpop.permute.xlu0 %4659
      %4661 = vrot.lane.b32.xlu0 %v4574, 56
      %v4662 = vpop.permute.xlu0 %4661
      %4663 = vrot.lane.b32.xlu0 %v4575, 56
      %v4664 = vpop.permute.xlu0 %4663
      %4665 = vrot.lane.b32.xlu0 %v4576, 56
      %v4666 = vpop.permute.xlu0 %4665
      %4667 = vrot.lane.b32.xlu0 %v4577, 56
      %v4668 = vpop.permute.xlu0 %4667
      %4669 = vrot.lane.b32.xlu0 %v4578, 56
      %v4670 = vpop.permute.xlu0 %4669
      %4671 = vrot.lane.b32.xlu0 %v4579, 56
      %v4672 = vpop.permute.xlu0 %4671
      %4673 = vrot.lane.b32.xlu0 %v4580, 56
      %v4674 = vpop.permute.xlu0 %4673
      %4675 = vrot.lane.b32.xlu0 %v4581, 56
      %v4676 = vpop.permute.xlu0 %4675
      %4677 = vrot.lane.b32.xlu0 %v4582, 56
      %v4678 = vpop.permute.xlu0 %4677
      %vm4711 = vcmask 523712
      %4712 = vst.msk [vmem:[#allocation5] sm:$0xff] %vm4711, %v4616
      %4713 = vst.msk [vmem:[#allocation5 + $0x8] sm:$0xff] %vm4711, %v4618
      %4714 = vst.msk [vmem:[#allocation5 + $0x10] sm:$0xff] %vm4711, %v4620
      %4715 = vst.msk [vmem:[#allocation5 + $0x18] sm:$0xff] %vm4711, %v4622
      %4716 = vst.msk [vmem:[#allocation5 + $0x20] sm:$0xff] %vm4711, %v4624
      %4717 = vst.msk [vmem:[#allocation5 + $0x28] sm:$0xff] %vm4711, %v4626
      %4718 = vst.msk [vmem:[#allocation5 + $0x30] sm:$0xff] %vm4711, %v4628
      %4719 = vst.msk [vmem:[#allocation5 + $0x38] sm:$0xff] %vm4711, %v4630
      %4720 = vst.msk [vmem:[#allocation5 + $0x40] sm:$0xff] %vm4711, %v4632
      %4721 = vst.msk [vmem:[#allocation5 + $0x48] sm:$0xff] %vm4711, %v4634
      %4722 = vst.msk [vmem:[#allocation5 + $0x50] sm:$0xff] %vm4711, %v4636
      %4723 = vst.msk [vmem:[#allocation5 + $0x58] sm:$0xff] %vm4711, %v4638
      %4724 = vst.msk [vmem:[#allocation5 + $0x60] sm:$0xff] %vm4711, %v4640
      %4725 = vst.msk [vmem:[#allocation5 + $0x68] sm:$0xff] %vm4711, %v4642
      %4726 = vst.msk [vmem:[#allocation5 + $0x70] sm:$0xff] %vm4711, %v4644
      %4727 = vst.msk [vmem:[#allocation5 + $0x78] sm:$0xff] %vm4711, %v4646
      %4728 = vst.msk [vmem:[#allocation5 + $0x80] sm:$0xff] %vm4711, %v4648
      %4729 = vst.msk [vmem:[#allocation5 + $0x88] sm:$0xff] %vm4711, %v4650
      %4730 = vst.msk [vmem:[#allocation5 + $0x90] sm:$0xff] %vm4711, %v4652
      %4731 = vst.msk [vmem:[#allocation5 + $0x98] sm:$0xff] %vm4711, %v4654
      %4732 = vst.msk [vmem:[#allocation5 + $0xa0] sm:$0xff] %vm4711, %v4656
      %4733 = vst.msk [vmem:[#allocation5 + $0xa8] sm:$0xff] %vm4711, %v4658
      %4734 = vst.msk [vmem:[#allocation5 + $0xb0] sm:$0xff] %vm4711, %v4660
      %4735 = vst.msk [vmem:[#allocation5 + $0xb8] sm:$0xff] %vm4711, %v4662
      %4736 = vst.msk [vmem:[#allocation5 + $0xc0] sm:$0xff] %vm4711, %v4664
      %4737 = vst.msk [vmem:[#allocation5 + $0xc8] sm:$0xff] %vm4711, %v4666
      %4738 = vst.msk [vmem:[#allocation5 + $0xd0] sm:$0xff] %vm4711, %v4668
      %4739 = vst.msk [vmem:[#allocation5 + $0xd8] sm:$0xff] %vm4711, %v4670
      %4740 = vst.msk [vmem:[#allocation5 + $0xe0] sm:$0xff] %vm4711, %v4672
      %4741 = vst.msk [vmem:[#allocation5 + $0xe8] sm:$0xff] %vm4711, %v4674
      %4742 = vst.msk [vmem:[#allocation5 + $0xf0] sm:$0xff] %vm4711, %v4676
      %4743 = vst.msk [vmem:[#allocation5 + $0xf8] sm:$0xff] %vm4711, %v4678
      %v4744 = vld [vmem:[%s4357 + $0x2] sm:$0xff]
      %v4745 = vld [vmem:[%s4357 + $0xa] sm:$0xff]
      %v4746 = vld [vmem:[%s4357 + $0x1a] sm:$0xff]
      %v4747 = vld [vmem:[%s4357 + $0x22] sm:$0xff]
      %v4748 = vld [vmem:[%s4357 + $0x32] sm:$0xff]
      %v4749 = vld [vmem:[%s4357 + $0x3a] sm:$0xff]
      %v4750 = vld [vmem:[%s4357 + $0x4a] sm:$0xff]
      %v4751 = vld [vmem:[%s4357 + $0x52] sm:$0xff]
      %v4752 = vld [vmem:[%s4357 + $0x62] sm:$0xff]
      %v4753 = vld [vmem:[%s4357 + $0x6a] sm:$0xff]
      %v4754 = vld [vmem:[%s4357 + $0x7a] sm:$0xff]
      %v4755 = vld [vmem:[%s4357 + $0x82] sm:$0xff]
      %v4756 = vld [vmem:[%s4357 + $0x92] sm:$0xff]
      %v4757 = vld [vmem:[%s4357 + $0x9a] sm:$0xff]
      %v4758 = vld [vmem:[%s4357 + $0xaa] sm:$0xff]
      %v4759 = vld [vmem:[%s4357 + $0xb2] sm:$0xff]
      %v4760 = vld [vmem:[%s4357 + $0xc2] sm:$0xff]
      %v4761 = vld [vmem:[%s4357 + $0xca] sm:$0xff]
      %v4762 = vld [vmem:[%s4357 + $0xda] sm:$0xff]
      %v4763 = vld [vmem:[%s4357 + $0xe2] sm:$0xff]
      %v4764 = vld [vmem:[%s4357 + $0xf2] sm:$0xff]
      %v4765 = vld [vmem:[%s4357 + $0xfa] sm:$0xff]
      %v4766 = vld [vmem:[%s4357 + $0x10a] sm:$0xff]
      %v4767 = vld [vmem:[%s4357 + $0x112] sm:$0xff]
      %v4768 = vld [vmem:[%s4357 + $0x122] sm:$0xff]
      %v4769 = vld [vmem:[%s4357 + $0x12a] sm:$0xff]
      %v4770 = vld [vmem:[%s4357 + $0x13a] sm:$0xff]
      %v4771 = vld [vmem:[%s4357 + $0x142] sm:$0xff]
      %v4772 = vld [vmem:[%s4357 + $0x152] sm:$0xff]
      %v4773 = vld [vmem:[%s4357 + $0x15a] sm:$0xff]
      %v4774 = vld [vmem:[%s4357 + $0x16a] sm:$0xff]
      %v4775 = vld [vmem:[%s4357 + $0x172] sm:$0xff]
      %4808 = vrot.lane.b32.xlu0 %v4744, 64
      %v4809 = vpop.permute.xlu0 %4808
      %4810 = vrot.lane.b32.xlu0 %v4745, 64
      %v4811 = vpop.permute.xlu0 %4810
      %4812 = vrot.lane.b32.xlu0 %v4746, 64
      %v4813 = vpop.permute.xlu0 %4812
      %4814 = vrot.lane.b32.xlu0 %v4747, 64
      %v4815 = vpop.permute.xlu0 %4814
      %4816 = vrot.lane.b32.xlu0 %v4748, 64
      %v4817 = vpop.permute.xlu0 %4816
      %4818 = vrot.lane.b32.xlu0 %v4749, 64
      %v4819 = vpop.permute.xlu0 %4818
      %4820 = vrot.lane.b32.xlu0 %v4750, 64
      %v4821 = vpop.permute.xlu0 %4820
      %4822 = vrot.lane.b32.xlu0 %v4751, 64
      %v4823 = vpop.permute.xlu0 %4822
      %4824 = vrot.lane.b32.xlu0 %v4752, 64
      %v4825 = vpop.permute.xlu0 %4824
      %4826 = vrot.lane.b32.xlu0 %v4753, 64
      %v4827 = vpop.permute.xlu0 %4826
      %4828 = vrot.lane.b32.xlu0 %v4754, 64
      %v4829 = vpop.permute.xlu0 %4828
      %4830 = vrot.lane.b32.xlu0 %v4755, 64
      %v4831 = vpop.permute.xlu0 %4830
      %4832 = vrot.lane.b32.xlu0 %v4756, 64
      %v4833 = vpop.permute.xlu0 %4832
      %4834 = vrot.lane.b32.xlu0 %v4757, 64
      %v4835 = vpop.permute.xlu0 %4834
      %4836 = vrot.lane.b32.xlu0 %v4758, 64
      %v4837 = vpop.permute.xlu0 %4836
      %4838 = vrot.lane.b32.xlu0 %v4759, 64
      %v4839 = vpop.permute.xlu0 %4838
      %4840 = vrot.lane.b32.xlu0 %v4760, 64
      %v4841 = vpop.permute.xlu0 %4840
      %4842 = vrot.lane.b32.xlu0 %v4761, 64
      %v4843 = vpop.permute.xlu0 %4842
      %4844 = vrot.lane.b32.xlu0 %v4762, 64
      %v4845 = vpop.permute.xlu0 %4844
      %4846 = vrot.lane.b32.xlu0 %v4763, 64
      %v4847 = vpop.permute.xlu0 %4846
      %4848 = vrot.lane.b32.xlu0 %v4764, 64
      %v4849 = vpop.permute.xlu0 %4848
      %4850 = vrot.lane.b32.xlu0 %v4765, 64
      %v4851 = vpop.permute.xlu0 %4850
      %4852 = vrot.lane.b32.xlu0 %v4766, 64
      %v4853 = vpop.permute.xlu0 %4852
      %4854 = vrot.lane.b32.xlu0 %v4767, 64
      %v4855 = vpop.permute.xlu0 %4854
      %4856 = vrot.lane.b32.xlu0 %v4768, 64
      %v4857 = vpop.permute.xlu0 %4856
      %4858 = vrot.lane.b32.xlu0 %v4769, 64
      %v4859 = vpop.permute.xlu0 %4858
      %4860 = vrot.lane.b32.xlu0 %v4770, 64
      %v4861 = vpop.permute.xlu0 %4860
      %4862 = vrot.lane.b32.xlu0 %v4771, 64
      %v4863 = vpop.permute.xlu0 %4862
      %4864 = vrot.lane.b32.xlu0 %v4772, 64
      %v4865 = vpop.permute.xlu0 %4864
      %4866 = vrot.lane.b32.xlu0 %v4773, 64
      %v4867 = vpop.permute.xlu0 %4866
      %4868 = vrot.lane.b32.xlu0 %v4774, 64
      %v4869 = vpop.permute.xlu0 %4868
      %4870 = vrot.lane.b32.xlu0 %v4775, 64
      %v4871 = vpop.permute.xlu0 %4870
      %vm4904 = vcmask 589312
      %4905 = vst.msk [vmem:[#allocation5] sm:$0xff] %vm4904, %v4809
      %4906 = vst.msk [vmem:[#allocation5 + $0x8] sm:$0xff] %vm4904, %v4811
      %4907 = vst.msk [vmem:[#allocation5 + $0x10] sm:$0xff] %vm4904, %v4813
      %4908 = vst.msk [vmem:[#allocation5 + $0x18] sm:$0xff] %vm4904, %v4815
      %4909 = vst.msk [vmem:[#allocation5 + $0x20] sm:$0xff] %vm4904, %v4817
      %4910 = vst.msk [vmem:[#allocation5 + $0x28] sm:$0xff] %vm4904, %v4819
      %4911 = vst.msk [vmem:[#allocation5 + $0x30] sm:$0xff] %vm4904, %v4821
      %4912 = vst.msk [vmem:[#allocation5 + $0x38] sm:$0xff] %vm4904, %v4823
      %4913 = vst.msk [vmem:[#allocation5 + $0x40] sm:$0xff] %vm4904, %v4825
      %4914 = vst.msk [vmem:[#allocation5 + $0x48] sm:$0xff] %vm4904, %v4827
      %4915 = vst.msk [vmem:[#allocation5 + $0x50] sm:$0xff] %vm4904, %v4829
      %4916 = vst.msk [vmem:[#allocation5 + $0x58] sm:$0xff] %vm4904, %v4831
      %4917 = vst.msk [vmem:[#allocation5 + $0x60] sm:$0xff] %vm4904, %v4833
      %4918 = vst.msk [vmem:[#allocation5 + $0x68] sm:$0xff] %vm4904, %v4835
      %4919 = vst.msk [vmem:[#allocation5 + $0x70] sm:$0xff] %vm4904, %v4837
      %4920 = vst.msk [vmem:[#allocation5 + $0x78] sm:$0xff] %vm4904, %v4839
      %4921 = vst.msk [vmem:[#allocation5 + $0x80] sm:$0xff] %vm4904, %v4841
      %4922 = vst.msk [vmem:[#allocation5 + $0x88] sm:$0xff] %vm4904, %v4843
      %4923 = vst.msk [vmem:[#allocation5 + $0x90] sm:$0xff] %vm4904, %v4845
      %4924 = vst.msk [vmem:[#allocation5 + $0x98] sm:$0xff] %vm4904, %v4847
      %4925 = vst.msk [vmem:[#allocation5 + $0xa0] sm:$0xff] %vm4904, %v4849
      %4926 = vst.msk [vmem:[#allocation5 + $0xa8] sm:$0xff] %vm4904, %v4851
      %4927 = vst.msk [vmem:[#allocation5 + $0xb0] sm:$0xff] %vm4904, %v4853
      %4928 = vst.msk [vmem:[#allocation5 + $0xb8] sm:$0xff] %vm4904, %v4855
      %4929 = vst.msk [vmem:[#allocation5 + $0xc0] sm:$0xff] %vm4904, %v4857
      %4930 = vst.msk [vmem:[#allocation5 + $0xc8] sm:$0xff] %vm4904, %v4859
      %4931 = vst.msk [vmem:[#allocation5 + $0xd0] sm:$0xff] %vm4904, %v4861
      %4932 = vst.msk [vmem:[#allocation5 + $0xd8] sm:$0xff] %vm4904, %v4863
      %4933 = vst.msk [vmem:[#allocation5 + $0xe0] sm:$0xff] %vm4904, %v4865
      %4934 = vst.msk [vmem:[#allocation5 + $0xe8] sm:$0xff] %vm4904, %v4867
      %4935 = vst.msk [vmem:[#allocation5 + $0xf0] sm:$0xff] %vm4904, %v4869
      %4936 = vst.msk [vmem:[#allocation5 + $0xf8] sm:$0xff] %vm4904, %v4871
      %v4937 = vld [vmem:[#allocation5] sm:$0xff]
      %v4938 = vld [vmem:[#allocation5 + $0x8] sm:$0xff]
      %v4939 = vld [vmem:[#allocation5 + $0x10] sm:$0xff]
      %v4940 = vld [vmem:[#allocation5 + $0x18] sm:$0xff]
      %v4941 = vld [vmem:[#allocation5 + $0x20] sm:$0xff]
      %v4942 = vld [vmem:[#allocation5 + $0x28] sm:$0xff]
      %v4943 = vld [vmem:[#allocation5 + $0x30] sm:$0xff]
      %v4944 = vld [vmem:[#allocation5 + $0x38] sm:$0xff]
      %v4945 = vld [vmem:[#allocation5 + $0x40] sm:$0xff]
      %v4946 = vld [vmem:[#allocation5 + $0x48] sm:$0xff]
      %v4947 = vld [vmem:[#allocation5 + $0x50] sm:$0xff]
      %v4948 = vld [vmem:[#allocation5 + $0x58] sm:$0xff]
      %v4949 = vld [vmem:[#allocation5 + $0x60] sm:$0xff]
      %v4950 = vld [vmem:[#allocation5 + $0x68] sm:$0xff]
      %v4951 = vld [vmem:[#allocation5 + $0x70] sm:$0xff]
      %v4952 = vld [vmem:[#allocation5 + $0x78] sm:$0xff]
      %v4953 = vld [vmem:[#allocation5 + $0x80] sm:$0xff]
      %v4954 = vld [vmem:[#allocation5 + $0x88] sm:$0xff]
      %v4955 = vld [vmem:[#allocation5 + $0x90] sm:$0xff]
      %v4956 = vld [vmem:[#allocation5 + $0x98] sm:$0xff]
      %v4957 = vld [vmem:[#allocation5 + $0xa0] sm:$0xff]
      %v4958 = vld [vmem:[#allocation5 + $0xa8] sm:$0xff]
      %v4959 = vld [vmem:[#allocation5 + $0xb0] sm:$0xff]
      %v4960 = vld [vmem:[#allocation5 + $0xb8] sm:$0xff]
      %v4961 = vld [vmem:[#allocation5 + $0xc0] sm:$0xff]
      %v4962 = vld [vmem:[#allocation5 + $0xc8] sm:$0xff]
      %v4963 = vld [vmem:[#allocation5 + $0xd0] sm:$0xff]
      %v4964 = vld [vmem:[#allocation5 + $0xd8] sm:$0xff]
      %v4965 = vld [vmem:[#allocation5 + $0xe0] sm:$0xff]
      %v4966 = vld [vmem:[#allocation5 + $0xe8] sm:$0xff]
      %v4967 = vld [vmem:[#allocation5 + $0xf0] sm:$0xff]
      %v4968 = vld [vmem:[#allocation5 + $0xf8] sm:$0xff]
      %v4969 = vld [vmem:[%s9] sm:$0xff]
      %v4970 = vld [vmem:[%s9 + $0x8] sm:$0xff]
      %v4971 = vld [vmem:[%s9 + $0x10] sm:$0xff]
      %v4972 = vld [vmem:[%s9 + $0x18] sm:$0xff]
      %v4973 = vld [vmem:[%s9 + $0x20] sm:$0xff]
      %v4974 = vld [vmem:[%s9 + $0x28] sm:$0xff]
      %v4975 = vld [vmem:[%s9 + $0x30] sm:$0xff]
      %v4976 = vld [vmem:[%s9 + $0x38] sm:$0xff]
      %v4977 = vld [vmem:[%s9 + $0x40] sm:$0xff]
      %vm4978 = vcmask 588800
      %v4980 = vsel %vm4978, %v4937, 0
      %v4983 = vsel %vm4978, %v4938, 0
      %v4986 = vsel %vm4978, %v4939, 0
      %v4989 = vsel %vm4978, %v4940, 0
      %v4992 = vsel %vm4978, %v4941, 0
      %v4995 = vsel %vm4978, %v4942, 0
      %v4998 = vsel %vm4978, %v4943, 0
      %v5001 = vsel %vm4978, %v4944, 0
      %v5004 = vsel %vm4978, %v4945, 0
      %v5007 = vsel %vm4978, %v4946, 0
      %v5010 = vsel %vm4978, %v4947, 0
      %v5013 = vsel %vm4978, %v4948, 0
      %v5016 = vsel %vm4978, %v4949, 0
      %v5019 = vsel %vm4978, %v4950, 0
      %v5022 = vsel %vm4978, %v4951, 0
      %v5025 = vsel %vm4978, %v4952, 0
      %v5028 = vsel %vm4978, %v4953, 0
      %v5031 = vsel %vm4978, %v4954, 0
      %v5034 = vsel %vm4978, %v4955, 0
      %v5037 = vsel %vm4978, %v4956, 0
      %v5040 = vsel %vm4978, %v4957, 0
      %v5043 = vsel %vm4978, %v4958, 0
      %v5046 = vsel %vm4978, %v4959, 0
      %v5049 = vsel %vm4978, %v4960, 0
      %v5052 = vsel %vm4978, %v4961, 0
      %v5055 = vsel %vm4978, %v4962, 0
      %v5058 = vsel %vm4978, %v4963, 0
      %v5061 = vsel %vm4978, %v4964, 0
      %v5064 = vsel %vm4978, %v4965, 0
      %v5067 = vsel %vm4978, %v4966, 0
      %v5070 = vsel %vm4978, %v4967, 0
      %v5073 = vsel %vm4978, %v4968, 0
      %5075 = vmatprep.subr.mxu0 0.0
      %5076 = vmatpush1.msra.mxu0 %v4969
      %5077 = vmatprep.subr.mxu0 0.0
      %5078 = vmatpush1.msra.mxu0 %v4970
      %5079 = vmatprep.subr.mxu0 0.0
      %5080 = vmatpush1.msra.mxu0 %v4971
      %5081 = vmatprep.subr.mxu0 0.0
      %5082 = vmatpush1.msra.mxu0 %v4972
      %5083 = vmatprep.subr.mxu0 0.0
      %5084 = vmatpush1.msra.mxu0 %v4973
      %5085 = vmatprep.subr.mxu0 0.0
      %5086 = vmatpush1.msra.mxu0 %v4974
      %5087 = vmatprep.subr.mxu0 0.0
      %5088 = vmatpush1.msra.mxu0 %v4975
      %5089 = vmatprep.subr.mxu0 0.0
      %5090 = vmatpush1.msra.mxu0 %v4976
      %5091 = vmatprep.subr.mxu0 0.0
      %5092 = vmatpush1.msra.mxu0 %v4977
      %5093 = vmatprep.subr.mxu0 0.0
      %5094 = vmatpush1.msra.mxu0 0.0
      %5095 = vmatprep.subr.mxu0 0.0
      %5096 = vmatpush1.msra.mxu0 0.0
      %5097 = vmatprep.subr.mxu0 0.0
      %5098 = vmatpush1.msra.mxu0 0.0
      %5099 = vmatprep.subr.mxu0 0.0
      %5100 = vmatpush1.msra.mxu0 0.0
      %5101 = vmatprep.subr.mxu0 0.0
      %5102 = vmatpush1.msra.mxu0 0.0
      %5103 = vmatprep.subr.mxu0 0.0
      %5104 = vmatpush1.msra.mxu0 0.0
      %5105 = vmatprep.subr.mxu0 0.0
      %5106 = vmatpush1.msra.mxu0 0.0
      %5107 = vmatprep.subr.mxu0 0.0
      %5108 = vmatpush1.msra.mxu0 0.0
      %5109 = vmatprep.subr.mxu0 0.0
      %5110 = vmatpush1.msra.mxu0 0.0
      %5111 = vmatprep.subr.mxu0 0.0
      %5112 = vmatpush1.msra.mxu0 0.0
      %5113 = vmatprep.subr.mxu0 0.0
      %5114 = vmatpush1.msra.mxu0 0.0
      %5115 = vmatprep.subr.mxu0 0.0
      %5116 = vmatpush1.msra.mxu0 0.0
      %5117 = vmatprep.subr.mxu0 0.0
      %5118 = vmatpush1.msra.mxu0 0.0
      %5119 = vmatprep.subr.mxu0 0.0
      %5120 = vmatpush1.msra.mxu0 0.0
      %5121 = vmatprep.subr.mxu0 0.0
      %5122 = vmatpush1.msra.mxu0 0.0
      %5123 = vmatprep.subr.mxu0 0.0
      %5124 = vmatpush1.msra.mxu0 0.0
      %5125 = vmatprep.subr.mxu0 0.0
      %5126 = vmatpush1.msra.mxu0 0.0
      %5127 = vmatprep.subr.mxu0 0.0
      %5128 = vmatpush1.msra.mxu0 0.0
      %5129 = vmatprep.subr.mxu0 0.0
      %5130 = vmatpush1.msra.mxu0 0.0
      %5131 = vmatprep.subr.mxu0 0.0
      %5132 = vmatpush1.msra.mxu0 0.0
      %5133 = vmatprep.subr.mxu0 0.0
      %5134 = vmatpush1.msra.mxu0 0.0
      %5135 = vmatprep.subr.mxu0 0.0
      %5136 = vmatpush1.msra.mxu0 0.0
      %5137 = vmatprep.subr.mxu0 0.0
      %5138 = vmatpush1.msra.mxu0 0.0
      %5139 = vmatprep.mubr.f32.mxu0 0.0
      %5140 = vmatmul.mubr.f32.gmra.mrb[0].mxu0 %v4980
      %v5141 = vpop.f32.mrb[0].mxu0
      %v5142 = vadd.f32 0.0, %v5141
      %v5143 = vpop.f32.mrb[0].mxu0
      %5144 = vmatprep.mubr.f32.mxu0 0.0
      %5145 = vmatmul.mubr.f32.gmra.mrb[0].mxu0 %v4983
      %v5146 = vpop.f32.mrb[0].mxu0
      %v5147 = vadd.f32 0.0, %v5146
      %v5148 = vpop.f32.mrb[0].mxu0
      %5149 = vmatprep.mubr.f32.mxu0 0.0
      %5150 = vmatmul.mubr.f32.gmra.mrb[0].mxu0 %v4986
      %v5151 = vpop.f32.mrb[0].mxu0
      %v5152 = vadd.f32 0.0, %v5151
      %v5153 = vpop.f32.mrb[0].mxu0
      %5154 = vmatprep.mubr.f32.mxu0 0.0
      %5155 = vmatmul.mubr.f32.gmra.mrb[0].mxu0 %v4989
      %v5156 = vpop.f32.mrb[0].mxu0
      %v5157 = vadd.f32 0.0, %v5156
      %v5158 = vpop.f32.mrb[0].mxu0
      %5159 = vmatprep.mubr.f32.mxu0 0.0
      %5160 = vmatmul.mubr.f32.gmra.mrb[0].mxu0 %v4992
      %v5161 = vpop.f32.mrb[0].mxu0
      %v5162 = vadd.f32 0.0, %v5161
      %v5163 = vpop.f32.mrb[0].mxu0
      %5164 = vmatprep.mubr.f32.mxu0 0.0
      %5165 = vmatmul.mubr.f32.gmra.mrb[0].mxu0 %v4995
      %v5166 = vpop.f32.mrb[0].mxu0
      %v5167 = vadd.f32 0.0, %v5166
      %v5168 = vpop.f32.mrb[0].mxu0
      %5169 = vmatprep.mubr.f32.mxu0 0.0
      %5170 = vmatmul.mubr.f32.gmra.mrb[0].mxu0 %v4998
      %v5171 = vpop.f32.mrb[0].mxu0
      %v5172 = vadd.f32 0.0, %v5171
      %v5173 = vpop.f32.mrb[0].mxu0
      %5174 = vmatprep.mubr.f32.mxu0 0.0
      %5175 = vmatmul.mubr.f32.gmra.mrb[0].mxu0 %v5001
      %v5176 = vpop.f32.mrb[0].mxu0
      %v5177 = vadd.f32 0.0, %v5176
      %v5178 = vpop.f32.mrb[0].mxu0
      %5179 = vmatprep.mubr.f32.mxu0 0.0
      %5180 = vmatmul.mubr.f32.gmra.mrb[0].mxu0 %v5004
      %v5181 = vpop.f32.mrb[0].mxu0
      %v5182 = vadd.f32 0.0, %v5181
      %v5183 = vpop.f32.mrb[0].mxu0
      %5184 = vmatprep.mubr.f32.mxu0 0.0
      %5185 = vmatmul.mubr.f32.gmra.mrb[0].mxu0 %v5007
      %v5186 = vpop.f32.mrb[0].mxu0
      %v5187 = vadd.f32 0.0, %v5186
      %v5188 = vpop.f32.mrb[0].mxu0
      %5189 = vmatprep.mubr.f32.mxu0 0.0
      %5190 = vmatmul.mubr.f32.gmra.mrb[0].mxu0 %v5010
      %v5191 = vpop.f32.mrb[0].mxu0
      %v5192 = vadd.f32 0.0, %v5191
      %v5193 = vpop.f32.mrb[0].mxu0
      %5194 = vmatprep.mubr.f32.mxu0 0.0
      %5195 = vmatmul.mubr.f32.gmra.mrb[0].mxu0 %v5013
      %v5196 = vpop.f32.mrb[0].mxu0
      %v5197 = vadd.f32 0.0, %v5196
      %v5198 = vpop.f32.mrb[0].mxu0
      %5199 = vmatprep.mubr.f32.mxu0 0.0
      %5200 = vmatmul.mubr.f32.gmra.mrb[0].mxu0 %v5016
      %v5201 = vpop.f32.mrb[0].mxu0
      %v5202 = vadd.f32 0.0, %v5201
      %v5203 = vpop.f32.mrb[0].mxu0
      %5204 = vmatprep.mubr.f32.mxu0 0.0
      %5205 = vmatmul.mubr.f32.gmra.mrb[0].mxu0 %v5019
      %v5206 = vpop.f32.mrb[0].mxu0
      %v5207 = vadd.f32 0.0, %v5206
      %v5208 = vpop.f32.mrb[0].mxu0
      %5209 = vmatprep.mubr.f32.mxu0 0.0
      %5210 = vmatmul.mubr.f32.gmra.mrb[0].mxu0 %v5022
      %v5211 = vpop.f32.mrb[0].mxu0
      %v5212 = vadd.f32 0.0, %v5211
      %v5213 = vpop.f32.mrb[0].mxu0
      %5214 = vmatprep.mubr.f32.mxu0 0.0
      %5215 = vmatmul.mubr.f32.gmra.mrb[0].mxu0 %v5025
      %v5216 = vpop.f32.mrb[0].mxu0
      %v5217 = vadd.f32 0.0, %v5216
      %v5218 = vpop.f32.mrb[0].mxu0
      %5219 = vmatprep.mubr.f32.mxu0 0.0
      %5220 = vmatmul.mubr.f32.gmra.mrb[0].mxu0 %v5028
      %v5221 = vpop.f32.mrb[0].mxu0
      %v5222 = vadd.f32 0.0, %v5221
      %v5223 = vpop.f32.mrb[0].mxu0
      %5224 = vmatprep.mubr.f32.mxu0 0.0
      %5225 = vmatmul.mubr.f32.gmra.mrb[0].mxu0 %v5031
      %v5226 = vpop.f32.mrb[0].mxu0
      %v5227 = vadd.f32 0.0, %v5226
      %v5228 = vpop.f32.mrb[0].mxu0
      %5229 = vmatprep.mubr.f32.mxu0 0.0
      %5230 = vmatmul.mubr.f32.gmra.mrb[0].mxu0 %v5034
      %v5231 = vpop.f32.mrb[0].mxu0
      %v5232 = vadd.f32 0.0, %v5231
      %v5233 = vpop.f32.mrb[0].mxu0
      %5234 = vmatprep.mubr.f32.mxu0 0.0
      %5235 = vmatmul.mubr.f32.gmra.mrb[0].mxu0 %v5037
      %v5236 = vpop.f32.mrb[0].mxu0
      %v5237 = vadd.f32 0.0, %v5236
      %v5238 = vpop.f32.mrb[0].mxu0
      %5239 = vmatprep.mubr.f32.mxu0 0.0
      %5240 = vmatmul.mubr.f32.gmra.mrb[0].mxu0 %v5040
      %v5241 = vpop.f32.mrb[0].mxu0
      %v5242 = vadd.f32 0.0, %v5241
      %v5243 = vpop.f32.mrb[0].mxu0
      %5244 = vmatprep.mubr.f32.mxu0 0.0
      %5245 = vmatmul.mubr.f32.gmra.mrb[0].mxu0 %v5043
      %v5246 = vpop.f32.mrb[0].mxu0
      %v5247 = vadd.f32 0.0, %v5246
      %v5248 = vpop.f32.mrb[0].mxu0
      %5249 = vmatprep.mubr.f32.mxu0 0.0
      %5250 = vmatmul.mubr.f32.gmra.mrb[0].mxu0 %v5046
      %v5251 = vpop.f32.mrb[0].mxu0
      %v5252 = vadd.f32 0.0, %v5251
      %v5253 = vpop.f32.mrb[0].mxu0
      %5254 = vmatprep.mubr.f32.mxu0 0.0
      %5255 = vmatmul.mubr.f32.gmra.mrb[0].mxu0 %v5049
      %v5256 = vpop.f32.mrb[0].mxu0
      %v5257 = vadd.f32 0.0, %v5256
      %v5258 = vpop.f32.mrb[0].mxu0
      %5259 = vmatprep.mubr.f32.mxu0 0.0
      %5260 = vmatmul.mubr.f32.gmra.mrb[0].mxu0 %v5052
      %v5261 = vpop.f32.mrb[0].mxu0
      %v5262 = vadd.f32 0.0, %v5261
      %v5263 = vpop.f32.mrb[0].mxu0
      %5264 = vmatprep.mubr.f32.mxu0 0.0
      %5265 = vmatmul.mubr.f32.gmra.mrb[0].mxu0 %v5055
      %v5266 = vpop.f32.mrb[0].mxu0
      %v5267 = vadd.f32 0.0, %v5266
      %v5268 = vpop.f32.mrb[0].mxu0
      %5269 = vmatprep.mubr.f32.mxu0 0.0
      %5270 = vmatmul.mubr.f32.gmra.mrb[0].mxu0 %v5058
      %v5271 = vpop.f32.mrb[0].mxu0
      %v5272 = vadd.f32 0.0, %v5271
      %v5273 = vpop.f32.mrb[0].mxu0
      %5274 = vmatprep.mubr.f32.mxu0 0.0
      %5275 = vmatmul.mubr.f32.gmra.mrb[0].mxu0 %v5061
      %v5276 = vpop.f32.mrb[0].mxu0
      %v5277 = vadd.f32 0.0, %v5276
      %v5278 = vpop.f32.mrb[0].mxu0
      %5279 = vmatprep.mubr.f32.mxu0 0.0
      %5280 = vmatmul.mubr.f32.gmra.mrb[0].mxu0 %v5064
      %v5281 = vpop.f32.mrb[0].mxu0
      %v5282 = vadd.f32 0.0, %v5281
      %v5283 = vpop.f32.mrb[0].mxu0
      %5284 = vmatprep.mubr.f32.mxu0 0.0
      %5285 = vmatmul.mubr.f32.gmra.mrb[0].mxu0 %v5067
      %v5286 = vpop.f32.mrb[0].mxu0
      %v5287 = vadd.f32 0.0, %v5286
      %v5288 = vpop.f32.mrb[0].mxu0
      %5289 = vmatprep.mubr.f32.mxu0 0.0
      %5290 = vmatmul.mubr.f32.gmra.mrb[0].mxu0 %v5070
      %v5291 = vpop.f32.mrb[0].mxu0
      %v5292 = vadd.f32 0.0, %v5291
      %v5293 = vpop.f32.mrb[0].mxu0
      %5294 = vmatprep.mubr.f32.mxu0 0.0
      %5295 = vmatmul.mubr.f32.gmra.mrb[0].mxu0 %v5073
      %v5296 = vpop.f32.mrb[0].mxu0
      %v5297 = vadd.f32 0.0, %v5296
      %v5298 = vpop.f32.mrb[0].mxu0
      %5299 = vdwg.mxu0
      %v5300 = vld [vmem:[%s10] sm:$0x1]
      %v5302 = vlaneseq
      %v5303 = vshrl.u32 %v5302, 7
      %v5304 = vsub.s32 0, %v5303
      %v5305 = vrot.slane %v5300, %v5304
      %v5307 = vmul.f32 %v5142, %v5305
      %v5308 = vmul.f32 %v5147, %v5305
      %v5309 = vmul.f32 %v5152, %v5305
      %v5310 = vmul.f32 %v5157, %v5305
      %v5311 = vmul.f32 %v5162, %v5305
      %v5312 = vmul.f32 %v5167, %v5305
      %v5313 = vmul.f32 %v5172, %v5305
      %v5314 = vmul.f32 %v5177, %v5305
      %v5315 = vmul.f32 %v5182, %v5305
      %v5316 = vmul.f32 %v5187, %v5305
      %v5317 = vmul.f32 %v5192, %v5305
      %v5318 = vmul.f32 %v5197, %v5305
      %v5319 = vmul.f32 %v5202, %v5305
      %v5320 = vmul.f32 %v5207, %v5305
      %v5321 = vmul.f32 %v5212, %v5305
      %v5322 = vmul.f32 %v5217, %v5305
      %v5323 = vmul.f32 %v5222, %v5305
      %v5324 = vmul.f32 %v5227, %v5305
      %v5325 = vmul.f32 %v5232, %v5305
      %v5326 = vmul.f32 %v5237, %v5305
      %v5327 = vmul.f32 %v5242, %v5305
      %v5328 = vmul.f32 %v5247, %v5305
      %v5329 = vmul.f32 %v5252, %v5305
      %v5330 = vmul.f32 %v5257, %v5305
      %v5331 = vmul.f32 %v5262, %v5305
      %v5332 = vmul.f32 %v5267, %v5305
      %v5333 = vmul.f32 %v5272, %v5305
      %v5334 = vmul.f32 %v5277, %v5305
      %v5335 = vmul.f32 %v5282, %v5305
      %v5336 = vmul.f32 %v5287, %v5305
      %v5337 = vmul.f32 %v5292, %v5305
      %v5338 = vmul.f32 %v5297, %v5305
      %v5339 = vld [vmem:[%s11] sm:$0x1]
      %v5341 = vlaneseq
      %v5342 = vshrl.u32 %v5341, 7
      %v5343 = vsub.s32 0, %v5342
      %v5344 = vrot.slane %v5339, %v5343
      %v5346 = vadd.f32 %v5307, %v5344
      %v5347 = vadd.f32 %v5308, %v5344
      %v5348 = vadd.f32 %v5309, %v5344
      %v5349 = vadd.f32 %v5310, %v5344
      %v5350 = vadd.f32 %v5311, %v5344
      %v5351 = vadd.f32 %v5312, %v5344
      %v5352 = vadd.f32 %v5313, %v5344
      %v5353 = vadd.f32 %v5314, %v5344
      %v5354 = vadd.f32 %v5315, %v5344
      %v5355 = vadd.f32 %v5316, %v5344
      %v5356 = vadd.f32 %v5317, %v5344
      %v5357 = vadd.f32 %v5318, %v5344
      %v5358 = vadd.f32 %v5319, %v5344
      %v5359 = vadd.f32 %v5320, %v5344
      %v5360 = vadd.f32 %v5321, %v5344
      %v5361 = vadd.f32 %v5322, %v5344
      %v5362 = vadd.f32 %v5323, %v5344
      %v5363 = vadd.f32 %v5324, %v5344
      %v5364 = vadd.f32 %v5325, %v5344
      %v5365 = vadd.f32 %v5326, %v5344
      %v5366 = vadd.f32 %v5327, %v5344
      %v5367 = vadd.f32 %v5328, %v5344
      %v5368 = vadd.f32 %v5329, %v5344
      %v5369 = vadd.f32 %v5330, %v5344
      %v5370 = vadd.f32 %v5331, %v5344
      %v5371 = vadd.f32 %v5332, %v5344
      %v5372 = vadd.f32 %v5333, %v5344
      %v5373 = vadd.f32 %v5334, %v5344
      %v5374 = vadd.f32 %v5335, %v5344
      %v5375 = vadd.f32 %v5336, %v5344
      %v5376 = vadd.f32 %v5337, %v5344
      %v5377 = vadd.f32 %v5338, %v5344
      %v5378 = vmax.f32 %v5346, 0.0
      %v5379 = vmax.f32 %v5347, 0.0
      %v5380 = vmax.f32 %v5348, 0.0
      %v5381 = vmax.f32 %v5349, 0.0
      %v5382 = vmax.f32 %v5350, 0.0
      %v5383 = vmax.f32 %v5351, 0.0
      %v5384 = vmax.f32 %v5352, 0.0
      %v5385 = vmax.f32 %v5353, 0.0
      %v5386 = vmax.f32 %v5354, 0.0
      %v5387 = vmax.f32 %v5355, 0.0
      %v5388 = vmax.f32 %v5356, 0.0
      %v5389 = vmax.f32 %v5357, 0.0
      %v5390 = vmax.f32 %v5358, 0.0
      %v5391 = vmax.f32 %v5359, 0.0
      %v5392 = vmax.f32 %v5360, 0.0
      %v5393 = vmax.f32 %v5361, 0.0
      %v5394 = vmax.f32 %v5362, 0.0
      %v5395 = vmax.f32 %v5363, 0.0
      %v5396 = vmax.f32 %v5364, 0.0
      %v5397 = vmax.f32 %v5365, 0.0
      %v5398 = vmax.f32 %v5366, 0.0
      %v5399 = vmax.f32 %v5367, 0.0
      %v5400 = vmax.f32 %v5368, 0.0
      %v5401 = vmax.f32 %v5369, 0.0
      %v5402 = vmax.f32 %v5370, 0.0
      %v5403 = vmax.f32 %v5371, 0.0
      %v5404 = vmax.f32 %v5372, 0.0
      %v5405 = vmax.f32 %v5373, 0.0
      %v5406 = vmax.f32 %v5374, 0.0
      %v5407 = vmax.f32 %v5375, 0.0
      %v5408 = vmax.f32 %v5376, 0.0
      %v5409 = vmax.f32 %v5377, 0.0
      %5410 = vst.msk [vmem:[%s433] sm:$0xff] %vm1054, %v5378
      %5411 = vst.msk [vmem:[%s433 + $0x8] sm:$0xff] %vm1054, %v5379
      %5412 = vst.msk [vmem:[%s433 + $0x10] sm:$0xff] %vm1054, %v5380
      %5413 = vst.msk [vmem:[%s433 + $0x18] sm:$0xff] %vm1054, %v5381
      %5414 = vst.msk [vmem:[%s433 + $0x20] sm:$0xff] %vm1054, %v5382
      %5415 = vst.msk [vmem:[%s433 + $0x28] sm:$0xff] %vm1054, %v5383
      %5416 = vst.msk [vmem:[%s433 + $0x30] sm:$0xff] %vm1054, %v5384
      %5417 = vst.msk [vmem:[%s433 + $0x38] sm:$0xff] %vm1054, %v5385
      %5418 = vst.msk [vmem:[%s433 + $0x40] sm:$0xff] %vm1054, %v5386
      %5419 = vst.msk [vmem:[%s433 + $0x48] sm:$0xff] %vm1054, %v5387
      %5420 = vst.msk [vmem:[%s433 + $0x50] sm:$0xff] %vm1054, %v5388
      %5421 = vst.msk [vmem:[%s433 + $0x58] sm:$0xff] %vm1054, %v5389
      %5422 = vst.msk [vmem:[%s433 + $0x60] sm:$0xff] %vm1054, %v5390
      %5423 = vst.msk [vmem:[%s433 + $0x68] sm:$0xff] %vm1054, %v5391
      %5424 = vst.msk [vmem:[%s433 + $0x70] sm:$0xff] %vm1054, %v5392
      %5425 = vst.msk [vmem:[%s433 + $0x78] sm:$0xff] %vm1054, %v5393
      %5426 = vst.msk [vmem:[%s433 + $0x80] sm:$0xff] %vm1054, %v5394
      %5427 = vst.msk [vmem:[%s433 + $0x88] sm:$0xff] %vm1054, %v5395
      %5428 = vst.msk [vmem:[%s433 + $0x90] sm:$0xff] %vm1054, %v5396
      %5429 = vst.msk [vmem:[%s433 + $0x98] sm:$0xff] %vm1054, %v5397
      %5430 = vst.msk [vmem:[%s433 + $0xa0] sm:$0xff] %vm1054, %v5398
      %5431 = vst.msk [vmem:[%s433 + $0xa8] sm:$0xff] %vm1054, %v5399
      %5432 = vst.msk [vmem:[%s433 + $0xb0] sm:$0xff] %vm1054, %v5400
      %5433 = vst.msk [vmem:[%s433 + $0xb8] sm:$0xff] %vm1054, %v5401
      %5434 = vst.msk [vmem:[%s433 + $0xc0] sm:$0xff] %vm1054, %v5402
      %5435 = vst.msk [vmem:[%s433 + $0xc8] sm:$0xff] %vm1054, %v5403
      %5436 = vst.msk [vmem:[%s433 + $0xd0] sm:$0xff] %vm1054, %v5404
      %5437 = vst.msk [vmem:[%s433 + $0xd8] sm:$0xff] %vm1054, %v5405
      %5438 = vst.msk [vmem:[%s433 + $0xe0] sm:$0xff] %vm1054, %v5406
      %5439 = vst.msk [vmem:[%s433 + $0xe8] sm:$0xff] %vm1054, %v5407
      %5440 = vst.msk [vmem:[%s433 + $0xf0] sm:$0xff] %vm1054, %v5408
      %5441 = vst.msk [vmem:[%s433 + $0xf8] sm:$0xff] %vm1054, %v5409
      %p5442 = scmp.lt.s32.totalorder %s23, 1
      %s5443 = scalar_select %p5442, %s23, 1
      %s5444 = smul.addr %s5443, 32
      %s5445 = smul.addr %s5444, 8
      %s5446 = scalar_lea.vmem %s12, %s5445
      // Predicated region
      $region69: #{tpu_custom_call.1} parent=67 // pred_check
        %p5447 = pneg %p303
      $region70: #{tpu_custom_call.1} parent=67 // pred_check_branch
        %5449 = sbr.rel (%p5447) target = $region72
      $region71: #{tpu_custom_call.1} parent=67 // pred_region
        _
      $region72: #{tpu_custom_call.1} parent=67 // pred_fallthru
        _
    $region68: #{tpu_custom_call.1} parent=5 // pred_fallthru
      _
    %p5450 = scmp.le.s32.totalorder 2, %s18
    // Predicated region
    $region73: #{tpu_custom_call.1} parent=5 // pred_check
      %p5451 = pneg %p5450
    $region74: #{tpu_custom_call.1} parent=5 // pred_check_branch
      %5453 = sbr.rel (%p5451) target = $region76
    $region75: #{tpu_custom_call.1} parent=5 // pred_region
      %s5454 = ssub.s32 %s18, 2
      // Predicated region
      $region77: #{tpu_custom_call.1} parent=75 // pred_check
        %p5455 = pneg %p309
      $region78: #{tpu_custom_call.1} parent=75 // pred_check_branch
        %5457 = sbr.rel (%p5455) target = $region80
      $region79: #{tpu_custom_call.1} parent=75 // pred_region
        %p5458 = scmp.lt.s32.totalorder %s24, 1
        %s5459 = scalar_select %p5458, %s24, 1
        %s5460 = smul.addr %s5459, 32
        %s5461 = smul.addr %s5460, 8
        %s5462 = scalar_lea.vmem %s12, %s5461
      $region80: #{tpu_custom_call.1} parent=75 // pred_fallthru
        _
    $region76: #{tpu_custom_call.1} parent=5 // pred_fallthru
      _
  $region6: #{tpu_custom_call.1} parent=0 // loop_footer
    %s22 = sadd.s32 1, %s18
  $region7: #{tpu_custom_call.1} parent=0 // loop_footer_branch
    %17 = sbr.rel target = $region3
  $region8: #{tpu_custom_call.1} parent=0 // loop_exit
    _

</llo_original>
